<compile_context>
chip_gen: v6e
topology: v6e:2x2x1
jax: 0.10.0
libtpu: 0.0.40
codegen_flags: <defaults>
</compile_context>

<pallas_src>
import functools

import jax
import jax.numpy as jnp
from jax.experimental import pallas as pl
from jax.experimental.pallas import tpu as pltpu


def _round_up(v, m):
    return ((v + m - 1) // m) * m


def _pad2d(a, rows, cols):
    return jnp.zeros((rows, cols), a.dtype).at[:a.shape[0], :a.shape[1]].set(a)


def _tpu_vmem_capacity_bytes():
    try:
        info = pltpu.get_tpu_info()
        cap = getattr(info, "vmem_capacity_bytes", None)
        if cap:
            return int(cap)
    except Exception:
        pass
    return 64 * 1024 * 1024   # conservative (v7x per-core VMEM)


def net_kernel(x_ref, adj_ref, w0t_ref, b0_ref, w1t_ref, b1_ref, pai_ref,
               out_ref, h_ref, acc_ref, part_ref,
               *, num_layers, num_classes, block_i, block_k, n_pad, adj_resident):
    l = pl.program_id(0)          # layer (sequential carry)
    i = pl.program_id(1)          # output-row tile (Ti rows)
    k = pl.program_id(2)          # reduction tile over A_hat columns (Tk cols)
    nk = pl.num_programs(2)

    # ---- phase 0: during the l==0, i==0 sweep build h0 = relu(x @ W0^T + b0) in
    #      Tk-row chunks (x's index_map delivers chunk k only then) and init acc.
    #      Inner static loop keeps live intermediates at Ti rows.
    @pl.when(jnp.logical_and(l == 0, i == 0))
    def _init():
        base = pl.multiple_of(k * block_k, block_k)
        for r in range(block_k // block_i):
            off = pl.multiple_of(base + r * block_i, block_i)
            xs = x_ref[pl.ds(r * block_i, block_i), :]
            h0 = jnp.dot(xs, w0t_ref[...],
                         preferred_element_type=jnp.float32) + b0_ref[...]
            h0 = jnp.maximum(h0, 0.0)
            h_ref[pl.ds(off, block_i), :] = h0.astype(jnp.bfloat16)   # slot 0 = layer-0 input
            acc_ref[pl.ds(off, block_i), :] = pai_ref[0, 0] * h0

    # ---- k-reduction partial for this row tile: part += A_hat[i,k] @ h_old[k]
    @pl.when(k == 0)
    def _zero():
        part_ref[...] = jnp.zeros_like(part_ref)

    if adj_resident:
        a_tile = adj_ref[i * nk + k]          # whole adjacency VMEM-resident, tile-major
    else:
        a_tile = adj_ref[0]                   # streamed (Ti, Tk) tile from HBM

    off_old = pl.multiple_of((l % 2) * n_pad + k * block_k, block_k)
    h_old = h_ref[pl.ds(off_old, block_k), :]                         # bf16 [Tk, Hp]
    part_ref[...] += jnp.dot(a_tile, h_old, preferred_element_type=jnp.float32)

    is_last_k = k == nk - 1
    rowi = pl.multiple_of(i * block_i, block_i)

    # ---- fold this layer's row tile into acc (f32)
    @pl.when(is_last_k)
    def _commit_acc():
        acc_ref[pl.ds(rowi, block_i), :] += pai_ref[0, l + 1] * part_ref[...]

    # ---- store h_{l+1} (bf16) -- skipped on the last layer (never read)
    @pl.when(jnp.logical_and(is_last_k, l < num_layers - 1))
    def _commit_h():
        off_new = pl.multiple_of(((l + 1) % 2) * n_pad + rowi, block_i)
        h_ref[pl.ds(off_new, block_i), :] = part_ref[...].astype(jnp.bfloat16)

    # ---- finalize on the last layer: lins[1] + masked log_softmax, lane-dense store
    @pl.when(jnp.logical_and(is_last_k, l == num_layers - 1))
    def _finalize():
        a = acc_ref[pl.ds(rowi, block_i), :]                          # f32 [Ti, Hp]
        logits = jnp.dot(a, w1t_ref[...],
                         preferred_element_type=jnp.float32) + b1_ref[...]
        col = jax.lax.broadcasted_iota(jnp.int32, logits.shape, 1)
        logits = jnp.where(col < num_classes, logits, -1e30)          # mask padded classes
        m = jnp.max(logits, axis=-1, keepdims=True)
        z = logits - m
        lse = jnp.log(jnp.sum(jnp.exp(z), axis=-1, keepdims=True))
        out_ref[...] = (z - lse).astype(out_ref.dtype)


def net_forward(x, adj, w0, b0, w1, b1, pai, *, num_layers,
                block_i=256, block_k=512, adj_resident=None):
    """x: [N,F]; adj: [N,N] dense normalized adjacency; w0: [H,F]; b0: [H];
    w1: [C,H]; b1: [C]; pai: [1, num_layers+1].  Returns (log_probs [N,C], 0.0)."""
    n, f = x.shape
    h_dim = w0.shape[0]
    c = w1.shape[0]

    # ---- tiling: decoupled row tile Ti and reduction tile Tk (Tk multiple of Ti).
    n_ru = _round_up(n, 128)
    block_i = min(block_i, n_ru)
    block_k = min(max(block_k, block_i), n_ru)
    block_k = (block_k // block_i) * block_i
    n_pad = _round_up(n, block_k)             # multiple of both Ti and Tk
    ni = n_pad // block_i
    nk = n_pad // block_k
    hp = _round_up(max(h_dim, 1), 128)
    cp = _round_up(max(c, 1), 128)

    # ---- VMEM budget & adjacency-residency decision (per-chip).
    vmem_cap = _tpu_vmem_capacity_bytes()
    vmem_limit = int(min(vmem_cap * 0.85, vmem_cap - (8 << 20)))
    bytes_fixed = (2 * n_pad * hp * 2          # h (two layer slots, bf16)
                   + n_pad * hp * 4            # acc (f32)
                   + block_i * hp * 4          # k-reduction partial
                   + 2 * (f * hp + hp + hp * cp + cp) * 4   # resident weights (x2 buf)
                   + 2 * block_k * f * 4 + 2 * block_i * cp * 4   # x / out pipeline bufs
                   + (2 << 20))                # slack
    bytes_adj_full = n_pad * n_pad * 2
    if adj_resident is None:
        adj_resident = (bytes_fixed + bytes_adj_full) <= int(vmem_limit * 0.9)
    # TODO(synk): graphs where h/acc scratch itself overflows VMEM (N ~> 50K on v7x)
    #             need HBM-resident h/acc with manual double-buffered DMA.

    # ---- operand prep.  adj is cast to bf16 *before* padding (no N^2 f32 temp) and
    #      laid out tile-major (ni*nk, Ti, Tk) so both the streamed and the resident
    #      variant index tiles by a single leading index.
    x_p = _pad2d(x.astype(jnp.float32), n_pad, f)
    adj_p = jnp.zeros((n_pad, n_pad), jnp.bfloat16).at[:n, :n].set(adj.astype(jnp.bfloat16))
    adj_t = (adj_p.reshape(ni, block_i, nk, block_k)
             .transpose(0, 2, 1, 3)
             .reshape(ni * nk, block_i, block_k))
    w0t_p = _pad2d(jnp.transpose(w0).astype(jnp.float32), f, hp)
    b0_p = _pad2d(b0.reshape(1, -1).astype(jnp.float32), 1, hp)
    w1t_p = _pad2d(jnp.transpose(w1).astype(jnp.float32), hp, cp)
    b1_p = _pad2d(b1.reshape(1, -1).astype(jnp.float32), 1, cp)
    pai_exp = jnp.exp(pai.astype(jnp.float32)).reshape(1, num_layers + 1)

    grid = (num_layers, ni, nk)

    def x_map(l, i, k):
        # deliver the k-th Tk-row chunk only during the h0-init sweep; otherwise keep
        # the block index constant so the pipeline does not re-DMA x every step.
        first = jnp.logical_and(l == 0, i == 0)
        return (jnp.where(first, k, 0), 0)

    def out_map(l, i, k):
        # only sweep the output row blocks on the final layer -> no wasted HBM flushes
        # of uninitialized output blocks on earlier layers.
        return (jnp.where(l == num_layers - 1, i, 0), 0)

    if adj_resident:
        # whole bf16 adjacency lives in VMEM for the entire kernel (read from HBM once).
        adj_spec = pl.BlockSpec(memory_space=pltpu.MemorySpace.VMEM)
    else:
        # stream one (Ti, Tk) tile per grid step, double-buffered by the pipeline.
        adj_spec = pl.BlockSpec((1, block_i, block_k),
                                lambda l, i, k: (i * nk + k, 0, 0))

    kernel = functools.partial(
        net_kernel, num_layers=num_layers, num_classes=c,
        block_i=block_i, block_k=block_k, n_pad=n_pad, adj_resident=adj_resident)

    adj_hbm_reads = 1 if adj_resident else num_layers
    flops = (2 * num_layers * n_pad * n_pad * hp
             + 2 * n_pad * f * hp + 2 * n_pad * hp * cp)
    bytes_accessed = (adj_hbm_reads * n_pad * n_pad * 2
                      + n_pad * f * 4 + n_pad * cp * 4
                      + (f * hp + hp + hp * cp + cp) * 4)

    out_padded = pl.pallas_call(
        kernel,
        out_shape=jax.ShapeDtypeStruct((n_pad, cp), jnp.float32),
        grid_spec=pltpu.PrefetchScalarGridSpec(
            num_scalar_prefetch=0,
            grid=grid,
            in_specs=[
                pl.BlockSpec((block_k, f), x_map),                       # x rows (init sweep)
                adj_spec,                                                # A_hat (bf16)
                pl.BlockSpec((f, hp), lambda l, i, k: (0, 0)),           # W0^T (resident)
                pl.BlockSpec((1, hp), lambda l, i, k: (0, 0)),           # b0
                pl.BlockSpec((hp, cp), lambda l, i, k: (0, 0)),          # W1^T (resident)
                pl.BlockSpec((1, cp), lambda l, i, k: (0, 0)),           # b1
                pl.BlockSpec(memory_space=pltpu.MemorySpace.SMEM),       # exp(pai)
            ],
            out_specs=pl.BlockSpec((block_i, cp), out_map),
            scratch_shapes=[
                pltpu.VMEM((2 * n_pad, hp), jnp.bfloat16),   # h: [prev | next] layer
                pltpu.VMEM((n_pad, hp), jnp.float32),        # acc (retain-score sum)
                pltpu.VMEM((block_i, hp), jnp.float32),      # k-reduction partial
            ],
        ),
        compiler_params=pltpu.CompilerParams(
            # all "arbitrary": h/acc scratch is carried across layers on one core.
            # TODO(synk): v7x two-core row split would need VMEM_SHARED h/acc + barrier.
            dimension_semantics=("arbitrary", "arbitrary", "arbitrary"),
            vmem_limit_bytes=vmem_limit,
        ),
        cost_estimate=pl.CostEstimate(flops=int(flops),
                                      transcendentals=int(n_pad * (cp + 1)),
                                      bytes_accessed=int(bytes_accessed)),
    )(x_p, adj_t, w0t_p, b0_p, w1t_p, b1_p, pai_exp)

    return out_padded[:n, :c], 0.0


def ref_forward(x, adj, w0, b0, w1, b1, pai, *, num_layers):
    """Pure-JAX f32 reference mirroring the torch forward (eval mode)."""
    h = jax.nn.relu(x @ w0.T + b0)
    acc = jnp.exp(pai[0, 0]) * h
    for layer in range(num_layers):
        h = adj @ h
        acc = acc + jnp.exp(pai[0, layer + 1]) * h
    logits = acc @ w1.T + b1
    return jax.nn.log_softmax(logits, axis=-1)


if __name__ == "__main__":
    # Small synthetic problem consistent with the module's shapes.  N=600 exercises
    # row padding, multiple row tiles and a multi-step k reduction.
    N_NODES = 600
    NUM_FEATURES = 16   # dataset.num_features
    HIDDEN = 32         # hidden_channels
    NUM_CLASSES = 8     # dataset.num_classes
    NUM_LAYERS = 4      # num_layers

    key = jax.random.PRNGKey(0)
    kx, kadj, kw0, kb0, kw1, kb1, kpai = jax.random.split(key, 7)

    # Node features.
    x = jax.random.normal(kx, (N_NODES, NUM_FEATURES), jnp.float32)

    # Dense symmetric normalized adjacency A_hat = D^-1/2 (A + I) D^-1/2
    # (stands in for adj_t._indices()/_values()).
    a = (jax.random.uniform(kadj, (N_NODES, N_NODES)) < 0.05).astype(jnp.float32)
    a = jnp.maximum(a, a.T) + jnp.eye(N_NODES, dtype=jnp.float32)
    deg = jnp.sum(a, axis=1)
    dinv = 1.0 / jnp.sqrt(deg)
    adj = a * dinv[:, None] * dinv[None, :]

    # Deterministic parameter init (Linear: weight [out, in], bias [out]).
    w0 = jax.random.normal(kw0, (HIDDEN, NUM_FEATURES), jnp.float32) * 0.1
    b0 = jax.random.normal(kb0, (HIDDEN,), jnp.float32) * 0.01
    w1 = jax.random.normal(kw1, (NUM_CLASSES, HIDDEN), jnp.float32) * 0.1
    b1 = jax.random.normal(kb1, (NUM_CLASSES,), jnp.float32) * 0.01
    pai = jax.random.normal(kpai, (1, NUM_LAYERS + 1), jnp.float32) * 0.5

    ref = ref_forward(x, adj, w0, b0, w1, b1, pai, num_layers=NUM_LAYERS)

    # Path 1: auto config (adjacency VMEM-resident at this size, Ti=256 / Tk=512).
    out_res, aux = net_forward(x, adj, w0, b0, w1, b1, pai, num_layers=NUM_LAYERS)
    out_res = jax.block_until_ready(out_res)
    assert out_res.shape == (N_NODES, NUM_CLASSES)
    assert aux == 0.0
    # bf16 adjacency / propagation vs f32 reference -> looser tolerance.
    assert jnp.allclose(out_res, ref, atol=5e-2, rtol=5e-2), "resident mismatch vs reference"

    # Path 2: forced HBM streaming with decoupled (Ti=128, Tk=256) tiles -- exercises
    # the streaming pipeline used for graphs that do not fit VMEM.
    out_str, _ = net_forward(x, adj, w0, b0, w1, b1, pai, num_layers=NUM_LAYERS,
                             block_i=128, block_k=256, adj_resident=False)
    out_str = jax.block_until_ready(out_str)
    assert jnp.allclose(out_str, ref, atol=5e-2, rtol=5e-2), "streaming mismatch vs reference"

    print("KERNEL_OK")
</pallas_src>

<mosaic_0001>
module attributes {stable_mosaic.version = 11 : i64} {
  func.func @net_kernel(%arg0: i32, %arg1: i32, %arg2: i32, %arg3: memref<512x16xf32, #tpu.memory_space<vmem>>, %arg4: memref<8x256x512xbf16, #tpu.memory_space<vmem>>, %arg5: memref<16x128xf32, #tpu.memory_space<vmem>>, %arg6: memref<1x128xf32, #tpu.memory_space<vmem>>, %arg7: memref<128x128xf32, #tpu.memory_space<vmem>>, %arg8: memref<1x128xf32, #tpu.memory_space<vmem>>, %arg9: memref<1x5xf32, #tpu.memory_space<smem>>, %arg10: memref<256x128xf32, #tpu.memory_space<vmem>>, %arg11: memref<2048x128xbf16, #tpu.memory_space<vmem>>, %arg12: memref<1024x128xf32, #tpu.memory_space<vmem>>, %arg13: memref<256x128xf32, #tpu.memory_space<vmem>>) attributes {dimension_semantics = [#tpu.dimension_semantics<arbitrary>, #tpu.dimension_semantics<arbitrary>, #tpu.dimension_semantics<arbitrary>], iteration_bounds = array<i64: 4, 4, 2>, scalar_prefetch = 0 : i64, scratch_operands = 3 : i64, tpu.core_type = #tpu.core_type<tc>, window_params = [{transform_indices = @transform_0, window_bounds = array<i64: 512, 16>}, {pipeline_mode = #tpu.pipeline_mode<synchronous>, transform_indices = @transform_1, window_bounds = array<i64: 8, 256, 512>}, {pipeline_mode = #tpu.pipeline_mode<synchronous>, transform_indices = @transform_2, window_bounds = array<i64: 16, 128>}, {pipeline_mode = #tpu.pipeline_mode<synchronous>, transform_indices = @transform_3, window_bounds = array<i64: 1, 128>}, {pipeline_mode = #tpu.pipeline_mode<synchronous>, transform_indices = @transform_4, window_bounds = array<i64: 128, 128>}, {pipeline_mode = #tpu.pipeline_mode<synchronous>, transform_indices = @transform_5, window_bounds = array<i64: 1, 128>}, {transform_indices = @transform_6, window_bounds = array<i64: 1, 5>}, {transform_indices = @transform_7, window_bounds = array<i64: 256, 128>}]} {
    %c0_i32 = arith.constant 0 : i32
    %0 = arith.cmpi eq, %arg0, %c0_i32 : i32
    %c0_i32_0 = arith.constant 0 : i32
    %1 = arith.cmpi eq, %arg1, %c0_i32_0 : i32
    %2 = arith.andi %0, %1 : i1
    %3 = arith.extui %2 : i1 to i32
    %c0_i32_1 = arith.constant 0 : i32
    %4 = arith.cmpi ne, %3, %c0_i32_1 : i32
    scf.if %4 {
      %c512_i32_20 = arith.constant 512 : i32
      %46 = arith.muli %arg2, %c512_i32_20 : i32
      %47 = tpu.assume_multiple %46, 512 : i32
      %c0_i32_21 = arith.constant 0 : i32
      %48 = arith.addi %47, %c0_i32_21 : i32
      %49 = tpu.assume_multiple %48, 256 : i32
      %c0_22 = arith.constant 0 : index
      %c0_23 = arith.constant 0 : index
      %50 = vector.load %arg3[%c0_22, %c0_23] : memref<512x16xf32, #tpu.memory_space<vmem>>, vector<256x16xf32>
      %c0_24 = arith.constant 0 : index
      %c0_25 = arith.constant 0 : index
      %51 = vector.load %arg5[%c0_24, %c0_25] : memref<16x128xf32, #tpu.memory_space<vmem>>, vector<16x128xf32>
      %cst_26 = arith.constant dense<0.000000e+00> : vector<256x128xf32>
      %52 = tpu.matmul %50, %51, %cst_26 {dimension_numbers = #tpu.dot_dimension_numbers<[1], [0], [0], [1], [0, 0, 1, 1], [], []>} : vector<256x16xf32>, vector<16x128xf32>, vector<256x128xf32> -> vector<256x128xf32>
      %c0_27 = arith.constant 0 : index
      %c0_28 = arith.constant 0 : index
      %53 = vector.load %arg6[%c0_27, %c0_28] : memref<1x128xf32, #tpu.memory_space<vmem>>, vector<1x128xf32>
      %54 = vector.broadcast %53 : vector<1x128xf32> to vector<256x128xf32>
      %55 = arith.addf %52, %54 : vector<256x128xf32>
      %cst_29 = arith.constant 0.000000e+00 : f32
      %56 = vector.broadcast %cst_29 : f32 to vector<256x128xf32>
      %57 = arith.maximumf %55, %56 : vector<256x128xf32>
      %58 = arith.truncf %57 : vector<256x128xf32> to vector<256x128xbf16>
      %59 = arith.index_cast %49 : i32 to index
      %c0_30 = arith.constant 0 : index
      %60 = vector.load %arg11[%59, %c0_30] : memref<2048x128xbf16, #tpu.memory_space<vmem>>, vector<256x128xbf16>
      tpu.vector_store %arg11[%59, %c0_30], %58 {strides = array<i32>} : memref<2048x128xbf16, #tpu.memory_space<vmem>>, vector<256x128xbf16>,
      %c0_31 = arith.constant 0 : index
      %c0_32 = arith.constant 0 : index
      %61 = memref.load %arg9[%c0_31, %c0_32] : memref<1x5xf32, #tpu.memory_space<smem>>
      %62 = vector.broadcast %61 : f32 to vector<256x128xf32>
      %63 = arith.mulf %62, %57 : vector<256x128xf32>
      %64 = arith.index_cast %49 : i32 to index
      %c0_33 = arith.constant 0 : index
      %65 = vector.load %arg12[%64, %c0_33] : memref<1024x128xf32, #tpu.memory_space<vmem>>, vector<256x128xf32>
      tpu.vector_store %arg12[%64, %c0_33], %63 {strides = array<i32>} : memref<1024x128xf32, #tpu.memory_space<vmem>>, vector<256x128xf32>,
      %c256_i32_34 = arith.constant 256 : i32
      %66 = arith.addi %47, %c256_i32_34 : i32
      %67 = tpu.assume_multiple %66, 256 : i32
      %c256 = arith.constant 256 : index
      %c0_35 = arith.constant 0 : index
      %68 = vector.load %arg3[%c256, %c0_35] : memref<512x16xf32, #tpu.memory_space<vmem>>, vector<256x16xf32>
      %c0_36 = arith.constant 0 : index
      %c0_37 = arith.constant 0 : index
      %69 = vector.load %arg5[%c0_36, %c0_37] : memref<16x128xf32, #tpu.memory_space<vmem>>, vector<16x128xf32>
      %cst_38 = arith.constant dense<0.000000e+00> : vector<256x128xf32>
      %70 = tpu.matmul %68, %69, %cst_38 {dimension_numbers = #tpu.dot_dimension_numbers<[1], [0], [0], [1], [0, 0, 1, 1], [], []>} : vector<256x16xf32>, vector<16x128xf32>, vector<256x128xf32> -> vector<256x128xf32>
      %c0_39 = arith.constant 0 : index
      %c0_40 = arith.constant 0 : index
      %71 = vector.load %arg6[%c0_39, %c0_40] : memref<1x128xf32, #tpu.memory_space<vmem>>, vector<1x128xf32>
      %72 = vector.broadcast %71 : vector<1x128xf32> to vector<256x128xf32>
      %73 = arith.addf %70, %72 : vector<256x128xf32>
      %cst_41 = arith.constant 0.000000e+00 : f32
      %74 = vector.broadcast %cst_41 : f32 to vector<256x128xf32>
      %75 = arith.maximumf %73, %74 : vector<256x128xf32>
      %76 = arith.truncf %75 : vector<256x128xf32> to vector<256x128xbf16>
      %77 = arith.index_cast %67 : i32 to index
      %c0_42 = arith.constant 0 : index
      %78 = vector.load %arg11[%77, %c0_42] : memref<2048x128xbf16, #tpu.memory_space<vmem>>, vector<256x128xbf16>
      tpu.vector_store %arg11[%77, %c0_42], %76 {strides = array<i32>} : memref<2048x128xbf16, #tpu.memory_space<vmem>>, vector<256x128xbf16>,
      %c0_43 = arith.constant 0 : index
      %c0_44 = arith.constant 0 : index
      %79 = memref.load %arg9[%c0_43, %c0_44] : memref<1x5xf32, #tpu.memory_space<smem>>
      %80 = vector.broadcast %79 : f32 to vector<256x128xf32>
      %81 = arith.mulf %80, %75 : vector<256x128xf32>
      %82 = arith.index_cast %67 : i32 to index
      %c0_45 = arith.constant 0 : index
      %83 = vector.load %arg12[%82, %c0_45] : memref<1024x128xf32, #tpu.memory_space<vmem>>, vector<256x128xf32>
      tpu.vector_store %arg12[%82, %c0_45], %81 {strides = array<i32>} : memref<1024x128xf32, #tpu.memory_space<vmem>>, vector<256x128xf32>,
    } else {
    }
    %c0_i32_2 = arith.constant 0 : i32
    %5 = arith.cmpi eq, %arg2, %c0_i32_2 : i32
    %6 = arith.extui %5 : i1 to i32
    %c0_i32_3 = arith.constant 0 : i32
    %7 = arith.cmpi ne, %6, %c0_i32_3 : i32
    scf.if %7 {
      %cst_20 = arith.constant 0.000000e+00 : f32
      %46 = vector.broadcast %cst_20 : f32 to vector<256x128xf32>
      %c0_21 = arith.constant 0 : index
      %c0_22 = arith.constant 0 : index
      %47 = vector.load %arg13[%c0_21, %c0_22] : memref<256x128xf32, #tpu.memory_space<vmem>>, vector<256x128xf32>
      tpu.vector_store %arg13[%c0_21, %c0_22], %46 {strides = array<i32>} : memref<256x128xf32, #tpu.memory_space<vmem>>, vector<256x128xf32>,
    } else {
    }
    %c2_i32 = arith.constant 2 : i32
    %8 = arith.muli %arg1, %c2_i32 : i32
    %9 = arith.addi %8, %arg2 : i32
    %10 = arith.index_cast %9 : i32 to index
    %c0 = arith.constant 0 : index
    %c0_4 = arith.constant 0 : index
    %11 = vector.load %arg4[%10, %c0, %c0_4] : memref<8x256x512xbf16, #tpu.memory_space<vmem>>, vector<1x256x512xbf16>
    %12 = vector.shape_cast %11 : vector<1x256x512xbf16> to vector<256x512xbf16>
    %c2_i32_5 = arith.constant 2 : i32
    %c0_i32_6 = arith.constant 0 : i32
    %13 = arith.cmpi eq, %c2_i32_5, %c0_i32_6 : i32
    %c1_i32 = arith.constant 1 : i32
    %14 = arith.select %13, %c1_i32, %c2_i32_5 : i32
    %15 = arith.remsi %arg0, %14 : i32
    %c0_i32_7 = arith.constant 0 : i32
    %16 = arith.cmpi ne, %15, %c0_i32_7 : i32
    %c0_i32_8 = arith.constant 0 : i32
    %17 = arith.cmpi slt, %15, %c0_i32_8 : i32
    %c0_i32_9 = arith.constant 0 : i32
    %18 = arith.cmpi slt, %14, %c0_i32_9 : i32
    %19 = arith.xori %17, %18 : i1
    %20 = arith.andi %19, %16 : i1
    %21 = arith.addi %15, %14 : i32
    %22 = arith.select %20, %21, %15 : i32
    %c1024_i32 = arith.constant 1024 : i32
    %23 = arith.muli %22, %c1024_i32 : i32
    %c512_i32 = arith.constant 512 : i32
    %24 = arith.muli %arg2, %c512_i32 : i32
    %25 = arith.addi %23, %24 : i32
    %26 = tpu.assume_multiple %25, 512 : i32
    %27 = arith.index_cast %26 : i32 to index
    %c0_10 = arith.constant 0 : index
    %28 = vector.load %arg11[%27, %c0_10] : memref<2048x128xbf16, #tpu.memory_space<vmem>>, vector<512x128xbf16>
    %c0_11 = arith.constant 0 : index
    %c0_12 = arith.constant 0 : index
    %29 = vector.load %arg13[%c0_11, %c0_12] : memref<256x128xf32, #tpu.memory_space<vmem>>, vector<256x128xf32>
    %cst = arith.constant dense<0.000000e+00> : vector<256x128xf32>
    %30 = tpu.matmul %12, %28, %cst {dimension_numbers = #tpu.dot_dimension_numbers<[1], [0], [0], [1], [0, 0, 1, 1], [], []>} : vector<256x512xbf16>, vector<512x128xbf16>, vector<256x128xf32> -> vector<256x128xf32>
    %31 = arith.addf %29, %30 : vector<256x128xf32>
    %c0_13 = arith.constant 0 : index
    %c0_14 = arith.constant 0 : index
    %32 = vector.load %arg13[%c0_13, %c0_14] : memref<256x128xf32, #tpu.memory_space<vmem>>, vector<256x128xf32>
    tpu.vector_store %arg13[%c0_13, %c0_14], %31 {strides = array<i32>} : memref<256x128xf32, #tpu.memory_space<vmem>>, vector<256x128xf32>,
    %c1_i32_15 = arith.constant 1 : i32
    %33 = arith.cmpi eq, %arg2, %c1_i32_15 : i32
    %c256_i32 = arith.constant 256 : i32
    %34 = arith.muli %arg1, %c256_i32 : i32
    %35 = tpu.assume_multiple %34, 256 : i32
    %36 = arith.extui %33 : i1 to i32
    %c0_i32_16 = arith.constant 0 : i32
    %37 = arith.cmpi ne, %36, %c0_i32_16 : i32
    scf.if %37 {
      %46 = arith.index_cast %35 : i32 to index
      %c0_20 = arith.constant 0 : index
      %47 = vector.load %arg12[%46, %c0_20] : memref<1024x128xf32, #tpu.memory_space<vmem>>, vector<256x128xf32>
      %c1_i32_21 = arith.constant 1 : i32
      %48 = arith.addi %arg0, %c1_i32_21 : i32
      %c0_22 = arith.constant 0 : index
      %49 = arith.index_cast %48 : i32 to index
      %50 = memref.load %arg9[%c0_22, %49] : memref<1x5xf32, #tpu.memory_space<smem>>
      %c0_23 = arith.constant 0 : index
      %c0_24 = arith.constant 0 : index
      %51 = vector.load %arg13[%c0_23, %c0_24] : memref<256x128xf32, #tpu.memory_space<vmem>>, vector<256x128xf32>
      %52 = vector.broadcast %50 : f32 to vector<256x128xf32>
      %53 = arith.mulf %52, %51 : vector<256x128xf32>
      %54 = arith.addf %47, %53 : vector<256x128xf32>
      %55 = arith.index_cast %35 : i32 to index
      %c0_25 = arith.constant 0 : index
      %56 = vector.load %arg12[%55, %c0_25] : memref<1024x128xf32, #tpu.memory_space<vmem>>, vector<256x128xf32>
      tpu.vector_store %arg12[%55, %c0_25], %54 {strides = array<i32>} : memref<1024x128xf32, #tpu.memory_space<vmem>>, vector<256x128xf32>,
    } else {
    }
    %c3_i32 = arith.constant 3 : i32
    %38 = arith.cmpi slt, %arg0, %c3_i32 : i32
    %39 = arith.andi %33, %38 : i1
    %40 = arith.extui %39 : i1 to i32
    %c0_i32_17 = arith.constant 0 : i32
    %41 = arith.cmpi ne, %40, %c0_i32_17 : i32
    scf.if %41 {
      %c1_i32_20 = arith.constant 1 : i32
      %46 = arith.addi %arg0, %c1_i32_20 : i32
      %c2_i32_21 = arith.constant 2 : i32
      %c0_i32_22 = arith.constant 0 : i32
      %47 = arith.cmpi eq, %c2_i32_21, %c0_i32_22 : i32
      %c1_i32_23 = arith.constant 1 : i32
      %48 = arith.select %47, %c1_i32_23, %c2_i32_21 : i32
      %49 = arith.remsi %46, %48 : i32
      %c0_i32_24 = arith.constant 0 : i32
      %50 = arith.cmpi ne, %49, %c0_i32_24 : i32
      %c0_i32_25 = arith.constant 0 : i32
      %51 = arith.cmpi slt, %49, %c0_i32_25 : i32
      %c0_i32_26 = arith.constant 0 : i32
      %52 = arith.cmpi slt, %48, %c0_i32_26 : i32
      %53 = arith.xori %51, %52 : i1
      %54 = arith.andi %53, %50 : i1
      %55 = arith.addi %49, %48 : i32
      %56 = arith.select %54, %55, %49 : i32
      %c1024_i32_27 = arith.constant 1024 : i32
      %57 = arith.muli %56, %c1024_i32_27 : i32
      %58 = arith.addi %57, %35 : i32
      %59 = tpu.assume_multiple %58, 256 : i32
      %c0_28 = arith.constant 0 : index
      %c0_29 = arith.constant 0 : index
      %60 = vector.load %arg13[%c0_28, %c0_29] : memref<256x128xf32, #tpu.memory_space<vmem>>, vector<256x128xf32>
      %61 = arith.truncf %60 : vector<256x128xf32> to vector<256x128xbf16>
      %62 = arith.index_cast %59 : i32 to index
      %c0_30 = arith.constant 0 : index
      %63 = vector.load %arg11[%62, %c0_30] : memref<2048x128xbf16, #tpu.memory_space<vmem>>, vector<256x128xbf16>
      tpu.vector_store %arg11[%62, %c0_30], %61 {strides = array<i32>} : memref<2048x128xbf16, #tpu.memory_space<vmem>>, vector<256x128xbf16>,
    } else {
    }
    %c3_i32_18 = arith.constant 3 : i32
    %42 = arith.cmpi eq, %arg0, %c3_i32_18 : i32
    %43 = arith.andi %33, %42 : i1
    %44 = arith.extui %43 : i1 to i32
    %c0_i32_19 = arith.constant 0 : i32
    %45 = arith.cmpi ne, %44, %c0_i32_19 : i32
    scf.if %45 {
      %46 = arith.index_cast %35 : i32 to index
      %c0_20 = arith.constant 0 : index
      %47 = vector.load %arg12[%46, %c0_20] : memref<1024x128xf32, #tpu.memory_space<vmem>>, vector<256x128xf32>
      %c0_21 = arith.constant 0 : index
      %c0_22 = arith.constant 0 : index
      %48 = vector.load %arg7[%c0_21, %c0_22] : memref<128x128xf32, #tpu.memory_space<vmem>>, vector<128x128xf32>
      %cst_23 = arith.constant dense<0.000000e+00> : vector<256x128xf32>
      %49 = tpu.matmul %47, %48, %cst_23 {dimension_numbers = #tpu.dot_dimension_numbers<[1], [0], [0], [1], [0, 0, 1, 1], [], []>} : vector<256x128xf32>, vector<128x128xf32>, vector<256x128xf32> -> vector<256x128xf32>
      %c0_24 = arith.constant 0 : index
      %c0_25 = arith.constant 0 : index
      %50 = vector.load %arg8[%c0_24, %c0_25] : memref<1x128xf32, #tpu.memory_space<vmem>>, vector<1x128xf32>
      %51 = vector.broadcast %50 : vector<1x128xf32> to vector<256x128xf32>
      %52 = arith.addf %49, %51 : vector<256x128xf32>
      %53 = tpu.iota {dimensions = array<i32: 1>} : vector<256x128xi32>
      %c8_i32 = arith.constant 8 : i32
      %54 = vector.broadcast %c8_i32 : i32 to vector<256x128xi32>
      %55 = arith.cmpi slt, %53, %54 : vector<256x128xi32>
      %cst_26 = arith.constant -1.000000e+30 : f32
      %56 = vector.broadcast %cst_26 : f32 to vector<256x128xf32>
      %57 = arith.select %55, %52, %56 : vector<256x128xi1>, vector<256x128xf32>
      %cst_27 = arith.constant dense<0xFF800000> : vector<256xf32>
      %58 = vector.multi_reduction <maximumf>, %57, %cst_27 [1] : vector<256x128xf32> to vector<256xf32>
      %59 = vector.shape_cast %58 : vector<256xf32> to vector<256x1xf32>
      %60 = vector.broadcast %59 : vector<256x1xf32> to vector<256x128xf32>
      %61 = arith.subf %57, %60 : vector<256x128xf32>
      %62 = math.exp %61 : vector<256x128xf32>
      %cst_28 = arith.constant dense<0.000000e+00> : vector<256xf32>
      %63 = vector.multi_reduction <add>, %62, %cst_28 [1] : vector<256x128xf32> to vector<256xf32>
      %64 = vector.shape_cast %63 : vector<256xf32> to vector<256x1xf32>
      %65 = math.log %64 : vector<256x1xf32>
      %66 = vector.broadcast %65 : vector<256x1xf32> to vector<256x128xf32>
      %67 = arith.subf %61, %66 : vector<256x128xf32>
      %c0_29 = arith.constant 0 : index
      %c0_30 = arith.constant 0 : index
      %68 = vector.load %arg10[%c0_29, %c0_30] : memref<256x128xf32, #tpu.memory_space<vmem>>, vector<256x128xf32>
      tpu.vector_store %arg10[%c0_29, %c0_30], %67 {strides = array<i32>} : memref<256x128xf32, #tpu.memory_space<vmem>>, vector<256x128xf32>,
    } else {
    }
    return
  }
  func.func @transform_0(%arg0: i32, %arg1: i32, %arg2: i32) -> (i32, i32) {
    %c0_i32 = arith.constant 0 : i32
    %0 = arith.cmpi eq, %arg0, %c0_i32 : i32
    %c0_i32_0 = arith.constant 0 : i32
    %1 = arith.cmpi eq, %arg1, %c0_i32_0 : i32
    %2 = arith.andi %0, %1 : i1
    %c0_i32_1 = arith.constant 0 : i32
    %3 = arith.select %2, %arg2, %c0_i32_1 : i32
    %c0_i32_2 = arith.constant 0 : i32
    %c0_i32_3 = arith.constant 0 : i32
    return %3, %c0_i32_2 : i32, i32
  }
  func.func @transform_1(%arg0: i32, %arg1: i32, %arg2: i32) -> (i32, i32, i32) {
    %c0_i32 = arith.constant 0 : i32
    %c0_i32_0 = arith.constant 0 : i32
    %c0_i32_1 = arith.constant 0 : i32
    %c0_i32_2 = arith.constant 0 : i32
    return %c0_i32, %c0_i32_0, %c0_i32_1 : i32, i32, i32
  }
  func.func @transform_2(%arg0: i32, %arg1: i32, %arg2: i32) -> (i32, i32) {
    %c0_i32 = arith.constant 0 : i32
    %c0_i32_0 = arith.constant 0 : i32
    %c0_i32_1 = arith.constant 0 : i32
    return %c0_i32, %c0_i32_0 : i32, i32
  }
  func.func @transform_3(%arg0: i32, %arg1: i32, %arg2: i32) -> (i32, i32) {
    %c0_i32 = arith.constant 0 : i32
    %c0_i32_0 = arith.constant 0 : i32
    %c0_i32_1 = arith.constant 0 : i32
    return %c0_i32, %c0_i32_0 : i32, i32
  }
  func.func @transform_4(%arg0: i32, %arg1: i32, %arg2: i32) -> (i32, i32) {
    %c0_i32 = arith.constant 0 : i32
    %c0_i32_0 = arith.constant 0 : i32
    %c0_i32_1 = arith.constant 0 : i32
    return %c0_i32, %c0_i32_0 : i32, i32
  }
  func.func @transform_5(%arg0: i32, %arg1: i32, %arg2: i32) -> (i32, i32) {
    %c0_i32 = arith.constant 0 : i32
    %c0_i32_0 = arith.constant 0 : i32
    %c0_i32_1 = arith.constant 0 : i32
    return %c0_i32, %c0_i32_0 : i32, i32
  }
  func.func @transform_6(%arg0: i32, %arg1: i32, %arg2: i32) -> (i32, i32) {
    %c0_i32 = arith.constant 0 : i32
    %c0_i32_0 = arith.constant 0 : i32
    %c0_i32_1 = arith.constant 0 : i32
    return %c0_i32, %c0_i32_0 : i32, i32
  }
  func.func @transform_7(%arg0: i32, %arg1: i32, %arg2: i32) -> (i32, i32) {
    %c3_i32 = arith.constant 3 : i32
    %0 = arith.cmpi eq, %arg0, %c3_i32 : i32
    %c0_i32 = arith.constant 0 : i32
    %1 = arith.select %0, %arg1, %c0_i32 : i32
    %c0_i32_0 = arith.constant 0 : i32
    %c0_i32_1 = arith.constant 0 : i32
    return %1, %c0_i32_0 : i32, i32
  }
}

</mosaic_0001>

<llo_original>
// kernel: tpu_custom_call.1
$region0: #{tpu_custom_call.1}
  #allocation0 [shape = 'u32[]', space=smem, size = 0x4, offset = 0x4, fixed_abs, tag = 'smem constant byte address 0x4 - core index']
  #allocation1 [shape = 'u32[144,128]{1,0:T(1,128)}', space=vmem, size = 0x12000, scoped, tag = 'internal scratch']
  #allocation2 [shape = 'bf16[2048,128]{1,0:T(8,128)(2,1)}', space=vmem, size = 0x80000, scoped, tag = 'scratch operand']
  #allocation3 [shape = 'f32[1024,128]{1,0:T(8,128)}', space=vmem, size = 0x80000, scoped, tag = 'scratch operand']
  #allocation4 [shape = 'f32[256,128]{1,0:T(8,128)}', space=vmem, size = 0x20000, scoped, tag = 'scratch operand']
  %s0 = inlined_call_operand.vmem [shape: f32[1024,16], index: 0, kind: input, shape index: {}]
  %s1 = inlined_call_operand.hbm [shape: bf16[8,256,512], index: 1, kind: input, shape index: {}]
  %s2 = inlined_call_operand.hbm [shape: f32[16,128], index: 2, kind: input, shape index: {}]
  %s3 = inlined_call_operand.hbm [shape: f32[1,128], index: 3, kind: input, shape index: {}]
  %s4 = inlined_call_operand.hbm [shape: f32[128,128], index: 4, kind: input, shape index: {}]
  %s5 = inlined_call_operand.hbm [shape: f32[1,128], index: 5, kind: input, shape index: {}]
  %s6 = inlined_call_operand.hbm [shape: f32[1,5], index: 6, kind: input, shape index: {}]
  %s7 = inlined_call_operand.hbm [shape: f32[1024,128], index: 7, kind: output, shape index: {}]
  %s8 = sld [smem:[#allocation0]]
  $region105: #{tpu_custom_call.1} parent=0
    _
  %s10 = ssub.s32 1, %s8
  %s11 = scalar_select 0, %s10, %s8
  $region1: #{tpu_custom_call.1} parent=0
    #allocation5 [shape = 'u8[2097152]{0}', space=vmem, size = 0x200000, scoped, tag = 'input window, operand 1, single buffered']
    #allocation6 [shape = 's32[2]{0}', space=sflag, size = 0x8, scoped, tag = 'scoped memory for tpu_custom_call.1']
    #allocation7 [shape = 's32[2]{0}', space=sflag, size = 0x8, scoped, tag = 'scoped memory for tpu_custom_call.1']
    #allocation8 [shape = 's32[2]{0}', space=sflag, size = 0x8, scoped, tag = 'scoped memory for tpu_custom_call.1']
    #allocation9 [shape = 'u8[8192]{0}', space=vmem, size = 0x2000, scoped, tag = 'input window, operand 2, single buffered']
    #allocation10 [shape = 's32[1]{0}', space=sflag, size = 0x4, scoped, tag = 'scoped memory for tpu_custom_call.1']
    #allocation11 [shape = 'u8[512]{0}', space=vmem, size = 0x400, scoped, tag = 'input window, operand 3, single buffered']
    #allocation12 [shape = 'u8[65536]{0}', space=vmem, size = 0x10000, scoped, tag = 'input window, operand 4, single buffered']
    #allocation13 [shape = 's32[1]{0}', space=sflag, size = 0x4, scoped, tag = 'scoped memory for tpu_custom_call.1']
    #allocation14 [shape = 'u8[512]{0}', space=vmem, size = 0x400, scoped, tag = 'input window, operand 5, single buffered']
    #allocation15 [shape = 'u8[512]{0}', space=smem, size = 0x200, scoped, tag = 'input window, operand 6, single buffered']
    #allocation16 [shape = 'u8[262144]{0}', space=vmem, size = 0x40000, scoped, tag = 'output window, operand 0']
    %12 = vsyncpa [#allocation6], 0
    %13 = vsyncpa [#allocation10], 0
    %14 = vsyncpa [#allocation13], 0
    %15 = vsyncpa [#allocation8], 0
    %16 = vsyncpa [#allocation7], 0
    %s17 = scalar_lea.sflag [#allocation7], 1
    %18 = vsyncpa %s17, 0
    loop: start=0, step=1, limit=34
    $region2: #{tpu_custom_call.1} parent=1 // loop_pre_header
      _
    $region3: #{tpu_custom_call.1} parent=1 // loop_header
      %s20 = sphi 0, %s24
      %p21 = scmp.ge.s32.totalorder %s20, 34
      %s27 = sphi 0, %s46
      %s28 = sphi 0, %s42
      %s29 = sphi 0, %s38
      %s30 = sphi 0, %s27
      %s31 = sphi 0, %s28
      %s32 = sphi 0, %s29
      %s33 = sphi 0, %s30
      %s34 = sphi 0, %s31
      %s35 = sphi 0, %s32
      %s59 = sphi 0, %s61
      %s62 = sphi 0, %s59
      %s63 = sphi 0, %s62
      %s79 = sphi 0, %s63
      %s83 = sphi 0, %s83
      %s85 = sphi 0, %s83
      %s86 = sphi 0, %s85
      %s100 = sphi 0, %s86
      %s104 = sphi 0, %s104
      %s106 = sphi 0, %s104
      %s107 = sphi 0, %s106
      %s121 = sphi 0, %s107
      %s125 = sphi 0, %s125
      %s127 = sphi 0, %s125
      %s128 = sphi 0, %s127
      %s142 = sphi 0, %s128
      %s146 = sphi 0, %s146
      %s148 = sphi 0, %s146
      %s149 = sphi 0, %s148
      %s163 = sphi 0, %s149
      %s167 = sphi 0, %s167
      %s169 = sphi 0, %s167
      %s170 = sphi 0, %s169
      %s184 = sphi 0, %s170
      %s188 = sphi 0, %s188
      %s190 = sphi 0, %s188
      %s191 = sphi 0, %s190
      %s205 = sphi 0, %s191
      %s215 = sphi 0, %s217
      %s218 = sphi 0, %s215
      %s219 = sphi 0, %s218
      %s235 = sphi 0, %s219
    $region4: #{tpu_custom_call.1} parent=1 // loop_header_branch
      %23 = sbr.rel (%p21) target = $region8
    $region5: #{tpu_custom_call.1} parent=1 // loop_body
      %s25 = ssub.s32 %s20, 1
      %s26 = ssub.s32 %s20, 2
      %s36 = sadd.s32 1, %s29
      %p37 = scmp.ge.s32.totalorder %s36, 2
      %s38 = scalar_select %p37, 0, %s36
      %s39 = sadd.s32 1, %s28
      %s40 = scalar_select %p37, %s39, %s28
      %p41 = scmp.ge.s32.totalorder %s40, 4
      %s42 = scalar_select %p41, 0, %s40
      %s43 = sadd.s32 1, %s27
      %s44 = scalar_select %p41, %s43, %s27
      %p45 = scmp.ge.s32.totalorder %s44, 4
      %s46 = scalar_select %p45, 0, %s44
      %p47 = scmp.eq.s32.totalorder %s27, 0
      %p48 = scmp.eq.s32.totalorder %s28, 0
      %p49 = pnand %p47, %p48
      %p50 = pneg %p49
      %s51 = scalar_select %p50, %s29, 0
      %p52 = scmp.eq.s32.totalorder %s46, 0
      %p53 = scmp.eq.s32.totalorder %s42, 0
      %p54 = pnand %p52, %p53
      %p55 = pneg %p54
      %s56 = scalar_select %p55, %s38, 0
      %s57 = ssub.s32 %s51, %s56
      %p58 = scmp.eq.s32.totalorder %s57, 0
      %s60 = sadd.s32 %s59, 1
      %s61 = scalar_select %p58, %s59, %s60
      %p64 = pneg %p58
      %p65 = scmp.eq.s32.totalorder %s20, 31
      %p66 = por %p64, %p65
      %p67 = scmp.ne.s32.totalorder %s59, %s62
      %p68 = scmp.eq.s32.totalorder %s20, 0
      %p69 = por %p67, %p68
      %p70 = scmp.ne.s32.totalorder %s59, %s62
      %p71 = scmp.eq.s32.totalorder %s25, 31
      %p72 = por %p70, %p71
      %p73 = scmp.ne.s32.totalorder %s62, %s63
      %p74 = scmp.eq.s32.totalorder %s25, 0
      %p75 = por %p73, %p74
      %p76 = scmp.ne.s32.totalorder %s62, %s63
      %p77 = scmp.eq.s32.totalorder %s26, 31
      %p78 = por %p76, %p77
      %p80 = scmp.ne.s32.totalorder %s63, %s79
      %p81 = scmp.eq.s32.totalorder %s26, 0
      %p82 = por %p80, %p81
      %s84 = sadd.s32 %s83, 1
      %p87 = scmp.eq.s32.totalorder %s20, 31
      %p88 = scmp.ne.s32.totalorder %s83, %s85
      %p89 = scmp.eq.s32.totalorder %s20, 0
      %p90 = por %p88, %p89
      %p91 = scmp.ne.s32.totalorder %s83, %s85
      %p92 = scmp.eq.s32.totalorder %s25, 31
      %p93 = por %p91, %p92
      %p94 = scmp.ne.s32.totalorder %s85, %s86
      %p95 = scmp.eq.s32.totalorder %s25, 0
      %p96 = por %p94, %p95
      %p97 = scmp.ne.s32.totalorder %s85, %s86
      %p98 = scmp.eq.s32.totalorder %s26, 31
      %p99 = por %p97, %p98
      %p101 = scmp.ne.s32.totalorder %s86, %s100
      %p102 = scmp.eq.s32.totalorder %s26, 0
      %p103 = por %p101, %p102
      %s105 = sadd.s32 %s104, 1
      %p108 = scmp.eq.s32.totalorder %s20, 31
      %p109 = scmp.ne.s32.totalorder %s104, %s106
      %p110 = scmp.eq.s32.totalorder %s20, 0
      %p111 = por %p109, %p110
      %p112 = scmp.ne.s32.totalorder %s104, %s106
      %p113 = scmp.eq.s32.totalorder %s25, 31
      %p114 = por %p112, %p113
      %p115 = scmp.ne.s32.totalorder %s106, %s107
      %p116 = scmp.eq.s32.totalorder %s25, 0
      %p117 = por %p115, %p116
      %p118 = scmp.ne.s32.totalorder %s106, %s107
      %p119 = scmp.eq.s32.totalorder %s26, 31
      %p120 = por %p118, %p119
      %p122 = scmp.ne.s32.totalorder %s107, %s121
      %p123 = scmp.eq.s32.totalorder %s26, 0
      %p124 = por %p122, %p123
      %s126 = sadd.s32 %s125, 1
      %p129 = scmp.eq.s32.totalorder %s20, 31
      %p130 = scmp.ne.s32.totalorder %s125, %s127
      %p131 = scmp.eq.s32.totalorder %s20, 0
      %p132 = por %p130, %p131
      %p133 = scmp.ne.s32.totalorder %s125, %s127
      %p134 = scmp.eq.s32.totalorder %s25, 31
      %p135 = por %p133, %p134
      %p136 = scmp.ne.s32.totalorder %s127, %s128
      %p137 = scmp.eq.s32.totalorder %s25, 0
      %p138 = por %p136, %p137
      %p139 = scmp.ne.s32.totalorder %s127, %s128
      %p140 = scmp.eq.s32.totalorder %s26, 31
      %p141 = por %p139, %p140
      %p143 = scmp.ne.s32.totalorder %s128, %s142
      %p144 = scmp.eq.s32.totalorder %s26, 0
      %p145 = por %p143, %p144
      %s147 = sadd.s32 %s146, 1
      %p150 = scmp.eq.s32.totalorder %s20, 31
      %p151 = scmp.ne.s32.totalorder %s146, %s148
      %p152 = scmp.eq.s32.totalorder %s20, 0
      %p153 = por %p151, %p152
      %p154 = scmp.ne.s32.totalorder %s146, %s148
      %p155 = scmp.eq.s32.totalorder %s25, 31
      %p156 = por %p154, %p155
      %p157 = scmp.ne.s32.totalorder %s148, %s149
      %p158 = scmp.eq.s32.totalorder %s25, 0
      %p159 = por %p157, %p158
      %p160 = scmp.ne.s32.totalorder %s148, %s149
      %p161 = scmp.eq.s32.totalorder %s26, 31
      %p162 = por %p160, %p161
      %p164 = scmp.ne.s32.totalorder %s149, %s163
      %p165 = scmp.eq.s32.totalorder %s26, 0
      %p166 = por %p164, %p165
      %s168 = sadd.s32 %s167, 1
      %p171 = scmp.eq.s32.totalorder %s20, 31
      %p172 = scmp.ne.s32.totalorder %s167, %s169
      %p173 = scmp.eq.s32.totalorder %s20, 0
      %p174 = por %p172, %p173
      %p175 = scmp.ne.s32.totalorder %s167, %s169
      %p176 = scmp.eq.s32.totalorder %s25, 31
      %p177 = por %p175, %p176
      %p178 = scmp.ne.s32.totalorder %s169, %s170
      %p179 = scmp.eq.s32.totalorder %s25, 0
      %p180 = por %p178, %p179
      %p181 = scmp.ne.s32.totalorder %s169, %s170
      %p182 = scmp.eq.s32.totalorder %s26, 31
      %p183 = por %p181, %p182
      %p185 = scmp.ne.s32.totalorder %s170, %s184
      %p186 = scmp.eq.s32.totalorder %s26, 0
      %p187 = por %p185, %p186
      %s189 = sadd.s32 %s188, 1
      %p192 = scmp.eq.s32.totalorder %s20, 31
      %p193 = scmp.ne.s32.totalorder %s188, %s190
      %p194 = scmp.eq.s32.totalorder %s20, 0
      %p195 = por %p193, %p194
      %p196 = scmp.ne.s32.totalorder %s188, %s190
      %p197 = scmp.eq.s32.totalorder %s25, 31
      %p198 = por %p196, %p197
      %p199 = scmp.ne.s32.totalorder %s190, %s191
      %p200 = scmp.eq.s32.totalorder %s25, 0
      %p201 = por %p199, %p200
      %p202 = scmp.ne.s32.totalorder %s190, %s191
      %p203 = scmp.eq.s32.totalorder %s26, 31
      %p204 = por %p202, %p203
      %p206 = scmp.ne.s32.totalorder %s191, %s205
      %p207 = scmp.eq.s32.totalorder %s26, 0
      %p208 = por %p206, %p207
      %p209 = scmp.eq.s32.totalorder %s27, 3
      %s210 = scalar_select %p209, %s28, 0
      %p211 = scmp.eq.s32.totalorder %s46, 3
      %s212 = scalar_select %p211, %s42, 0
      %s213 = ssub.s32 %s210, %s212
      %p214 = scmp.eq.s32.totalorder %s213, 0
      %s216 = sadd.s32 %s215, 1
      %s217 = scalar_select %p214, %s215, %s216
      %p220 = pneg %p214
      %p221 = scmp.eq.s32.totalorder %s20, 31
      %p222 = por %p220, %p221
      %p223 = scmp.ne.s32.totalorder %s215, %s218
      %p224 = scmp.eq.s32.totalorder %s20, 0
      %p225 = por %p223, %p224
      %p226 = scmp.ne.s32.totalorder %s215, %s218
      %p227 = scmp.eq.s32.totalorder %s25, 31
      %p228 = por %p226, %p227
      %p229 = scmp.ne.s32.totalorder %s218, %s219
      %p230 = scmp.eq.s32.totalorder %s25, 0
      %p231 = por %p229, %p230
      %p232 = scmp.ne.s32.totalorder %s218, %s219
      %p233 = scmp.eq.s32.totalorder %s26, 31
      %p234 = por %p232, %p233
      %p236 = scmp.ne.s32.totalorder %s219, %s235
      %p237 = scmp.eq.s32.totalorder %s26, 0
      %p238 = por %p236, %p237
      %p239 = scmp.le.s32.totalorder 1, %s20
      %p240 = scmp.lt.s32.totalorder %s20, 33
      %p241 = pnand %p239, %p240
      %p242 = pneg %p241
      // Predicated region
      $region9: #{tpu_custom_call.1} parent=5 // pred_check
        _
      $region10: #{tpu_custom_call.1} parent=5 // pred_check_branch
        %244 = sbr.rel (%p241) target = $region12
      $region11: #{tpu_custom_call.1} parent=5 // pred_region
        %s245 = ssub.s32 %s20, 1
        // Predicated region
        $region13: #{tpu_custom_call.1} parent=11 // pred_check
          %p246 = pneg %p96
        $region14: #{tpu_custom_call.1} parent=11 // pred_check_branch
          %248 = sbr.rel (%p246) target = $region16
        $region15: #{tpu_custom_call.1} parent=11 // pred_region
          %s250 = ssub.s32 65536, 65536
          %251 = vsyncadd [#allocation6], %s250
          %s252 = sshll.u32 [#allocation5], 4
          %s253 = int_to_ptr.vmem [resolvable:$true] %s252
          %258 = dma.hbm_to_vmem [thread:$0]  %s1, 65536, %s253, [#allocation6], 256, 256, 16
        $region16: #{tpu_custom_call.1} parent=11 // pred_fallthru
          _
        // Predicated region
        $region17: #{tpu_custom_call.1} parent=11 // pred_check
          %p259 = pneg %p117
        $region18: #{tpu_custom_call.1} parent=11 // pred_check_branch
          %261 = sbr.rel (%p259) target = $region20
        $region19: #{tpu_custom_call.1} parent=11 // pred_region
          %s263 = ssub.s32 256, 256
          %264 = vsyncadd [#allocation10], %s263
          %s265 = sshll.u32 [#allocation9], 4
          %s266 = int_to_ptr.vmem [resolvable:$true] %s265
          %271 = dma.hbm_to_vmem [thread:$0]  %s2, 256, %s266, [#allocation10], 128, 128, 8
        $region20: #{tpu_custom_call.1} parent=11 // pred_fallthru
          _
        // Predicated region
        $region21: #{tpu_custom_call.1} parent=11 // pred_check
          %p272 = pneg %p138
        $region22: #{tpu_custom_call.1} parent=11 // pred_check_branch
          %274 = sbr.rel (%p272) target = $region24
        $region23: #{tpu_custom_call.1} parent=11 // pred_region
          %s276 = ssub.s32 16, 16
          %277 = vsyncadd [#allocation10], %s276
          %s279 = sshll.u32 [#allocation11], 4
          %s280 = int_to_ptr.vmem [resolvable:$true] %s279
          %282 = dma.hbm_to_vmem [thread:$0]  %s3, 16, %s280, [#allocation10]
        $region24: #{tpu_custom_call.1} parent=11 // pred_fallthru
          _
        // Predicated region
        $region25: #{tpu_custom_call.1} parent=11 // pred_check
          %p283 = pneg %p159
        $region26: #{tpu_custom_call.1} parent=11 // pred_check_branch
          %285 = sbr.rel (%p283) target = $region28
        $region27: #{tpu_custom_call.1} parent=11 // pred_region
          %s287 = ssub.s32 2048, 2048
          %288 = vsyncadd [#allocation13], %s287
          %s289 = sshll.u32 [#allocation12], 4
          %s290 = int_to_ptr.vmem [resolvable:$true] %s289
          %295 = dma.hbm_to_vmem [thread:$0]  %s4, 2048, %s290, [#allocation13], 128, 128, 8
        $region28: #{tpu_custom_call.1} parent=11 // pred_fallthru
          _
        // Predicated region
        $region29: #{tpu_custom_call.1} parent=11 // pred_check
          %p296 = pneg %p180
        $region30: #{tpu_custom_call.1} parent=11 // pred_check_branch
          %298 = sbr.rel (%p296) target = $region32
        $region31: #{tpu_custom_call.1} parent=11 // pred_region
          %s300 = ssub.s32 16, 16
          %301 = vsyncadd [#allocation13], %s300
          %s303 = sshll.u32 [#allocation14], 4
          %s304 = int_to_ptr.vmem [resolvable:$true] %s303
          %306 = dma.hbm_to_vmem [thread:$0]  %s5, 16, %s304, [#allocation13]
        $region32: #{tpu_custom_call.1} parent=11 // pred_fallthru
          _
        // Predicated region
        $region33: #{tpu_custom_call.1} parent=11 // pred_check
          %p307 = pneg %p201
        $region34: #{tpu_custom_call.1} parent=11 // pred_check_branch
          %309 = sbr.rel (%p307) target = $region36
        $region35: #{tpu_custom_call.1} parent=11 // pred_region
          %s311 = ssub.s32 16, 16
          %312 = vsyncadd [#allocation8], %s311
          %315 = dma.hbm_to_smem %s6, 16, [#allocation15], [#allocation8]
        $region36: #{tpu_custom_call.1} parent=11 // pred_fallthru
          _
      $region12: #{tpu_custom_call.1} parent=5 // pred_fallthru
        _
      %p316 = scmp.lt.s32.totalorder %s20, 32
      // Predicated region
      $region37: #{tpu_custom_call.1} parent=5 // pred_check
        %p317 = pneg %p316
      $region38: #{tpu_custom_call.1} parent=5 // pred_check_branch
        %319 = sbr.rel (%p317) target = $region40
      $region39: #{tpu_custom_call.1} parent=5 // pred_region
        // Predicated region
        $region41: #{tpu_custom_call.1} parent=39 // pred_check
          %p320 = pneg %p69
        $region42: #{tpu_custom_call.1} parent=39 // pred_check_branch
          %322 = sbr.rel (%p320) target = $region44
        $region43: #{tpu_custom_call.1} parent=39 // pred_region
          %p323 = scmp.eq.s32.totalorder %s27, 0
          %p324 = scmp.eq.s32.totalorder %s28, 0
          %p325 = pnand %p323, %p324
          %p326 = pneg %p325
          %s327 = scalar_select %p326, %s29, 0
          %s328 = smul.u32 64, %s327
          %p329 = scmp.lt.s32.totalorder %s328, 127
          %s330 = scalar_select %p329, %s328, 127
          %s331 = smul.addr %s330, 8
          %s332 = scalar_lea.vmem %s0, %s331
          %p333 = scmp.eq.s32.totalorder %s27, 0
          %p334 = scmp.eq.s32.totalorder %s28, 0
          %p335 = pnand %p333, %p334
          %p336 = pneg %p335
          %s337 = scalar_select %p336, %s29, 0
          %s338 = smul.u32 64, %s337
        $region44: #{tpu_custom_call.1} parent=39 // pred_fallthru
          _
      $region40: #{tpu_custom_call.1} parent=5 // pred_fallthru
        _
      %p339 = scmp.le.s32.totalorder 1, %s20
      %p340 = scmp.lt.s32.totalorder %s20, 33
      %p341 = pnand %p339, %p340
      %p342 = pneg %p341
      // Predicated region
      $region45: #{tpu_custom_call.1} parent=5 // pred_check
        _
      $region46: #{tpu_custom_call.1} parent=5 // pred_check_branch
        %344 = sbr.rel (%p341) target = $region48
      $region47: #{tpu_custom_call.1} parent=5 // pred_region
        %s345 = ssub.s32 %s20, 1
        // Predicated region
        $region49: #{tpu_custom_call.1} parent=47 // pred_check
          %p346 = pneg %p96
        $region50: #{tpu_custom_call.1} parent=47 // pred_check_branch
          %348 = sbr.rel (%p346) target = $region52
        $region51: #{tpu_custom_call.1} parent=47 // pred_region
          %349 = dma.done [#allocation6], 65536
        $region52: #{tpu_custom_call.1} parent=47 // pred_fallthru
          _
        // Predicated region
        $region53: #{tpu_custom_call.1} parent=47 // pred_check
          %p350 = pneg %p117
        $region54: #{tpu_custom_call.1} parent=47 // pred_check_branch
          %352 = sbr.rel (%p350) target = $region56
        $region55: #{tpu_custom_call.1} parent=47 // pred_region
          %353 = dma.done [#allocation10], 256
        $region56: #{tpu_custom_call.1} parent=47 // pred_fallthru
          _
        // Predicated region
        $region57: #{tpu_custom_call.1} parent=47 // pred_check
          %p354 = pneg %p138
        $region58: #{tpu_custom_call.1} parent=47 // pred_check_branch
          %356 = sbr.rel (%p354) target = $region60
        $region59: #{tpu_custom_call.1} parent=47 // pred_region
          %357 = dma.done [#allocation10], 16
        $region60: #{tpu_custom_call.1} parent=47 // pred_fallthru
          _
        // Predicated region
        $region61: #{tpu_custom_call.1} parent=47 // pred_check
          %p358 = pneg %p159
        $region62: #{tpu_custom_call.1} parent=47 // pred_check_branch
          %360 = sbr.rel (%p358) target = $region64
        $region63: #{tpu_custom_call.1} parent=47 // pred_region
          %361 = dma.done [#allocation13], 2048
        $region64: #{tpu_custom_call.1} parent=47 // pred_fallthru
          _
        // Predicated region
        $region65: #{tpu_custom_call.1} parent=47 // pred_check
          %p362 = pneg %p180
        $region66: #{tpu_custom_call.1} parent=47 // pred_check_branch
          %364 = sbr.rel (%p362) target = $region68
        $region67: #{tpu_custom_call.1} parent=47 // pred_region
          %365 = dma.done [#allocation13], 16
        $region68: #{tpu_custom_call.1} parent=47 // pred_fallthru
          _
        // Predicated region
        $region69: #{tpu_custom_call.1} parent=47 // pred_check
          %p366 = pneg %p201
        $region70: #{tpu_custom_call.1} parent=47 // pred_check_branch
          %368 = sbr.rel (%p366) target = $region72
        $region71: #{tpu_custom_call.1} parent=47 // pred_region
          %369 = dma.done [#allocation8], 16
        $region72: #{tpu_custom_call.1} parent=47 // pred_fallthru
          _
        %370 = sfence
        %p371 = scmp.eq.s32.totalorder %s30, 0
        %p372 = scmp.eq.s32.totalorder %s31, 0
        %p373 = pnand %p371, %p372
        %p374 = pneg %p373
        %s375 = scalar_select %p374, %s32, 0
        %s376 = smul.u32 64, %s375
        %p377 = scmp.lt.s32.totalorder %s376, 127
        %s378 = scalar_select %p377, %s376, 127
        %s379 = smul.addr %s378, 8
        %s380 = scalar_lea.vmem %s0, %s379
        %p381 = pneg %p75
        %p382 = pneg %p72
        %p383 = pneg %p96
        %p384 = pneg %p93
        %p385 = pneg %p117
        %p386 = pneg %p114
        %p387 = pneg %p138
        %p388 = pneg %p135
        %p389 = pneg %p159
        %p390 = pneg %p156
        %p391 = pneg %p180
        %p392 = pneg %p177
        %p393 = pneg %p201
        %p394 = pneg %p198
        %p395 = pneg %p231
        %p396 = pneg %p228
        %s397 = sand.u32 %s218, 1
        %s398 = scalar_lea.sflag [#allocation7], %s397
        %s399 = sand.u32 %s218, 1
        %s400 = smul.addr %s399, 256
        %s401 = scalar_lea.vmem [#allocation16], %s400
        %p402 = scmp.eq.s32.totalorder %s30, 0
        %p403 = scmp.eq.s32.totalorder %s31, 0
        %p404 = pnand %p402, %p403
        %p405 = pneg %p404
        %s406 = scalar_select %p405, %s32, 0
        %s407 = smul.u32 64, %s406
        %p408 = scmp.lt.s32.totalorder %s407, 127
        %s409 = scalar_select %p408, %s407, 127
        %s410 = smul.addr %s409, 8
        %s411 = scalar_lea.vmem %s0, %s410
        %p412 = scmp.eq.s32.totalorder %s30, 0
        %p413 = scmp.eq.s32.totalorder %s31, 0
        %p414 = pnand %p412, %p413
        %p415 = pneg %p414
        %s416 = scalar_select %p415, %s32, 0
        %s417 = smul.u32 64, %s416
        %p418 = scmp.eq.s32.totalorder %s30, 3
        %s419 = scalar_select %p418, %s31, 0
        %s420 = smul.u32 32, %s419
        %p422 = scmp.eq.s32.totalorder %s30, 0
        %p423 = scmp.eq.s32.totalorder %s31, 0
        %p424 = pnand %p422, %p423
        %p425 = pneg %p424
        // Predicated region
        $region73: #{tpu_custom_call.1} parent=47 // pred_check
          _
        $region74: #{tpu_custom_call.1} parent=47 // pred_check_branch
          %427 = sbr.rel (%p424) target = $region76
        $region75: #{tpu_custom_call.1} parent=47 // pred_region
          %s428 = smul.u32 %s32, 512
          %v429 = vld [vmem:[%s411] sm:$0xff]
          %v430 = vld [vmem:[%s411 + $0x8] sm:$0xff]
          %v431 = vld [vmem:[%s411 + $0x10] sm:$0xff]
          %v432 = vld [vmem:[%s411 + $0x18] sm:$0xff]
          %v433 = vld [vmem:[%s411 + $0x20] sm:$0xff]
          %v434 = vld [vmem:[%s411 + $0x28] sm:$0xff]
          %v435 = vld [vmem:[%s411 + $0x30] sm:$0xff]
          %v436 = vld [vmem:[%s411 + $0x38] sm:$0xff]
          %v437 = vld [vmem:[%s411 + $0x40] sm:$0xff]
          %v438 = vld [vmem:[%s411 + $0x48] sm:$0xff]
          %v439 = vld [vmem:[%s411 + $0x50] sm:$0xff]
          %v440 = vld [vmem:[%s411 + $0x58] sm:$0xff]
          %v441 = vld [vmem:[%s411 + $0x60] sm:$0xff]
          %v442 = vld [vmem:[%s411 + $0x68] sm:$0xff]
          %v443 = vld [vmem:[%s411 + $0x70] sm:$0xff]
          %v444 = vld [vmem:[%s411 + $0x78] sm:$0xff]
          %v445 = vld [vmem:[%s411 + $0x80] sm:$0xff]
          %v446 = vld [vmem:[%s411 + $0x88] sm:$0xff]
          %v447 = vld [vmem:[%s411 + $0x90] sm:$0xff]
          %v448 = vld [vmem:[%s411 + $0x98] sm:$0xff]
          %v449 = vld [vmem:[%s411 + $0xa0] sm:$0xff]
          %v450 = vld [vmem:[%s411 + $0xa8] sm:$0xff]
          %v451 = vld [vmem:[%s411 + $0xb0] sm:$0xff]
          %v452 = vld [vmem:[%s411 + $0xb8] sm:$0xff]
          %v453 = vld [vmem:[%s411 + $0xc0] sm:$0xff]
          %v454 = vld [vmem:[%s411 + $0xc8] sm:$0xff]
          %v455 = vld [vmem:[%s411 + $0xd0] sm:$0xff]
          %v456 = vld [vmem:[%s411 + $0xd8] sm:$0xff]
          %v457 = vld [vmem:[%s411 + $0xe0] sm:$0xff]
          %v458 = vld [vmem:[%s411 + $0xe8] sm:$0xff]
          %v459 = vld [vmem:[%s411 + $0xf0] sm:$0xff]
          %v460 = vld [vmem:[%s411 + $0xf8] sm:$0xff]
          %v461 = vld [vmem:[#allocation9] sm:$0xff]
          %v462 = vld [vmem:[#allocation9 + $0x8] sm:$0xff]
          %v463 = vld [vmem:[#allocation11] sm:$0x1]
          %v465 = vlaneseq
          %v466 = vshrl.u32 %v465, 7
          %v467 = vsub.s32 0, %v466
          %v468 = vrot.slane %v463, %v467
          %vm470 = vcmask 130048
          %v472 = vsel %vm470, %v429, 0
          %v475 = vsel %vm470, %v430, 0
          %v478 = vsel %vm470, %v431, 0
          %v481 = vsel %vm470, %v432, 0
          %v484 = vsel %vm470, %v433, 0
          %v487 = vsel %vm470, %v434, 0
          %v490 = vsel %vm470, %v435, 0
          %v493 = vsel %vm470, %v436, 0
          %v496 = vsel %vm470, %v437, 0
          %v499 = vsel %vm470, %v438, 0
          %v502 = vsel %vm470, %v439, 0
          %v505 = vsel %vm470, %v440, 0
          %v508 = vsel %vm470, %v441, 0
          %v511 = vsel %vm470, %v442, 0
          %v514 = vsel %vm470, %v443, 0
          %v517 = vsel %vm470, %v444, 0
          %v520 = vsel %vm470, %v445, 0
          %v523 = vsel %vm470, %v446, 0
          %v526 = vsel %vm470, %v447, 0
          %v529 = vsel %vm470, %v448, 0
          %v532 = vsel %vm470, %v449, 0
          %v535 = vsel %vm470, %v450, 0
          %v538 = vsel %vm470, %v451, 0
          %v541 = vsel %vm470, %v452, 0
          %v544 = vsel %vm470, %v453, 0
          %v547 = vsel %vm470, %v454, 0
          %v550 = vsel %vm470, %v455, 0
          %v553 = vsel %vm470, %v456, 0
          %v556 = vsel %vm470, %v457, 0
          %v559 = vsel %vm470, %v458, 0
          %v562 = vsel %vm470, %v459, 0
          %v565 = vsel %vm470, %v460, 0
          %567 = vmatprep.subr.mxu0 0.0
          %568 = vmatpush1.msra.mxu0 0.0
          %569 = vmatprep.subr.mxu0 0.0
          %570 = vmatpush1.msra.mxu0 0.0
          %571 = vmatprep.subr.mxu0 0.0
          %572 = vmatpush1.msra.mxu0 0.0
          %573 = vmatprep.subr.mxu0 0.0
          %574 = vmatpush1.msra.mxu0 0.0
          %575 = vmatprep.subr.mxu0 0.0
          %576 = vmatpush1.msra.mxu0 0.0
          %577 = vmatprep.subr.mxu0 0.0
          %578 = vmatpush1.msra.mxu0 0.0
          %579 = vmatprep.subr.mxu0 0.0
          %580 = vmatpush1.msra.mxu0 0.0
          %581 = vmatprep.subr.mxu0 0.0
          %582 = vmatpush1.msra.mxu0 0.0
          %583 = vmatprep.subr.mxu0 0.0
          %584 = vmatpush1.msra.mxu0 0.0
          %585 = vmatprep.subr.mxu0 0.0
          %586 = vmatpush1.msra.mxu0 0.0
          %587 = vmatprep.subr.mxu0 0.0
          %588 = vmatpush1.msra.mxu0 0.0
          %589 = vmatprep.subr.mxu0 0.0
          %590 = vmatpush1.msra.mxu0 0.0
          %591 = vmatprep.subr.mxu0 0.0
          %592 = vmatpush1.msra.mxu0 0.0
          %593 = vmatprep.subr.mxu0 0.0
          %594 = vmatpush1.msra.mxu0 0.0
          %595 = vmatprep.subr.mxu0 0.0
          %596 = vmatpush1.msra.mxu0 %v462
          %597 = vmatprep.subr.mxu0 0.0
          %598 = vmatpush1.msra.mxu0 %v461
          %599 = vmatprep.subr.mxu0 0.0
          %600 = vmatpush2.msra.mxu0 0.0
          %601 = vmatprep.subr.mxu0 0.0
          %602 = vmatpush2.msra.mxu0 0.0
          %603 = vmatprep.subr.mxu0 0.0
          %604 = vmatpush2.msra.mxu0 0.0
          %605 = vmatprep.subr.mxu0 0.0
          %606 = vmatpush2.msra.mxu0 0.0
          %607 = vmatprep.subr.mxu0 0.0
          %608 = vmatpush2.msra.mxu0 0.0
          %609 = vmatprep.subr.mxu0 0.0
          %610 = vmatpush2.msra.mxu0 0.0
          %611 = vmatprep.subr.mxu0 0.0
          %612 = vmatpush2.msra.mxu0 0.0
          %613 = vmatprep.subr.mxu0 0.0
          %614 = vmatpush2.msra.mxu0 0.0
          %615 = vmatprep.subr.mxu0 0.0
          %616 = vmatpush2.msra.mxu0 0.0
          %617 = vmatprep.subr.mxu0 0.0
          %618 = vmatpush2.msra.mxu0 0.0
          %619 = vmatprep.subr.mxu0 0.0
          %620 = vmatpush2.msra.mxu0 0.0
          %621 = vmatprep.subr.mxu0 0.0
          %622 = vmatpush2.msra.mxu0 0.0
          %623 = vmatprep.subr.mxu0 0.0
          %624 = vmatpush2.msra.mxu0 0.0
          %625 = vmatprep.subr.mxu0 0.0
          %626 = vmatpush2.msra.mxu0 0.0
          %627 = vmatprep.subr.mxu0 0.0
          %628 = vmatpush2.msra.mxu0 0.0
          %629 = vmatprep.subr.mxu0 0.0
          %630 = vmatpush2.msra.mxu0 0.0
          %631 = vmatprep.mubr.f32.mxu0 0.0
          %632 = vmatmul.mubr.f32.gmra.mxu0 %v472
          %v633 = vpop.f32.mrf.mxu0
          %v634 = vadd.f32 %v468, %v633
          %v635 = vpop.f32.mrf.mxu0
          %636 = vmatprep.mubr.f32.mxu0 0.0
          %637 = vmatmul.mubr.f32.gmra.mxu0 %v475
          %v638 = vpop.f32.mrf.mxu0
          %v639 = vadd.f32 %v468, %v638
          %v640 = vpop.f32.mrf.mxu0
          %641 = vmatprep.mubr.f32.mxu0 0.0
          %642 = vmatmul.mubr.f32.gmra.mxu0 %v478
          %v643 = vpop.f32.mrf.mxu0
          %v644 = vadd.f32 %v468, %v643
          %v645 = vpop.f32.mrf.mxu0
          %646 = vmatprep.mubr.f32.mxu0 0.0
          %647 = vmatmul.mubr.f32.gmra.mxu0 %v481
          %v648 = vpop.f32.mrf.mxu0
          %v649 = vadd.f32 %v468, %v648
          %v650 = vpop.f32.mrf.mxu0
          %651 = vmatprep.mubr.f32.mxu0 0.0
          %652 = vmatmul.mubr.f32.gmra.mxu0 %v484
          %v653 = vpop.f32.mrf.mxu0
          %v654 = vadd.f32 %v468, %v653
          %v655 = vpop.f32.mrf.mxu0
          %656 = vmatprep.mubr.f32.mxu0 0.0
          %657 = vmatmul.mubr.f32.gmra.mxu0 %v487
          %v658 = vpop.f32.mrf.mxu0
          %v659 = vadd.f32 %v468, %v658
          %v660 = vpop.f32.mrf.mxu0
          %661 = vmatprep.mubr.f32.mxu0 0.0
          %662 = vmatmul.mubr.f32.gmra.mxu0 %v490
          %v663 = vpop.f32.mrf.mxu0
          %v664 = vadd.f32 %v468, %v663
          %v665 = vpop.f32.mrf.mxu0
          %666 = vmatprep.mubr.f32.mxu0 0.0
          %667 = vmatmul.mubr.f32.gmra.mxu0 %v493
          %v668 = vpop.f32.mrf.mxu0
          %v669 = vadd.f32 %v468, %v668
          %v670 = vpop.f32.mrf.mxu0
          %671 = vmatprep.mubr.f32.mxu0 0.0
          %672 = vmatmul.mubr.f32.gmra.mxu0 %v496
          %v673 = vpop.f32.mrf.mxu0
          %v674 = vadd.f32 %v468, %v673
          %v675 = vpop.f32.mrf.mxu0
          %676 = vmatprep.mubr.f32.mxu0 0.0
          %677 = vmatmul.mubr.f32.gmra.mxu0 %v499
          %v678 = vpop.f32.mrf.mxu0
          %v679 = vadd.f32 %v468, %v678
          %v680 = vpop.f32.mrf.mxu0
          %681 = vmatprep.mubr.f32.mxu0 0.0
          %682 = vmatmul.mubr.f32.gmra.mxu0 %v502
          %v683 = vpop.f32.mrf.mxu0
          %v684 = vadd.f32 %v468, %v683
          %v685 = vpop.f32.mrf.mxu0
          %686 = vmatprep.mubr.f32.mxu0 0.0
          %687 = vmatmul.mubr.f32.gmra.mxu0 %v505
          %v688 = vpop.f32.mrf.mxu0
          %v689 = vadd.f32 %v468, %v688
          %v690 = vpop.f32.mrf.mxu0
          %691 = vmatprep.mubr.f32.mxu0 0.0
          %692 = vmatmul.mubr.f32.gmra.mxu0 %v508
          %v693 = vpop.f32.mrf.mxu0
          %v694 = vadd.f32 %v468, %v693
          %v695 = vpop.f32.mrf.mxu0
          %696 = vmatprep.mubr.f32.mxu0 0.0
          %697 = vmatmul.mubr.f32.gmra.mxu0 %v511
          %v698 = vpop.f32.mrf.mxu0
          %v699 = vadd.f32 %v468, %v698
          %v700 = vpop.f32.mrf.mxu0
          %701 = vmatprep.mubr.f32.mxu0 0.0
          %702 = vmatmul.mubr.f32.gmra.mxu0 %v514
          %v703 = vpop.f32.mrf.mxu0
          %v704 = vadd.f32 %v468, %v703
          %v705 = vpop.f32.mrf.mxu0
          %706 = vmatprep.mubr.f32.mxu0 0.0
          %707 = vmatmul.mubr.f32.gmra.mxu0 %v517
          %v708 = vpop.f32.mrf.mxu0
          %v709 = vadd.f32 %v468, %v708
          %v710 = vpop.f32.mrf.mxu0
          %711 = vmatprep.mubr.f32.mxu0 0.0
          %712 = vmatmul.mubr.f32.gmra.mxu0 %v520
          %v713 = vpop.f32.mrf.mxu0
          %v714 = vadd.f32 %v468, %v713
          %v715 = vpop.f32.mrf.mxu0
          %716 = vmatprep.mubr.f32.mxu0 0.0
          %717 = vmatmul.mubr.f32.gmra.mxu0 %v523
          %v718 = vpop.f32.mrf.mxu0
          %v719 = vadd.f32 %v468, %v718
          %v720 = vpop.f32.mrf.mxu0
          %721 = vmatprep.mubr.f32.mxu0 0.0
          %722 = vmatmul.mubr.f32.gmra.mxu0 %v526
          %v723 = vpop.f32.mrf.mxu0
          %v724 = vadd.f32 %v468, %v723
          %v725 = vpop.f32.mrf.mxu0
          %726 = vmatprep.mubr.f32.mxu0 0.0
          %727 = vmatmul.mubr.f32.gmra.mxu0 %v529
          %v728 = vpop.f32.mrf.mxu0
          %v729 = vadd.f32 %v468, %v728
          %v730 = vpop.f32.mrf.mxu0
          %731 = vmatprep.mubr.f32.mxu0 0.0
          %732 = vmatmul.mubr.f32.gmra.mxu0 %v532
          %v733 = vpop.f32.mrf.mxu0
          %v734 = vadd.f32 %v468, %v733
          %v735 = vpop.f32.mrf.mxu0
          %736 = vmatprep.mubr.f32.mxu0 0.0
          %737 = vmatmul.mubr.f32.gmra.mxu0 %v535
          %v738 = vpop.f32.mrf.mxu0
          %v739 = vadd.f32 %v468, %v738
          %v740 = vpop.f32.mrf.mxu0
          %741 = vmatprep.mubr.f32.mxu0 0.0
          %742 = vmatmul.mubr.f32.gmra.mxu0 %v538
          %v743 = vpop.f32.mrf.mxu0
          %v744 = vadd.f32 %v468, %v743
          %v745 = vpop.f32.mrf.mxu0
          %746 = vmatprep.mubr.f32.mxu0 0.0
          %747 = vmatmul.mubr.f32.gmra.mxu0 %v541
          %v748 = vpop.f32.mrf.mxu0
          %v749 = vadd.f32 %v468, %v748
          %v750 = vpop.f32.mrf.mxu0
          %751 = vmatprep.mubr.f32.mxu0 0.0
          %752 = vmatmul.mubr.f32.gmra.mxu0 %v544
          %v753 = vpop.f32.mrf.mxu0
          %v754 = vadd.f32 %v468, %v753
          %v755 = vpop.f32.mrf.mxu0
          %756 = vmatprep.mubr.f32.mxu0 0.0
          %757 = vmatmul.mubr.f32.gmra.mxu0 %v547
          %v758 = vpop.f32.mrf.mxu0
          %v759 = vadd.f32 %v468, %v758
          %v760 = vpop.f32.mrf.mxu0
          %761 = vmatprep.mubr.f32.mxu0 0.0
          %762 = vmatmul.mubr.f32.gmra.mxu0 %v550
          %v763 = vpop.f32.mrf.mxu0
          %v764 = vadd.f32 %v468, %v763
          %v765 = vpop.f32.mrf.mxu0
          %766 = vmatprep.mubr.f32.mxu0 0.0
          %767 = vmatmul.mubr.f32.gmra.mxu0 %v553
          %v768 = vpop.f32.mrf.mxu0
          %v769 = vadd.f32 %v468, %v768
          %v770 = vpop.f32.mrf.mxu0
          %771 = vmatprep.mubr.f32.mxu0 0.0
          %772 = vmatmul.mubr.f32.gmra.mxu0 %v556
          %v773 = vpop.f32.mrf.mxu0
          %v774 = vadd.f32 %v468, %v773
          %v775 = vpop.f32.mrf.mxu0
          %776 = vmatprep.mubr.f32.mxu0 0.0
          %777 = vmatmul.mubr.f32.gmra.mxu0 %v559
          %v778 = vpop.f32.mrf.mxu0
          %v779 = vadd.f32 %v468, %v778
          %v780 = vpop.f32.mrf.mxu0
          %781 = vmatprep.mubr.f32.mxu0 0.0
          %782 = vmatmul.mubr.f32.gmra.mxu0 %v562
          %v783 = vpop.f32.mrf.mxu0
          %v784 = vadd.f32 %v468, %v783
          %v785 = vpop.f32.mrf.mxu0
          %786 = vmatprep.mubr.f32.mxu0 0.0
          %787 = vmatmul.mubr.f32.gmra.mxu0 %v565
          %v788 = vpop.f32.mrf.mxu0
          %v789 = vadd.f32 %v468, %v788
          %v790 = vpop.f32.mrf.mxu0
          %791 = vdwg.mxu0
          %v792 = vmax.f32 %v634, 0.0
          %v793 = vmax.f32 %v639, 0.0
          %v794 = vmax.f32 %v644, 0.0
          %v795 = vmax.f32 %v649, 0.0
          %v796 = vmax.f32 %v654, 0.0
          %v797 = vmax.f32 %v659, 0.0
          %v798 = vmax.f32 %v664, 0.0
          %v799 = vmax.f32 %v669, 0.0
          %v800 = vmax.f32 %v674, 0.0
          %v801 = vmax.f32 %v679, 0.0
          %v802 = vmax.f32 %v684, 0.0
          %v803 = vmax.f32 %v689, 0.0
          %v804 = vmax.f32 %v694, 0.0
          %v805 = vmax.f32 %v699, 0.0
          %v806 = vmax.f32 %v704, 0.0
          %v807 = vmax.f32 %v709, 0.0
          %v808 = vmax.f32 %v714, 0.0
          %v809 = vmax.f32 %v719, 0.0
          %v810 = vmax.f32 %v724, 0.0
          %v811 = vmax.f32 %v729, 0.0
          %v812 = vmax.f32 %v734, 0.0
          %v813 = vmax.f32 %v739, 0.0
          %v814 = vmax.f32 %v744, 0.0
          %v815 = vmax.f32 %v749, 0.0
          %v816 = vmax.f32 %v754, 0.0
          %v817 = vmax.f32 %v759, 0.0
          %v818 = vmax.f32 %v764, 0.0
          %v819 = vmax.f32 %v769, 0.0
          %v820 = vmax.f32 %v774, 0.0
          %v821 = vmax.f32 %v779, 0.0
          %v822 = vmax.f32 %v784, 0.0
          %v823 = vmax.f32 %v789, 0.0
          %v824 = vpack.c.bf16 %v793, %v792
          %v825 = vpack.c.bf16 %v795, %v794
          %v826 = vpack.c.bf16 %v797, %v796
          %v827 = vpack.c.bf16 %v799, %v798
          %v828 = vpack.c.bf16 %v801, %v800
          %v829 = vpack.c.bf16 %v803, %v802
          %v830 = vpack.c.bf16 %v805, %v804
          %v831 = vpack.c.bf16 %v807, %v806
          %v832 = vpack.c.bf16 %v809, %v808
          %v833 = vpack.c.bf16 %v811, %v810
          %v834 = vpack.c.bf16 %v813, %v812
          %v835 = vpack.c.bf16 %v815, %v814
          %v836 = vpack.c.bf16 %v817, %v816
          %v837 = vpack.c.bf16 %v819, %v818
          %v838 = vpack.c.bf16 %v821, %v820
          %v839 = vpack.c.bf16 %v823, %v822
          %v856 = vunpack.c.l.b16 %v824
          %v857 = vunpack.c.h.b16 %v824
          %v858 = vunpack.c.l.b16 %v825
          %v859 = vunpack.c.h.b16 %v825
          %v860 = vunpack.c.l.b16 %v826
          %v861 = vunpack.c.h.b16 %v826
          %v862 = vunpack.c.l.b16 %v827
          %v863 = vunpack.c.h.b16 %v827
          %v864 = vunpack.c.l.b16 %v828
          %v865 = vunpack.c.h.b16 %v828
          %v866 = vunpack.c.l.b16 %v829
          %v867 = vunpack.c.h.b16 %v829
          %v868 = vunpack.c.l.b16 %v830
          %v869 = vunpack.c.h.b16 %v830
          %v870 = vunpack.c.l.b16 %v831
          %v871 = vunpack.c.h.b16 %v831
          %v872 = vunpack.c.l.b16 %v832
          %v873 = vunpack.c.h.b16 %v832
          %v874 = vunpack.c.l.b16 %v833
          %v875 = vunpack.c.h.b16 %v833
          %v876 = vunpack.c.l.b16 %v834
          %v877 = vunpack.c.h.b16 %v834
          %v878 = vunpack.c.l.b16 %v835
          %v879 = vunpack.c.h.b16 %v835
          %v880 = vunpack.c.l.b16 %v836
          %v881 = vunpack.c.h.b16 %v836
          %v882 = vunpack.c.l.b16 %v837
          %v883 = vunpack.c.h.b16 %v837
          %v884 = vunpack.c.l.b16 %v838
          %v885 = vunpack.c.h.b16 %v838
          %v886 = vunpack.c.l.b16 %v839
          %v887 = vunpack.c.h.b16 %v839
          %v888 = vpack.c.b16 %v856, %v856
          %v889 = vpack.c.b16 %v857, %v857
          %v890 = vpack.c.b16 %v858, %v858
          %v891 = vpack.c.b16 %v859, %v859
          %v892 = vpack.c.b16 %v860, %v860
          %v893 = vpack.c.b16 %v861, %v861
          %v894 = vpack.c.b16 %v862, %v862
          %v895 = vpack.c.b16 %v863, %v863
          %v896 = vpack.c.b16 %v864, %v864
          %v897 = vpack.c.b16 %v865, %v865
          %v898 = vpack.c.b16 %v866, %v866
          %v899 = vpack.c.b16 %v867, %v867
          %v900 = vpack.c.b16 %v868, %v868
          %v901 = vpack.c.b16 %v869, %v869
          %v902 = vpack.c.b16 %v870, %v870
          %v903 = vpack.c.b16 %v871, %v871
          %v904 = vpack.c.b16 %v872, %v872
          %v905 = vpack.c.b16 %v873, %v873
          %v906 = vpack.c.b16 %v874, %v874
          %v907 = vpack.c.b16 %v875, %v875
          %v908 = vpack.c.b16 %v876, %v876
          %v909 = vpack.c.b16 %v877, %v877
          %v910 = vpack.c.b16 %v878, %v878
          %v911 = vpack.c.b16 %v879, %v879
          %v912 = vpack.c.b16 %v880, %v880
          %v913 = vpack.c.b16 %v881, %v881
          %v914 = vpack.c.b16 %v882, %v882
          %v915 = vpack.c.b16 %v883, %v883
          %v916 = vpack.c.b16 %v884, %v884
          %v917 = vpack.c.b16 %v885, %v885
          %v918 = vpack.c.b16 %v886, %v886
          %v919 = vpack.c.b16 %v887, %v887
          %s952 = sshra.s32 %s428, 3
          %s953 = sand.u32 %s428, 7
          %s954 = smul.addr %s952, 4
          %s955 = scalar_lea.vmem [#allocation2], %s954
          %956 = vst [vmem:[%s955] sm:$0xf] %v888
          %957 = vst [vmem:[%s955 + $0x4] sm:$0xf] %v889
          %958 = vst [vmem:[%s955 + $0x8] sm:$0xf] %v890
          %959 = vst [vmem:[%s955 + $0xc] sm:$0xf] %v891
          %960 = vst [vmem:[%s955 + $0x10] sm:$0xf] %v892
          %961 = vst [vmem:[%s955 + $0x14] sm:$0xf] %v893
          %962 = vst [vmem:[%s955 + $0x18] sm:$0xf] %v894
          %963 = vst [vmem:[%s955 + $0x1c] sm:$0xf] %v895
          %964 = vst [vmem:[%s955 + $0x20] sm:$0xf] %v896
          %965 = vst [vmem:[%s955 + $0x24] sm:$0xf] %v897
          %966 = vst [vmem:[%s955 + $0x28] sm:$0xf] %v898
          %967 = vst [vmem:[%s955 + $0x2c] sm:$0xf] %v899
          %968 = vst [vmem:[%s955 + $0x30] sm:$0xf] %v900
          %969 = vst [vmem:[%s955 + $0x34] sm:$0xf] %v901
          %970 = vst [vmem:[%s955 + $0x38] sm:$0xf] %v902
          %971 = vst [vmem:[%s955 + $0x3c] sm:$0xf] %v903
          %972 = vst [vmem:[%s955 + $0x40] sm:$0xf] %v904
          %973 = vst [vmem:[%s955 + $0x44] sm:$0xf] %v905
          %974 = vst [vmem:[%s955 + $0x48] sm:$0xf] %v906
          %975 = vst [vmem:[%s955 + $0x4c] sm:$0xf] %v907
          %976 = vst [vmem:[%s955 + $0x50] sm:$0xf] %v908
          %977 = vst [vmem:[%s955 + $0x54] sm:$0xf] %v909
          %978 = vst [vmem:[%s955 + $0x58] sm:$0xf] %v910
          %979 = vst [vmem:[%s955 + $0x5c] sm:$0xf] %v911
          %980 = vst [vmem:[%s955 + $0x60] sm:$0xf] %v912
          %981 = vst [vmem:[%s955 + $0x64] sm:$0xf] %v913
          %982 = vst [vmem:[%s955 + $0x68] sm:$0xf] %v914
          %983 = vst [vmem:[%s955 + $0x6c] sm:$0xf] %v915
          %984 = vst [vmem:[%s955 + $0x70] sm:$0xf] %v916
          %985 = vst [vmem:[%s955 + $0x74] sm:$0xf] %v917
          %986 = vst [vmem:[%s955 + $0x78] sm:$0xf] %v918
          %987 = vst [vmem:[%s955 + $0x7c] sm:$0xf] %v919
          %s988 = sld [smem:[#allocation15]]
          %v989 = vstv %s988
          %v990 = vmul.f32 %v989, %v792
          %v991 = vmul.f32 %v989, %v793
          %v992 = vmul.f32 %v989, %v794
          %v993 = vmul.f32 %v989, %v795
          %v994 = vmul.f32 %v989, %v796
          %v995 = vmul.f32 %v989, %v797
          %v996 = vmul.f32 %v989, %v798
          %v997 = vmul.f32 %v989, %v799
          %v998 = vmul.f32 %v989, %v800
          %v999 = vmul.f32 %v989, %v801
          %v1000 = vmul.f32 %v989, %v802
          %v1001 = vmul.f32 %v989, %v803
          %v1002 = vmul.f32 %v989, %v804
          %v1003 = vmul.f32 %v989, %v805
          %v1004 = vmul.f32 %v989, %v806
          %v1005 = vmul.f32 %v989, %v807
          %v1006 = vmul.f32 %v989, %v808
          %v1007 = vmul.f32 %v989, %v809
          %v1008 = vmul.f32 %v989, %v810
          %v1009 = vmul.f32 %v989, %v811
          %v1010 = vmul.f32 %v989, %v812
          %v1011 = vmul.f32 %v989, %v813
          %v1012 = vmul.f32 %v989, %v814
          %v1013 = vmul.f32 %v989, %v815
          %v1014 = vmul.f32 %v989, %v816
          %v1015 = vmul.f32 %v989, %v817
          %v1016 = vmul.f32 %v989, %v818
          %v1017 = vmul.f32 %v989, %v819
          %v1018 = vmul.f32 %v989, %v820
          %v1019 = vmul.f32 %v989, %v821
          %v1020 = vmul.f32 %v989, %v822
          %v1021 = vmul.f32 %v989, %v823
          %s1022 = scalar_lea.vmem [#allocation3], %s428
          %1023 = vst [vmem:[%s1022] sm:$0xff] %v990
          %1024 = vst [vmem:[%s1022 + $0x8] sm:$0xff] %v991
          %1025 = vst [vmem:[%s1022 + $0x10] sm:$0xff] %v992
          %1026 = vst [vmem:[%s1022 + $0x18] sm:$0xff] %v993
          %1027 = vst [vmem:[%s1022 + $0x20] sm:$0xff] %v994
          %1028 = vst [vmem:[%s1022 + $0x28] sm:$0xff] %v995
          %1029 = vst [vmem:[%s1022 + $0x30] sm:$0xff] %v996
          %1030 = vst [vmem:[%s1022 + $0x38] sm:$0xff] %v997
          %1031 = vst [vmem:[%s1022 + $0x40] sm:$0xff] %v998
          %1032 = vst [vmem:[%s1022 + $0x48] sm:$0xff] %v999
          %1033 = vst [vmem:[%s1022 + $0x50] sm:$0xff] %v1000
          %1034 = vst [vmem:[%s1022 + $0x58] sm:$0xff] %v1001
          %1035 = vst [vmem:[%s1022 + $0x60] sm:$0xff] %v1002
          %1036 = vst [vmem:[%s1022 + $0x68] sm:$0xff] %v1003
          %1037 = vst [vmem:[%s1022 + $0x70] sm:$0xff] %v1004
          %1038 = vst [vmem:[%s1022 + $0x78] sm:$0xff] %v1005
          %1039 = vst [vmem:[%s1022 + $0x80] sm:$0xff] %v1006
          %1040 = vst [vmem:[%s1022 + $0x88] sm:$0xff] %v1007
          %1041 = vst [vmem:[%s1022 + $0x90] sm:$0xff] %v1008
          %1042 = vst [vmem:[%s1022 + $0x98] sm:$0xff] %v1009
          %1043 = vst [vmem:[%s1022 + $0xa0] sm:$0xff] %v1010
          %1044 = vst [vmem:[%s1022 + $0xa8] sm:$0xff] %v1011
          %1045 = vst [vmem:[%s1022 + $0xb0] sm:$0xff] %v1012
          %1046 = vst [vmem:[%s1022 + $0xb8] sm:$0xff] %v1013
          %1047 = vst [vmem:[%s1022 + $0xc0] sm:$0xff] %v1014
          %1048 = vst [vmem:[%s1022 + $0xc8] sm:$0xff] %v1015
          %1049 = vst [vmem:[%s1022 + $0xd0] sm:$0xff] %v1016
          %1050 = vst [vmem:[%s1022 + $0xd8] sm:$0xff] %v1017
          %1051 = vst [vmem:[%s1022 + $0xe0] sm:$0xff] %v1018
          %1052 = vst [vmem:[%s1022 + $0xe8] sm:$0xff] %v1019
          %1053 = vst [vmem:[%s1022 + $0xf0] sm:$0xff] %v1020
          %1054 = vst [vmem:[%s1022 + $0xf8] sm:$0xff] %v1021
          %s1055 = sadd.s32 %s428, 256
          %v1056 = vld [vmem:[%s411 + $0x100] sm:$0xff]
          %v1057 = vld [vmem:[%s411 + $0x108] sm:$0xff]
          %v1058 = vld [vmem:[%s411 + $0x110] sm:$0xff]
          %v1059 = vld [vmem:[%s411 + $0x118] sm:$0xff]
          %v1060 = vld [vmem:[%s411 + $0x120] sm:$0xff]
          %v1061 = vld [vmem:[%s411 + $0x128] sm:$0xff]
          %v1062 = vld [vmem:[%s411 + $0x130] sm:$0xff]
          %v1063 = vld [vmem:[%s411 + $0x138] sm:$0xff]
          %v1064 = vld [vmem:[%s411 + $0x140] sm:$0xff]
          %v1065 = vld [vmem:[%s411 + $0x148] sm:$0xff]
          %v1066 = vld [vmem:[%s411 + $0x150] sm:$0xff]
          %v1067 = vld [vmem:[%s411 + $0x158] sm:$0xff]
          %v1068 = vld [vmem:[%s411 + $0x160] sm:$0xff]
          %v1069 = vld [vmem:[%s411 + $0x168] sm:$0xff]
          %v1070 = vld [vmem:[%s411 + $0x170] sm:$0xff]
          %v1071 = vld [vmem:[%s411 + $0x178] sm:$0xff]
          %v1072 = vld [vmem:[%s411 + $0x180] sm:$0xff]
          %v1073 = vld [vmem:[%s411 + $0x188] sm:$0xff]
          %v1074 = vld [vmem:[%s411 + $0x190] sm:$0xff]
          %v1075 = vld [vmem:[%s411 + $0x198] sm:$0xff]
          %v1076 = vld [vmem:[%s411 + $0x1a0] sm:$0xff]
          %v1077 = vld [vmem:[%s411 + $0x1a8] sm:$0xff]
          %v1078 = vld [vmem:[%s411 + $0x1b0] sm:$0xff]
          %v1079 = vld [vmem:[%s411 + $0x1b8] sm:$0xff]
          %v1080 = vld [vmem:[%s411 + $0x1c0] sm:$0xff]
          %v1081 = vld [vmem:[%s411 + $0x1c8] sm:$0xff]
          %v1082 = vld [vmem:[%s411 + $0x1d0] sm:$0xff]
          %v1083 = vld [vmem:[%s411 + $0x1d8] sm:$0xff]
          %v1084 = vld [vmem:[%s411 + $0x1e0] sm:$0xff]
          %v1085 = vld [vmem:[%s411 + $0x1e8] sm:$0xff]
          %v1086 = vld [vmem:[%s411 + $0x1f0] sm:$0xff]
          %v1087 = vld [vmem:[%s411 + $0x1f8] sm:$0xff]
          %v1088 = vld [vmem:[#allocation9] sm:$0xff]
          %v1089 = vld [vmem:[#allocation9 + $0x8] sm:$0xff]
          %v1090 = vld [vmem:[#allocation11] sm:$0x1]
          %v1092 = vlaneseq
          %v1093 = vshrl.u32 %v1092, 7
          %v1094 = vsub.s32 0, %v1093
          %v1095 = vrot.slane %v1090, %v1094
          %v1098 = vsel %vm470, %v1056, 0
          %v1101 = vsel %vm470, %v1057, 0
          %v1104 = vsel %vm470, %v1058, 0
          %v1107 = vsel %vm470, %v1059, 0
          %v1110 = vsel %vm470, %v1060, 0
          %v1113 = vsel %vm470, %v1061, 0
          %v1116 = vsel %vm470, %v1062, 0
          %v1119 = vsel %vm470, %v1063, 0
          %v1122 = vsel %vm470, %v1064, 0
          %v1125 = vsel %vm470, %v1065, 0
          %v1128 = vsel %vm470, %v1066, 0
          %v1131 = vsel %vm470, %v1067, 0
          %v1134 = vsel %vm470, %v1068, 0
          %v1137 = vsel %vm470, %v1069, 0
          %v1140 = vsel %vm470, %v1070, 0
          %v1143 = vsel %vm470, %v1071, 0
          %v1146 = vsel %vm470, %v1072, 0
          %v1149 = vsel %vm470, %v1073, 0
          %v1152 = vsel %vm470, %v1074, 0
          %v1155 = vsel %vm470, %v1075, 0
          %v1158 = vsel %vm470, %v1076, 0
          %v1161 = vsel %vm470, %v1077, 0
          %v1164 = vsel %vm470, %v1078, 0
          %v1167 = vsel %vm470, %v1079, 0
          %v1170 = vsel %vm470, %v1080, 0
          %v1173 = vsel %vm470, %v1081, 0
          %v1176 = vsel %vm470, %v1082, 0
          %v1179 = vsel %vm470, %v1083, 0
          %v1182 = vsel %vm470, %v1084, 0
          %v1185 = vsel %vm470, %v1085, 0
          %v1188 = vsel %vm470, %v1086, 0
          %v1191 = vsel %vm470, %v1087, 0
          %1193 = vmatprep.subr.mxu0 0.0
          %1194 = vmatpush1.msra.mxu0 0.0
          %1195 = vmatprep.subr.mxu0 0.0
          %1196 = vmatpush1.msra.mxu0 0.0
          %1197 = vmatprep.subr.mxu0 0.0
          %1198 = vmatpush1.msra.mxu0 0.0
          %1199 = vmatprep.subr.mxu0 0.0
          %1200 = vmatpush1.msra.mxu0 0.0
          %1201 = vmatprep.subr.mxu0 0.0
          %1202 = vmatpush1.msra.mxu0 0.0
          %1203 = vmatprep.subr.mxu0 0.0
          %1204 = vmatpush1.msra.mxu0 0.0
          %1205 = vmatprep.subr.mxu0 0.0
          %1206 = vmatpush1.msra.mxu0 0.0
          %1207 = vmatprep.subr.mxu0 0.0
          %1208 = vmatpush1.msra.mxu0 0.0
          %1209 = vmatprep.subr.mxu0 0.0
          %1210 = vmatpush1.msra.mxu0 0.0
          %1211 = vmatprep.subr.mxu0 0.0
          %1212 = vmatpush1.msra.mxu0 0.0
          %1213 = vmatprep.subr.mxu0 0.0
          %1214 = vmatpush1.msra.mxu0 0.0
          %1215 = vmatprep.subr.mxu0 0.0
          %1216 = vmatpush1.msra.mxu0 0.0
          %1217 = vmatprep.subr.mxu0 0.0
          %1218 = vmatpush1.msra.mxu0 0.0
          %1219 = vmatprep.subr.mxu0 0.0
          %1220 = vmatpush1.msra.mxu0 0.0
          %1221 = vmatprep.subr.mxu0 0.0
          %1222 = vmatpush1.msra.mxu0 %v1089
          %1223 = vmatprep.subr.mxu0 0.0
          %1224 = vmatpush1.msra.mxu0 %v1088
          %1225 = vmatprep.subr.mxu0 0.0
          %1226 = vmatpush2.msra.mxu0 0.0
          %1227 = vmatprep.subr.mxu0 0.0
          %1228 = vmatpush2.msra.mxu0 0.0
          %1229 = vmatprep.subr.mxu0 0.0
          %1230 = vmatpush2.msra.mxu0 0.0
          %1231 = vmatprep.subr.mxu0 0.0
          %1232 = vmatpush2.msra.mxu0 0.0
          %1233 = vmatprep.subr.mxu0 0.0
          %1234 = vmatpush2.msra.mxu0 0.0
          %1235 = vmatprep.subr.mxu0 0.0
          %1236 = vmatpush2.msra.mxu0 0.0
          %1237 = vmatprep.subr.mxu0 0.0
          %1238 = vmatpush2.msra.mxu0 0.0
          %1239 = vmatprep.subr.mxu0 0.0
          %1240 = vmatpush2.msra.mxu0 0.0
          %1241 = vmatprep.subr.mxu0 0.0
          %1242 = vmatpush2.msra.mxu0 0.0
          %1243 = vmatprep.subr.mxu0 0.0
          %1244 = vmatpush2.msra.mxu0 0.0
          %1245 = vmatprep.subr.mxu0 0.0
          %1246 = vmatpush2.msra.mxu0 0.0
          %1247 = vmatprep.subr.mxu0 0.0
          %1248 = vmatpush2.msra.mxu0 0.0
          %1249 = vmatprep.subr.mxu0 0.0
          %1250 = vmatpush2.msra.mxu0 0.0
          %1251 = vmatprep.subr.mxu0 0.0
          %1252 = vmatpush2.msra.mxu0 0.0
          %1253 = vmatprep.subr.mxu0 0.0
          %1254 = vmatpush2.msra.mxu0 0.0
          %1255 = vmatprep.subr.mxu0 0.0
          %1256 = vmatpush2.msra.mxu0 0.0
          %1257 = vmatprep.mubr.f32.mxu0 0.0
          %1258 = vmatmul.mubr.f32.gmra.mxu0 %v1098
          %v1259 = vpop.f32.mrf.mxu0
          %v1260 = vadd.f32 %v1095, %v1259
          %v1261 = vpop.f32.mrf.mxu0
          %1262 = vmatprep.mubr.f32.mxu0 0.0
          %1263 = vmatmul.mubr.f32.gmra.mxu0 %v1101
          %v1264 = vpop.f32.mrf.mxu0
          %v1265 = vadd.f32 %v1095, %v1264
          %v1266 = vpop.f32.mrf.mxu0
          %1267 = vmatprep.mubr.f32.mxu0 0.0
          %1268 = vmatmul.mubr.f32.gmra.mxu0 %v1104
          %v1269 = vpop.f32.mrf.mxu0
          %v1270 = vadd.f32 %v1095, %v1269
          %v1271 = vpop.f32.mrf.mxu0
          %1272 = vmatprep.mubr.f32.mxu0 0.0
          %1273 = vmatmul.mubr.f32.gmra.mxu0 %v1107
          %v1274 = vpop.f32.mrf.mxu0
          %v1275 = vadd.f32 %v1095, %v1274
          %v1276 = vpop.f32.mrf.mxu0
          %1277 = vmatprep.mubr.f32.mxu0 0.0
          %1278 = vmatmul.mubr.f32.gmra.mxu0 %v1110
          %v1279 = vpop.f32.mrf.mxu0
          %v1280 = vadd.f32 %v1095, %v1279
          %v1281 = vpop.f32.mrf.mxu0
          %1282 = vmatprep.mubr.f32.mxu0 0.0
          %1283 = vmatmul.mubr.f32.gmra.mxu0 %v1113
          %v1284 = vpop.f32.mrf.mxu0
          %v1285 = vadd.f32 %v1095, %v1284
          %v1286 = vpop.f32.mrf.mxu0
          %1287 = vmatprep.mubr.f32.mxu0 0.0
          %1288 = vmatmul.mubr.f32.gmra.mxu0 %v1116
          %v1289 = vpop.f32.mrf.mxu0
          %v1290 = vadd.f32 %v1095, %v1289
          %v1291 = vpop.f32.mrf.mxu0
          %1292 = vmatprep.mubr.f32.mxu0 0.0
          %1293 = vmatmul.mubr.f32.gmra.mxu0 %v1119
          %v1294 = vpop.f32.mrf.mxu0
          %v1295 = vadd.f32 %v1095, %v1294
          %v1296 = vpop.f32.mrf.mxu0
          %1297 = vmatprep.mubr.f32.mxu0 0.0
          %1298 = vmatmul.mubr.f32.gmra.mxu0 %v1122
          %v1299 = vpop.f32.mrf.mxu0
          %v1300 = vadd.f32 %v1095, %v1299
          %v1301 = vpop.f32.mrf.mxu0
          %1302 = vmatprep.mubr.f32.mxu0 0.0
          %1303 = vmatmul.mubr.f32.gmra.mxu0 %v1125
          %v1304 = vpop.f32.mrf.mxu0
          %v1305 = vadd.f32 %v1095, %v1304
          %v1306 = vpop.f32.mrf.mxu0
          %1307 = vmatprep.mubr.f32.mxu0 0.0
          %1308 = vmatmul.mubr.f32.gmra.mxu0 %v1128
          %v1309 = vpop.f32.mrf.mxu0
          %v1310 = vadd.f32 %v1095, %v1309
          %v1311 = vpop.f32.mrf.mxu0
          %1312 = vmatprep.mubr.f32.mxu0 0.0
          %1313 = vmatmul.mubr.f32.gmra.mxu0 %v1131
          %v1314 = vpop.f32.mrf.mxu0
          %v1315 = vadd.f32 %v1095, %v1314
          %v1316 = vpop.f32.mrf.mxu0
          %1317 = vmatprep.mubr.f32.mxu0 0.0
          %1318 = vmatmul.mubr.f32.gmra.mxu0 %v1134
          %v1319 = vpop.f32.mrf.mxu0
          %v1320 = vadd.f32 %v1095, %v1319
          %v1321 = vpop.f32.mrf.mxu0
          %1322 = vmatprep.mubr.f32.mxu0 0.0
          %1323 = vmatmul.mubr.f32.gmra.mxu0 %v1137
          %v1324 = vpop.f32.mrf.mxu0
          %v1325 = vadd.f32 %v1095, %v1324
          %v1326 = vpop.f32.mrf.mxu0
          %1327 = vmatprep.mubr.f32.mxu0 0.0
          %1328 = vmatmul.mubr.f32.gmra.mxu0 %v1140
          %v1329 = vpop.f32.mrf.mxu0
          %v1330 = vadd.f32 %v1095, %v1329
          %v1331 = vpop.f32.mrf.mxu0
          %1332 = vmatprep.mubr.f32.mxu0 0.0
          %1333 = vmatmul.mubr.f32.gmra.mxu0 %v1143
          %v1334 = vpop.f32.mrf.mxu0
          %v1335 = vadd.f32 %v1095, %v1334
          %v1336 = vpop.f32.mrf.mxu0
          %1337 = vmatprep.mubr.f32.mxu0 0.0
          %1338 = vmatmul.mubr.f32.gmra.mxu0 %v1146
          %v1339 = vpop.f32.mrf.mxu0
          %v1340 = vadd.f32 %v1095, %v1339
          %v1341 = vpop.f32.mrf.mxu0
          %1342 = vmatprep.mubr.f32.mxu0 0.0
          %1343 = vmatmul.mubr.f32.gmra.mxu0 %v1149
          %v1344 = vpop.f32.mrf.mxu0
          %v1345 = vadd.f32 %v1095, %v1344
          %v1346 = vpop.f32.mrf.mxu0
          %1347 = vmatprep.mubr.f32.mxu0 0.0
          %1348 = vmatmul.mubr.f32.gmra.mxu0 %v1152
          %v1349 = vpop.f32.mrf.mxu0
          %v1350 = vadd.f32 %v1095, %v1349
          %v1351 = vpop.f32.mrf.mxu0
          %1352 = vmatprep.mubr.f32.mxu0 0.0
          %1353 = vmatmul.mubr.f32.gmra.mxu0 %v1155
          %v1354 = vpop.f32.mrf.mxu0
          %v1355 = vadd.f32 %v1095, %v1354
          %v1356 = vpop.f32.mrf.mxu0
          %1357 = vmatprep.mubr.f32.mxu0 0.0
          %1358 = vmatmul.mubr.f32.gmra.mxu0 %v1158
          %v1359 = vpop.f32.mrf.mxu0
          %v1360 = vadd.f32 %v1095, %v1359
          %v1361 = vpop.f32.mrf.mxu0
          %1362 = vmatprep.mubr.f32.mxu0 0.0
          %1363 = vmatmul.mubr.f32.gmra.mxu0 %v1161
          %v1364 = vpop.f32.mrf.mxu0
          %v1365 = vadd.f32 %v1095, %v1364
          %v1366 = vpop.f32.mrf.mxu0
          %1367 = vmatprep.mubr.f32.mxu0 0.0
          %1368 = vmatmul.mubr.f32.gmra.mxu0 %v1164
          %v1369 = vpop.f32.mrf.mxu0
          %v1370 = vadd.f32 %v1095, %v1369
          %v1371 = vpop.f32.mrf.mxu0
          %1372 = vmatprep.mubr.f32.mxu0 0.0
          %1373 = vmatmul.mubr.f32.gmra.mxu0 %v1167
          %v1374 = vpop.f32.mrf.mxu0
          %v1375 = vadd.f32 %v1095, %v1374
          %v1376 = vpop.f32.mrf.mxu0
          %1377 = vmatprep.mubr.f32.mxu0 0.0
          %1378 = vmatmul.mubr.f32.gmra.mxu0 %v1170
          %v1379 = vpop.f32.mrf.mxu0
          %v1380 = vadd.f32 %v1095, %v1379
          %v1381 = vpop.f32.mrf.mxu0
          %1382 = vmatprep.mubr.f32.mxu0 0.0
          %1383 = vmatmul.mubr.f32.gmra.mxu0 %v1173
          %v1384 = vpop.f32.mrf.mxu0
          %v1385 = vadd.f32 %v1095, %v1384
          %v1386 = vpop.f32.mrf.mxu0
          %1387 = vmatprep.mubr.f32.mxu0 0.0
          %1388 = vmatmul.mubr.f32.gmra.mxu0 %v1176
          %v1389 = vpop.f32.mrf.mxu0
          %v1390 = vadd.f32 %v1095, %v1389
          %v1391 = vpop.f32.mrf.mxu0
          %1392 = vmatprep.mubr.f32.mxu0 0.0
          %1393 = vmatmul.mubr.f32.gmra.mxu0 %v1179
          %v1394 = vpop.f32.mrf.mxu0
          %v1395 = vadd.f32 %v1095, %v1394
          %v1396 = vpop.f32.mrf.mxu0
          %1397 = vmatprep.mubr.f32.mxu0 0.0
          %1398 = vmatmul.mubr.f32.gmra.mxu0 %v1182
          %v1399 = vpop.f32.mrf.mxu0
          %v1400 = vadd.f32 %v1095, %v1399
          %v1401 = vpop.f32.mrf.mxu0
          %1402 = vmatprep.mubr.f32.mxu0 0.0
          %1403 = vmatmul.mubr.f32.gmra.mxu0 %v1185
          %v1404 = vpop.f32.mrf.mxu0
          %v1405 = vadd.f32 %v1095, %v1404
          %v1406 = vpop.f32.mrf.mxu0
          %1407 = vmatprep.mubr.f32.mxu0 0.0
          %1408 = vmatmul.mubr.f32.gmra.mxu0 %v1188
          %v1409 = vpop.f32.mrf.mxu0
          %v1410 = vadd.f32 %v1095, %v1409
          %v1411 = vpop.f32.mrf.mxu0
          %1412 = vmatprep.mubr.f32.mxu0 0.0
          %1413 = vmatmul.mubr.f32.gmra.mxu0 %v1191
          %v1414 = vpop.f32.mrf.mxu0
          %v1415 = vadd.f32 %v1095, %v1414
          %v1416 = vpop.f32.mrf.mxu0
          %1417 = vdwg.mxu0
          %v1418 = vmax.f32 %v1260, 0.0
          %v1419 = vmax.f32 %v1265, 0.0
          %v1420 = vmax.f32 %v1270, 0.0
          %v1421 = vmax.f32 %v1275, 0.0
          %v1422 = vmax.f32 %v1280, 0.0
          %v1423 = vmax.f32 %v1285, 0.0
          %v1424 = vmax.f32 %v1290, 0.0
          %v1425 = vmax.f32 %v1295, 0.0
          %v1426 = vmax.f32 %v1300, 0.0
          %v1427 = vmax.f32 %v1305, 0.0
          %v1428 = vmax.f32 %v1310, 0.0
          %v1429 = vmax.f32 %v1315, 0.0
          %v1430 = vmax.f32 %v1320, 0.0
          %v1431 = vmax.f32 %v1325, 0.0
          %v1432 = vmax.f32 %v1330, 0.0
          %v1433 = vmax.f32 %v1335, 0.0
          %v1434 = vmax.f32 %v1340, 0.0
          %v1435 = vmax.f32 %v1345, 0.0
          %v1436 = vmax.f32 %v1350, 0.0
          %v1437 = vmax.f32 %v1355, 0.0
          %v1438 = vmax.f32 %v1360, 0.0
          %v1439 = vmax.f32 %v1365, 0.0
          %v1440 = vmax.f32 %v1370, 0.0
          %v1441 = vmax.f32 %v1375, 0.0
          %v1442 = vmax.f32 %v1380, 0.0
          %v1443 = vmax.f32 %v1385, 0.0
          %v1444 = vmax.f32 %v1390, 0.0
          %v1445 = vmax.f32 %v1395, 0.0
          %v1446 = vmax.f32 %v1400, 0.0
          %v1447 = vmax.f32 %v1405, 0.0
          %v1448 = vmax.f32 %v1410, 0.0
          %v1449 = vmax.f32 %v1415, 0.0
          %v1450 = vpack.c.bf16 %v1419, %v1418
          %v1451 = vpack.c.bf16 %v1421, %v1420
          %v1452 = vpack.c.bf16 %v1423, %v1422
          %v1453 = vpack.c.bf16 %v1425, %v1424
          %v1454 = vpack.c.bf16 %v1427, %v1426
          %v1455 = vpack.c.bf16 %v1429, %v1428
          %v1456 = vpack.c.bf16 %v1431, %v1430
          %v1457 = vpack.c.bf16 %v1433, %v1432
          %v1458 = vpack.c.bf16 %v1435, %v1434
          %v1459 = vpack.c.bf16 %v1437, %v1436
          %v1460 = vpack.c.bf16 %v1439, %v1438
          %v1461 = vpack.c.bf16 %v1441, %v1440
          %v1462 = vpack.c.bf16 %v1443, %v1442
          %v1463 = vpack.c.bf16 %v1445, %v1444
          %v1464 = vpack.c.bf16 %v1447, %v1446
          %v1465 = vpack.c.bf16 %v1449, %v1448
          %v1482 = vunpack.c.l.b16 %v1450
          %v1483 = vunpack.c.h.b16 %v1450
          %v1484 = vunpack.c.l.b16 %v1451
          %v1485 = vunpack.c.h.b16 %v1451
          %v1486 = vunpack.c.l.b16 %v1452
          %v1487 = vunpack.c.h.b16 %v1452
          %v1488 = vunpack.c.l.b16 %v1453
          %v1489 = vunpack.c.h.b16 %v1453
          %v1490 = vunpack.c.l.b16 %v1454
          %v1491 = vunpack.c.h.b16 %v1454
          %v1492 = vunpack.c.l.b16 %v1455
          %v1493 = vunpack.c.h.b16 %v1455
          %v1494 = vunpack.c.l.b16 %v1456
          %v1495 = vunpack.c.h.b16 %v1456
          %v1496 = vunpack.c.l.b16 %v1457
          %v1497 = vunpack.c.h.b16 %v1457
          %v1498 = vunpack.c.l.b16 %v1458
          %v1499 = vunpack.c.h.b16 %v1458
          %v1500 = vunpack.c.l.b16 %v1459
          %v1501 = vunpack.c.h.b16 %v1459
          %v1502 = vunpack.c.l.b16 %v1460
          %v1503 = vunpack.c.h.b16 %v1460
          %v1504 = vunpack.c.l.b16 %v1461
          %v1505 = vunpack.c.h.b16 %v1461
          %v1506 = vunpack.c.l.b16 %v1462
          %v1507 = vunpack.c.h.b16 %v1462
          %v1508 = vunpack.c.l.b16 %v1463
          %v1509 = vunpack.c.h.b16 %v1463
          %v1510 = vunpack.c.l.b16 %v1464
          %v1511 = vunpack.c.h.b16 %v1464
          %v1512 = vunpack.c.l.b16 %v1465
          %v1513 = vunpack.c.h.b16 %v1465
          %v1514 = vpack.c.b16 %v1482, %v1482
          %v1515 = vpack.c.b16 %v1483, %v1483
          %v1516 = vpack.c.b16 %v1484, %v1484
          %v1517 = vpack.c.b16 %v1485, %v1485
          %v1518 = vpack.c.b16 %v1486, %v1486
          %v1519 = vpack.c.b16 %v1487, %v1487
          %v1520 = vpack.c.b16 %v1488, %v1488
          %v1521 = vpack.c.b16 %v1489, %v1489
          %v1522 = vpack.c.b16 %v1490, %v1490
          %v1523 = vpack.c.b16 %v1491, %v1491
          %v1524 = vpack.c.b16 %v1492, %v1492
          %v1525 = vpack.c.b16 %v1493, %v1493
          %v1526 = vpack.c.b16 %v1494, %v1494
          %v1527 = vpack.c.b16 %v1495, %v1495
          %v1528 = vpack.c.b16 %v1496, %v1496
          %v1529 = vpack.c.b16 %v1497, %v1497
          %v1530 = vpack.c.b16 %v1498, %v1498
          %v1531 = vpack.c.b16 %v1499, %v1499
          %v1532 = vpack.c.b16 %v1500, %v1500
          %v1533 = vpack.c.b16 %v1501, %v1501
          %v1534 = vpack.c.b16 %v1502, %v1502
          %v1535 = vpack.c.b16 %v1503, %v1503
          %v1536 = vpack.c.b16 %v1504, %v1504
          %v1537 = vpack.c.b16 %v1505, %v1505
          %v1538 = vpack.c.b16 %v1506, %v1506
          %v1539 = vpack.c.b16 %v1507, %v1507
          %v1540 = vpack.c.b16 %v1508, %v1508
          %v1541 = vpack.c.b16 %v1509, %v1509
          %v1542 = vpack.c.b16 %v1510, %v1510
          %v1543 = vpack.c.b16 %v1511, %v1511
          %v1544 = vpack.c.b16 %v1512, %v1512
          %v1545 = vpack.c.b16 %v1513, %v1513
          %s1578 = sshra.s32 %s1055, 3
          %s1579 = sand.u32 %s1055, 7
          %s1580 = smul.addr %s1578, 4
          %s1581 = scalar_lea.vmem [#allocation2], %s1580
          %1582 = vst [vmem:[%s1581] sm:$0xf] %v1514
          %1583 = vst [vmem:[%s1581 + $0x4] sm:$0xf] %v1515
          %1584 = vst [vmem:[%s1581 + $0x8] sm:$0xf] %v1516
          %1585 = vst [vmem:[%s1581 + $0xc] sm:$0xf] %v1517
          %1586 = vst [vmem:[%s1581 + $0x10] sm:$0xf] %v1518
          %1587 = vst [vmem:[%s1581 + $0x14] sm:$0xf] %v1519
          %1588 = vst [vmem:[%s1581 + $0x18] sm:$0xf] %v1520
          %1589 = vst [vmem:[%s1581 + $0x1c] sm:$0xf] %v1521
          %1590 = vst [vmem:[%s1581 + $0x20] sm:$0xf] %v1522
          %1591 = vst [vmem:[%s1581 + $0x24] sm:$0xf] %v1523
          %1592 = vst [vmem:[%s1581 + $0x28] sm:$0xf] %v1524
          %1593 = vst [vmem:[%s1581 + $0x2c] sm:$0xf] %v1525
          %1594 = vst [vmem:[%s1581 + $0x30] sm:$0xf] %v1526
          %1595 = vst [vmem:[%s1581 + $0x34] sm:$0xf] %v1527
          %1596 = vst [vmem:[%s1581 + $0x38] sm:$0xf] %v1528
          %1597 = vst [vmem:[%s1581 + $0x3c] sm:$0xf] %v1529
          %1598 = vst [vmem:[%s1581 + $0x40] sm:$0xf] %v1530
          %1599 = vst [vmem:[%s1581 + $0x44] sm:$0xf] %v1531
          %1600 = vst [vmem:[%s1581 + $0x48] sm:$0xf] %v1532
          %1601 = vst [vmem:[%s1581 + $0x4c] sm:$0xf] %v1533
          %1602 = vst [vmem:[%s1581 + $0x50] sm:$0xf] %v1534
          %1603 = vst [vmem:[%s1581 + $0x54] sm:$0xf] %v1535
          %1604 = vst [vmem:[%s1581 + $0x58] sm:$0xf] %v1536
          %1605 = vst [vmem:[%s1581 + $0x5c] sm:$0xf] %v1537
          %1606 = vst [vmem:[%s1581 + $0x60] sm:$0xf] %v1538
          %1607 = vst [vmem:[%s1581 + $0x64] sm:$0xf] %v1539
          %1608 = vst [vmem:[%s1581 + $0x68] sm:$0xf] %v1540
          %1609 = vst [vmem:[%s1581 + $0x6c] sm:$0xf] %v1541
          %1610 = vst [vmem:[%s1581 + $0x70] sm:$0xf] %v1542
          %1611 = vst [vmem:[%s1581 + $0x74] sm:$0xf] %v1543
          %1612 = vst [vmem:[%s1581 + $0x78] sm:$0xf] %v1544
          %1613 = vst [vmem:[%s1581 + $0x7c] sm:$0xf] %v1545
          %s1614 = sld [smem:[#allocation15]]
          %v1615 = vstv %s1614
          %v1616 = vmul.f32 %v1615, %v1418
          %v1617 = vmul.f32 %v1615, %v1419
          %v1618 = vmul.f32 %v1615, %v1420
          %v1619 = vmul.f32 %v1615, %v1421
          %v1620 = vmul.f32 %v1615, %v1422
          %v1621 = vmul.f32 %v1615, %v1423
          %v1622 = vmul.f32 %v1615, %v1424
          %v1623 = vmul.f32 %v1615, %v1425
          %v1624 = vmul.f32 %v1615, %v1426
          %v1625 = vmul.f32 %v1615, %v1427
          %v1626 = vmul.f32 %v1615, %v1428
          %v1627 = vmul.f32 %v1615, %v1429
          %v1628 = vmul.f32 %v1615, %v1430
          %v1629 = vmul.f32 %v1615, %v1431
          %v1630 = vmul.f32 %v1615, %v1432
          %v1631 = vmul.f32 %v1615, %v1433
          %v1632 = vmul.f32 %v1615, %v1434
          %v1633 = vmul.f32 %v1615, %v1435
          %v1634 = vmul.f32 %v1615, %v1436
          %v1635 = vmul.f32 %v1615, %v1437
          %v1636 = vmul.f32 %v1615, %v1438
          %v1637 = vmul.f32 %v1615, %v1439
          %v1638 = vmul.f32 %v1615, %v1440
          %v1639 = vmul.f32 %v1615, %v1441
          %v1640 = vmul.f32 %v1615, %v1442
          %v1641 = vmul.f32 %v1615, %v1443
          %v1642 = vmul.f32 %v1615, %v1444
          %v1643 = vmul.f32 %v1615, %v1445
          %v1644 = vmul.f32 %v1615, %v1446
          %v1645 = vmul.f32 %v1615, %v1447
          %v1646 = vmul.f32 %v1615, %v1448
          %v1647 = vmul.f32 %v1615, %v1449
          %s1648 = scalar_lea.vmem [#allocation3], %s1055
          %1649 = vst [vmem:[%s1648] sm:$0xff] %v1616
          %1650 = vst [vmem:[%s1648 + $0x8] sm:$0xff] %v1617
          %1651 = vst [vmem:[%s1648 + $0x10] sm:$0xff] %v1618
          %1652 = vst [vmem:[%s1648 + $0x18] sm:$0xff] %v1619
          %1653 = vst [vmem:[%s1648 + $0x20] sm:$0xff] %v1620
          %1654 = vst [vmem:[%s1648 + $0x28] sm:$0xff] %v1621
          %1655 = vst [vmem:[%s1648 + $0x30] sm:$0xff] %v1622
          %1656 = vst [vmem:[%s1648 + $0x38] sm:$0xff] %v1623
          %1657 = vst [vmem:[%s1648 + $0x40] sm:$0xff] %v1624
          %1658 = vst [vmem:[%s1648 + $0x48] sm:$0xff] %v1625
          %1659 = vst [vmem:[%s1648 + $0x50] sm:$0xff] %v1626
          %1660 = vst [vmem:[%s1648 + $0x58] sm:$0xff] %v1627
          %1661 = vst [vmem:[%s1648 + $0x60] sm:$0xff] %v1628
          %1662 = vst [vmem:[%s1648 + $0x68] sm:$0xff] %v1629
          %1663 = vst [vmem:[%s1648 + $0x70] sm:$0xff] %v1630
          %1664 = vst [vmem:[%s1648 + $0x78] sm:$0xff] %v1631
          %1665 = vst [vmem:[%s1648 + $0x80] sm:$0xff] %v1632
          %1666 = vst [vmem:[%s1648 + $0x88] sm:$0xff] %v1633
          %1667 = vst [vmem:[%s1648 + $0x90] sm:$0xff] %v1634
          %1668 = vst [vmem:[%s1648 + $0x98] sm:$0xff] %v1635
          %1669 = vst [vmem:[%s1648 + $0xa0] sm:$0xff] %v1636
          %1670 = vst [vmem:[%s1648 + $0xa8] sm:$0xff] %v1637
          %1671 = vst [vmem:[%s1648 + $0xb0] sm:$0xff] %v1638
          %1672 = vst [vmem:[%s1648 + $0xb8] sm:$0xff] %v1639
          %1673 = vst [vmem:[%s1648 + $0xc0] sm:$0xff] %v1640
          %1674 = vst [vmem:[%s1648 + $0xc8] sm:$0xff] %v1641
          %1675 = vst [vmem:[%s1648 + $0xd0] sm:$0xff] %v1642
          %1676 = vst [vmem:[%s1648 + $0xd8] sm:$0xff] %v1643
          %1677 = vst [vmem:[%s1648 + $0xe0] sm:$0xff] %v1644
          %1678 = vst [vmem:[%s1648 + $0xe8] sm:$0xff] %v1645
          %1679 = vst [vmem:[%s1648 + $0xf0] sm:$0xff] %v1646
          %1680 = vst [vmem:[%s1648 + $0xf8] sm:$0xff] %v1647
        $region76: #{tpu_custom_call.1} parent=47 // pred_fallthru
          _
        %p1681 = scmp.eq.s32.totalorder %s32, 0
        // Predicated region
        $region77: #{tpu_custom_call.1} parent=47 // pred_check
          %p1682 = pneg %p1681
        $region78: #{tpu_custom_call.1} parent=47 // pred_check_branch
          %1684 = sbr.rel (%p1682) target = $region80
        $region79: #{tpu_custom_call.1} parent=47 // pred_region
          %1685 = vst [vmem:[#allocation4] sm:$0xff] 0.0
          %1686 = vst [vmem:[#allocation4 + $0x8] sm:$0xff] 0.0
          %1687 = vst [vmem:[#allocation4 + $0x10] sm:$0xff] 0.0
          %1688 = vst [vmem:[#allocation4 + $0x18] sm:$0xff] 0.0
          %1689 = vst [vmem:[#allocation4 + $0x20] sm:$0xff] 0.0
          %1690 = vst [vmem:[#allocation4 + $0x28] sm:$0xff] 0.0
          %1691 = vst [vmem:[#allocation4 + $0x30] sm:$0xff] 0.0
          %1692 = vst [vmem:[#allocation4 + $0x38] sm:$0xff] 0.0
          %1693 = vst [vmem:[#allocation4 + $0x40] sm:$0xff] 0.0
          %1694 = vst [vmem:[#allocation4 + $0x48] sm:$0xff] 0.0
          %1695 = vst [vmem:[#allocation4 + $0x50] sm:$0xff] 0.0
          %1696 = vst [vmem:[#allocation4 + $0x58] sm:$0xff] 0.0
          %1697 = vst [vmem:[#allocation4 + $0x60] sm:$0xff] 0.0
          %1698 = vst [vmem:[#allocation4 + $0x68] sm:$0xff] 0.0
          %1699 = vst [vmem:[#allocation4 + $0x70] sm:$0xff] 0.0
          %1700 = vst [vmem:[#allocation4 + $0x78] sm:$0xff] 0.0
          %1701 = vst [vmem:[#allocation4 + $0x80] sm:$0xff] 0.0
          %1702 = vst [vmem:[#allocation4 + $0x88] sm:$0xff] 0.0
          %1703 = vst [vmem:[#allocation4 + $0x90] sm:$0xff] 0.0
          %1704 = vst [vmem:[#allocation4 + $0x98] sm:$0xff] 0.0
          %1705 = vst [vmem:[#allocation4 + $0xa0] sm:$0xff] 0.0
          %1706 = vst [vmem:[#allocation4 + $0xa8] sm:$0xff] 0.0
          %1707 = vst [vmem:[#allocation4 + $0xb0] sm:$0xff] 0.0
          %1708 = vst [vmem:[#allocation4 + $0xb8] sm:$0xff] 0.0
          %1709 = vst [vmem:[#allocation4 + $0xc0] sm:$0xff] 0.0
          %1710 = vst [vmem:[#allocation4 + $0xc8] sm:$0xff] 0.0
          %1711 = vst [vmem:[#allocation4 + $0xd0] sm:$0xff] 0.0
          %1712 = vst [vmem:[#allocation4 + $0xd8] sm:$0xff] 0.0
          %1713 = vst [vmem:[#allocation4 + $0xe0] sm:$0xff] 0.0
          %1714 = vst [vmem:[#allocation4 + $0xe8] sm:$0xff] 0.0
          %1715 = vst [vmem:[#allocation4 + $0xf0] sm:$0xff] 0.0
          %1716 = vst [vmem:[#allocation4 + $0xf8] sm:$0xff] 0.0
        $region80: #{tpu_custom_call.1} parent=47 // pred_fallthru
          _
        %s1717 = smul.u32 %s31, 2
        %s1718 = sadd.s32 %s1717, %s32
        %s1719 = smul.u32 %s1718, 128
        %s1720 = smul.addr %s1719, 4
        %s1721 = scalar_lea.vmem [#allocation5], %s1720
        %v1722 = vld [vmem:[%s1721] sm:$0xff]
        %v1723 = vld [vmem:[%s1721 + $0x8] sm:$0xff]
        %v1724 = vld [vmem:[%s1721 + $0x10] sm:$0xff]
        %v1725 = vld [vmem:[%s1721 + $0x18] sm:$0xff]
        %v1726 = vld [vmem:[%s1721 + $0x20] sm:$0xff]
        %v1727 = vld [vmem:[%s1721 + $0x28] sm:$0xff]
        %v1728 = vld [vmem:[%s1721 + $0x30] sm:$0xff]
        %v1729 = vld [vmem:[%s1721 + $0x38] sm:$0xff]
        %v1730 = vld [vmem:[%s1721 + $0x40] sm:$0xff]
        %v1731 = vld [vmem:[%s1721 + $0x48] sm:$0xff]
        %v1732 = vld [vmem:[%s1721 + $0x50] sm:$0xff]
        %v1733 = vld [vmem:[%s1721 + $0x58] sm:$0xff]
        %v1734 = vld [vmem:[%s1721 + $0x60] sm:$0xff]
        %v1735 = vld [vmem:[%s1721 + $0x68] sm:$0xff]
        %v1736 = vld [vmem:[%s1721 + $0x70] sm:$0xff]
        %v1737 = vld [vmem:[%s1721 + $0x78] sm:$0xff]
        %v1738 = vld [vmem:[%s1721 + $0x80] sm:$0xff]
        %v1739 = vld [vmem:[%s1721 + $0x88] sm:$0xff]
        %v1740 = vld [vmem:[%s1721 + $0x90] sm:$0xff]
        %v1741 = vld [vmem:[%s1721 + $0x98] sm:$0xff]
        %v1742 = vld [vmem:[%s1721 + $0xa0] sm:$0xff]
        %v1743 = vld [vmem:[%s1721 + $0xa8] sm:$0xff]
        %v1744 = vld [vmem:[%s1721 + $0xb0] sm:$0xff]
        %v1745 = vld [vmem:[%s1721 + $0xb8] sm:$0xff]
        %v1746 = vld [vmem:[%s1721 + $0xc0] sm:$0xff]
        %v1747 = vld [vmem:[%s1721 + $0xc8] sm:$0xff]
        %v1748 = vld [vmem:[%s1721 + $0xd0] sm:$0xff]
        %v1749 = vld [vmem:[%s1721 + $0xd8] sm:$0xff]
        %v1750 = vld [vmem:[%s1721 + $0xe0] sm:$0xff]
        %v1751 = vld [vmem:[%s1721 + $0xe8] sm:$0xff]
        %v1752 = vld [vmem:[%s1721 + $0xf0] sm:$0xff]
        %v1753 = vld [vmem:[%s1721 + $0xf8] sm:$0xff]
        %v1754 = vld [vmem:[%s1721 + $0x100] sm:$0xff]
        %v1755 = vld [vmem:[%s1721 + $0x108] sm:$0xff]
        %v1756 = vld [vmem:[%s1721 + $0x110] sm:$0xff]
        %v1757 = vld [vmem:[%s1721 + $0x118] sm:$0xff]
        %v1758 = vld [vmem:[%s1721 + $0x120] sm:$0xff]
        %v1759 = vld [vmem:[%s1721 + $0x128] sm:$0xff]
        %v1760 = vld [vmem:[%s1721 + $0x130] sm:$0xff]
        %v1761 = vld [vmem:[%s1721 + $0x138] sm:$0xff]
        %v1762 = vld [vmem:[%s1721 + $0x140] sm:$0xff]
        %v1763 = vld [vmem:[%s1721 + $0x148] sm:$0xff]
        %v1764 = vld [vmem:[%s1721 + $0x150] sm:$0xff]
        %v1765 = vld [vmem:[%s1721 + $0x158] sm:$0xff]
        %v1766 = vld [vmem:[%s1721 + $0x160] sm:$0xff]
        %v1767 = vld [vmem:[%s1721 + $0x168] sm:$0xff]
        %v1768 = vld [vmem:[%s1721 + $0x170] sm:$0xff]
        %v1769 = vld [vmem:[%s1721 + $0x178] sm:$0xff]
        %v1770 = vld [vmem:[%s1721 + $0x180] sm:$0xff]
        %v1771 = vld [vmem:[%s1721 + $0x188] sm:$0xff]
        %v1772 = vld [vmem:[%s1721 + $0x190] sm:$0xff]
        %v1773 = vld [vmem:[%s1721 + $0x198] sm:$0xff]
        %v1774 = vld [vmem:[%s1721 + $0x1a0] sm:$0xff]
        %v1775 = vld [vmem:[%s1721 + $0x1a8] sm:$0xff]
        %v1776 = vld [vmem:[%s1721 + $0x1b0] sm:$0xff]
        %v1777 = vld [vmem:[%s1721 + $0x1b8] sm:$0xff]
        %v1778 = vld [vmem:[%s1721 + $0x1c0] sm:$0xff]
        %v1779 = vld [vmem:[%s1721 + $0x1c8] sm:$0xff]
        %v1780 = vld [vmem:[%s1721 + $0x1d0] sm:$0xff]
        %v1781 = vld [vmem:[%s1721 + $0x1d8] sm:$0xff]
        %v1782 = vld [vmem:[%s1721 + $0x1e0] sm:$0xff]
        %v1783 = vld [vmem:[%s1721 + $0x1e8] sm:$0xff]
        %v1784 = vld [vmem:[%s1721 + $0x1f0] sm:$0xff]
        %v1785 = vld [vmem:[%s1721 + $0x1f8] sm:$0xff]
        %p1786 = scmp.lt.s32.totalorder %s30, 0
        %s1787 = ssub.s32 0, %s30
        %s1788 = scalar_select %p1786, %s1787, %s30
        %s1789 = sand.u32 %s1788, 1
        %s1790 = ssub.s32 0, %s1789
        %s1791 = scalar_select %p1786, %s1790, %s1789
        %p1792 = scmp.ne.s32.totalorder %s1791, 0
        %p1793 = scmp.lt.s32.totalorder %s1791, 0
        %p1794 = pnand %p1793, %p1792
        %p1795 = pneg %p1794
        %s1796 = sadd.s32 %s1791, 2
        %s1797 = scalar_select %p1795, %s1796, %s1791
        %s1798 = smul.u32 %s1797, 1024
        %s1799 = smul.u32 %s32, 512
        %s1800 = sadd.s32 %s1798, %s1799
        %s1801 = sshra.s32 %s1800, 3
        %s1802 = sand.u32 %s1800, 7
        %s1803 = smul.addr %s1801, 4
        %s1804 = scalar_lea.vmem [#allocation2], %s1803
        %v1805 = vld [vmem:[%s1804] sm:$0xf]
        %v1806 = vld [vmem:[%s1804 + $0x4] sm:$0xf]
        %v1807 = vld [vmem:[%s1804 + $0x8] sm:$0xf]
        %v1808 = vld [vmem:[%s1804 + $0xc] sm:$0xf]
        %v1809 = vld [vmem:[%s1804 + $0x10] sm:$0xf]
        %v1810 = vld [vmem:[%s1804 + $0x14] sm:$0xf]
        %v1811 = vld [vmem:[%s1804 + $0x18] sm:$0xf]
        %v1812 = vld [vmem:[%s1804 + $0x1c] sm:$0xf]
        %v1813 = vld [vmem:[%s1804 + $0x20] sm:$0xf]
        %v1814 = vld [vmem:[%s1804 + $0x24] sm:$0xf]
        %v1815 = vld [vmem:[%s1804 + $0x28] sm:$0xf]
        %v1816 = vld [vmem:[%s1804 + $0x2c] sm:$0xf]
        %v1817 = vld [vmem:[%s1804 + $0x30] sm:$0xf]
        %v1818 = vld [vmem:[%s1804 + $0x34] sm:$0xf]
        %v1819 = vld [vmem:[%s1804 + $0x38] sm:$0xf]
        %v1820 = vld [vmem:[%s1804 + $0x3c] sm:$0xf]
        %v1821 = vld [vmem:[%s1804 + $0x40] sm:$0xf]
        %v1822 = vld [vmem:[%s1804 + $0x44] sm:$0xf]
        %v1823 = vld [vmem:[%s1804 + $0x48] sm:$0xf]
        %v1824 = vld [vmem:[%s1804 + $0x4c] sm:$0xf]
        %v1825 = vld [vmem:[%s1804 + $0x50] sm:$0xf]
        %v1826 = vld [vmem:[%s1804 + $0x54] sm:$0xf]
        %v1827 = vld [vmem:[%s1804 + $0x58] sm:$0xf]
        %v1828 = vld [vmem:[%s1804 + $0x5c] sm:$0xf]
        %v1829 = vld [vmem:[%s1804 + $0x60] sm:$0xf]
        %v1830 = vld [vmem:[%s1804 + $0x64] sm:$0xf]
        %v1831 = vld [vmem:[%s1804 + $0x68] sm:$0xf]
        %v1832 = vld [vmem:[%s1804 + $0x6c] sm:$0xf]
        %v1833 = vld [vmem:[%s1804 + $0x70] sm:$0xf]
        %v1834 = vld [vmem:[%s1804 + $0x74] sm:$0xf]
        %v1835 = vld [vmem:[%s1804 + $0x78] sm:$0xf]
        %v1836 = vld [vmem:[%s1804 + $0x7c] sm:$0xf]
        %v1837 = vld [vmem:[%s1804 + $0x80] sm:$0xf]
        %v1838 = vld [vmem:[%s1804 + $0x84] sm:$0xf]
        %v1839 = vld [vmem:[%s1804 + $0x88] sm:$0xf]
        %v1840 = vld [vmem:[%s1804 + $0x8c] sm:$0xf]
        %v1841 = vld [vmem:[%s1804 + $0x90] sm:$0xf]
        %v1842 = vld [vmem:[%s1804 + $0x94] sm:$0xf]
        %v1843 = vld [vmem:[%s1804 + $0x98] sm:$0xf]
        %v1844 = vld [vmem:[%s1804 + $0x9c] sm:$0xf]
        %v1845 = vld [vmem:[%s1804 + $0xa0] sm:$0xf]
        %v1846 = vld [vmem:[%s1804 + $0xa4] sm:$0xf]
        %v1847 = vld [vmem:[%s1804 + $0xa8] sm:$0xf]
        %v1848 = vld [vmem:[%s1804 + $0xac] sm:$0xf]
        %v1849 = vld [vmem:[%s1804 + $0xb0] sm:$0xf]
        %v1850 = vld [vmem:[%s1804 + $0xb4] sm:$0xf]
        %v1851 = vld [vmem:[%s1804 + $0xb8] sm:$0xf]
        %v1852 = vld [vmem:[%s1804 + $0xbc] sm:$0xf]
        %v1853 = vld [vmem:[%s1804 + $0xc0] sm:$0xf]
        %v1854 = vld [vmem:[%s1804 + $0xc4] sm:$0xf]
        %v1855 = vld [vmem:[%s1804 + $0xc8] sm:$0xf]
        %v1856 = vld [vmem:[%s1804 + $0xcc] sm:$0xf]
        %v1857 = vld [vmem:[%s1804 + $0xd0] sm:$0xf]
        %v1858 = vld [vmem:[%s1804 + $0xd4] sm:$0xf]
        %v1859 = vld [vmem:[%s1804 + $0xd8] sm:$0xf]
        %v1860 = vld [vmem:[%s1804 + $0xdc] sm:$0xf]
        %v1861 = vld [vmem:[%s1804 + $0xe0] sm:$0xf]
        %v1862 = vld [vmem:[%s1804 + $0xe4] sm:$0xf]
        %v1863 = vld [vmem:[%s1804 + $0xe8] sm:$0xf]
        %v1864 = vld [vmem:[%s1804 + $0xec] sm:$0xf]
        %v1865 = vld [vmem:[%s1804 + $0xf0] sm:$0xf]
        %v1866 = vld [vmem:[%s1804 + $0xf4] sm:$0xf]
        %v1867 = vld [vmem:[%s1804 + $0xf8] sm:$0xf]
        %v1868 = vld [vmem:[%s1804 + $0xfc] sm:$0xf]
        %v1869 = vld [vmem:[#allocation4] sm:$0xff]
        %v1870 = vld [vmem:[#allocation4 + $0x8] sm:$0xff]
        %v1871 = vld [vmem:[#allocation4 + $0x10] sm:$0xff]
        %v1872 = vld [vmem:[#allocation4 + $0x18] sm:$0xff]
        %v1873 = vld [vmem:[#allocation4 + $0x20] sm:$0xff]
        %v1874 = vld [vmem:[#allocation4 + $0x28] sm:$0xff]
        %v1875 = vld [vmem:[#allocation4 + $0x30] sm:$0xff]
        %v1876 = vld [vmem:[#allocation4 + $0x38] sm:$0xff]
        %v1877 = vld [vmem:[#allocation4 + $0x40] sm:$0xff]
        %v1878 = vld [vmem:[#allocation4 + $0x48] sm:$0xff]
        %v1879 = vld [vmem:[#allocation4 + $0x50] sm:$0xff]
        %v1880 = vld [vmem:[#allocation4 + $0x58] sm:$0xff]
        %v1881 = vld [vmem:[#allocation4 + $0x60] sm:$0xff]
        %v1882 = vld [vmem:[#allocation4 + $0x68] sm:$0xff]
        %v1883 = vld [vmem:[#allocation4 + $0x70] sm:$0xff]
        %v1884 = vld [vmem:[#allocation4 + $0x78] sm:$0xff]
        %v1885 = vld [vmem:[#allocation4 + $0x80] sm:$0xff]
        %v1886 = vld [vmem:[#allocation4 + $0x88] sm:$0xff]
        %v1887 = vld [vmem:[#allocation4 + $0x90] sm:$0xff]
        %v1888 = vld [vmem:[#allocation4 + $0x98] sm:$0xff]
        %v1889 = vld [vmem:[#allocation4 + $0xa0] sm:$0xff]
        %v1890 = vld [vmem:[#allocation4 + $0xa8] sm:$0xff]
        %v1891 = vld [vmem:[#allocation4 + $0xb0] sm:$0xff]
        %v1892 = vld [vmem:[#allocation4 + $0xb8] sm:$0xff]
        %v1893 = vld [vmem:[#allocation4 + $0xc0] sm:$0xff]
        %v1894 = vld [vmem:[#allocation4 + $0xc8] sm:$0xff]
        %v1895 = vld [vmem:[#allocation4 + $0xd0] sm:$0xff]
        %v1896 = vld [vmem:[#allocation4 + $0xd8] sm:$0xff]
        %v1897 = vld [vmem:[#allocation4 + $0xe0] sm:$0xff]
        %v1898 = vld [vmem:[#allocation4 + $0xe8] sm:$0xff]
        %v1899 = vld [vmem:[#allocation4 + $0xf0] sm:$0xff]
        %v1900 = vld [vmem:[#allocation4 + $0xf8] sm:$0xff]
        %v1965 = vunpack.c.l.b16 %v1722
        %v1966 = vunpack.c.h.b16 %v1722
        %v1967 = vunpack.c.l.b16 %v1723
        %v1968 = vunpack.c.h.b16 %v1723
        %v1969 = vunpack.c.l.b16 %v1724
        %v1970 = vunpack.c.h.b16 %v1724
        %v1971 = vunpack.c.l.b16 %v1725
        %v1972 = vunpack.c.h.b16 %v1725
        %v1973 = vunpack.c.l.b16 %v1726
        %v1974 = vunpack.c.h.b16 %v1726
        %v1975 = vunpack.c.l.b16 %v1727
        %v1976 = vunpack.c.h.b16 %v1727
        %v1977 = vunpack.c.l.b16 %v1728
        %v1978 = vunpack.c.h.b16 %v1728
        %v1979 = vunpack.c.l.b16 %v1729
        %v1980 = vunpack.c.h.b16 %v1729
        %v1981 = vunpack.c.l.b16 %v1730
        %v1982 = vunpack.c.h.b16 %v1730
        %v1983 = vunpack.c.l.b16 %v1731
        %v1984 = vunpack.c.h.b16 %v1731
        %v1985 = vunpack.c.l.b16 %v1732
        %v1986 = vunpack.c.h.b16 %v1732
        %v1987 = vunpack.c.l.b16 %v1733
        %v1988 = vunpack.c.h.b16 %v1733
        %v1989 = vunpack.c.l.b16 %v1734
        %v1990 = vunpack.c.h.b16 %v1734
        %v1991 = vunpack.c.l.b16 %v1735
        %v1992 = vunpack.c.h.b16 %v1735
        %v1993 = vunpack.c.l.b16 %v1736
        %v1994 = vunpack.c.h.b16 %v1736
        %v1995 = vunpack.c.l.b16 %v1737
        %v1996 = vunpack.c.h.b16 %v1737
        %v1997 = vunpack.c.l.b16 %v1738
        %v1998 = vunpack.c.h.b16 %v1738
        %v1999 = vunpack.c.l.b16 %v1739
        %v2000 = vunpack.c.h.b16 %v1739
        %v2001 = vunpack.c.l.b16 %v1740
        %v2002 = vunpack.c.h.b16 %v1740
        %v2003 = vunpack.c.l.b16 %v1741
        %v2004 = vunpack.c.h.b16 %v1741
        %v2005 = vunpack.c.l.b16 %v1742
        %v2006 = vunpack.c.h.b16 %v1742
        %v2007 = vunpack.c.l.b16 %v1743
        %v2008 = vunpack.c.h.b16 %v1743
        %v2009 = vunpack.c.l.b16 %v1744
        %v2010 = vunpack.c.h.b16 %v1744
        %v2011 = vunpack.c.l.b16 %v1745
        %v2012 = vunpack.c.h.b16 %v1745
        %v2013 = vunpack.c.l.b16 %v1746
        %v2014 = vunpack.c.h.b16 %v1746
        %v2015 = vunpack.c.l.b16 %v1747
        %v2016 = vunpack.c.h.b16 %v1747
        %v2017 = vunpack.c.l.b16 %v1748
        %v2018 = vunpack.c.h.b16 %v1748
        %v2019 = vunpack.c.l.b16 %v1749
        %v2020 = vunpack.c.h.b16 %v1749
        %v2021 = vunpack.c.l.b16 %v1750
        %v2022 = vunpack.c.h.b16 %v1750
        %v2023 = vunpack.c.l.b16 %v1751
        %v2024 = vunpack.c.h.b16 %v1751
        %v2025 = vunpack.c.l.b16 %v1752
        %v2026 = vunpack.c.h.b16 %v1752
        %v2027 = vunpack.c.l.b16 %v1753
        %v2028 = vunpack.c.h.b16 %v1753
        %v2029 = vunpack.c.l.b16 %v1754
        %v2030 = vunpack.c.h.b16 %v1754
        %v2031 = vunpack.c.l.b16 %v1755
        %v2032 = vunpack.c.h.b16 %v1755
        %v2033 = vunpack.c.l.b16 %v1756
        %v2034 = vunpack.c.h.b16 %v1756
        %v2035 = vunpack.c.l.b16 %v1757
        %v2036 = vunpack.c.h.b16 %v1757
        %v2037 = vunpack.c.l.b16 %v1758
        %v2038 = vunpack.c.h.b16 %v1758
        %v2039 = vunpack.c.l.b16 %v1759
        %v2040 = vunpack.c.h.b16 %v1759
        %v2041 = vunpack.c.l.b16 %v1760
        %v2042 = vunpack.c.h.b16 %v1760
        %v2043 = vunpack.c.l.b16 %v1761
        %v2044 = vunpack.c.h.b16 %v1761
        %v2045 = vunpack.c.l.b16 %v1762
        %v2046 = vunpack.c.h.b16 %v1762
        %v2047 = vunpack.c.l.b16 %v1763
        %v2048 = vunpack.c.h.b16 %v1763
        %v2049 = vunpack.c.l.b16 %v1764
        %v2050 = vunpack.c.h.b16 %v1764
        %v2051 = vunpack.c.l.b16 %v1765
        %v2052 = vunpack.c.h.b16 %v1765
        %v2053 = vunpack.c.l.b16 %v1766
        %v2054 = vunpack.c.h.b16 %v1766
        %v2055 = vunpack.c.l.b16 %v1767
        %v2056 = vunpack.c.h.b16 %v1767
        %v2057 = vunpack.c.l.b16 %v1768
        %v2058 = vunpack.c.h.b16 %v1768
        %v2059 = vunpack.c.l.b16 %v1769
        %v2060 = vunpack.c.h.b16 %v1769
        %v2061 = vunpack.c.l.b16 %v1770
        %v2062 = vunpack.c.h.b16 %v1770
        %v2063 = vunpack.c.l.b16 %v1771
        %v2064 = vunpack.c.h.b16 %v1771
        %v2065 = vunpack.c.l.b16 %v1772
        %v2066 = vunpack.c.h.b16 %v1772
        %v2067 = vunpack.c.l.b16 %v1773
        %v2068 = vunpack.c.h.b16 %v1773
        %v2069 = vunpack.c.l.b16 %v1774
        %v2070 = vunpack.c.h.b16 %v1774
        %v2071 = vunpack.c.l.b16 %v1775
        %v2072 = vunpack.c.h.b16 %v1775
        %v2073 = vunpack.c.l.b16 %v1776
        %v2074 = vunpack.c.h.b16 %v1776
        %v2075 = vunpack.c.l.b16 %v1777
        %v2076 = vunpack.c.h.b16 %v1777
        %v2077 = vunpack.c.l.b16 %v1778
        %v2078 = vunpack.c.h.b16 %v1778
        %v2079 = vunpack.c.l.b16 %v1779
        %v2080 = vunpack.c.h.b16 %v1779
        %v2081 = vunpack.c.l.b16 %v1780
        %v2082 = vunpack.c.h.b16 %v1780
        %v2083 = vunpack.c.l.b16 %v1781
        %v2084 = vunpack.c.h.b16 %v1781
        %v2085 = vunpack.c.l.b16 %v1782
        %v2086 = vunpack.c.h.b16 %v1782
        %v2087 = vunpack.c.l.b16 %v1783
        %v2088 = vunpack.c.h.b16 %v1783
        %v2089 = vunpack.c.l.b16 %v1784
        %v2090 = vunpack.c.h.b16 %v1784
        %v2091 = vunpack.c.l.b16 %v1785
        %v2092 = vunpack.c.h.b16 %v1785
        %v2093 = vpack.c.b16 %v1969, %v1965
        %v2094 = vpack.c.b16 %v1970, %v1966
        %v2095 = vpack.c.b16 %v1971, %v1967
        %v2096 = vpack.c.b16 %v1972, %v1968
        %v2097 = vpack.c.b16 %v1977, %v1973
        %v2098 = vpack.c.b16 %v1978, %v1974
        %v2099 = vpack.c.b16 %v1979, %v1975
        %v2100 = vpack.c.b16 %v1980, %v1976
        %v2101 = vpack.c.b16 %v1985, %v1981
        %v2102 = vpack.c.b16 %v1986, %v1982
        %v2103 = vpack.c.b16 %v1987, %v1983
        %v2104 = vpack.c.b16 %v1988, %v1984
        %v2105 = vpack.c.b16 %v1993, %v1989
        %v2106 = vpack.c.b16 %v1994, %v1990
        %v2107 = vpack.c.b16 %v1995, %v1991
        %v2108 = vpack.c.b16 %v1996, %v1992
        %v2109 = vpack.c.b16 %v2001, %v1997
        %v2110 = vpack.c.b16 %v2002, %v1998
        %v2111 = vpack.c.b16 %v2003, %v1999
        %v2112 = vpack.c.b16 %v2004, %v2000
        %v2113 = vpack.c.b16 %v2009, %v2005
        %v2114 = vpack.c.b16 %v2010, %v2006
        %v2115 = vpack.c.b16 %v2011, %v2007
        %v2116 = vpack.c.b16 %v2012, %v2008
        %v2117 = vpack.c.b16 %v2017, %v2013
        %v2118 = vpack.c.b16 %v2018, %v2014
        %v2119 = vpack.c.b16 %v2019, %v2015
        %v2120 = vpack.c.b16 %v2020, %v2016
        %v2121 = vpack.c.b16 %v2025, %v2021
        %v2122 = vpack.c.b16 %v2026, %v2022
        %v2123 = vpack.c.b16 %v2027, %v2023
        %v2124 = vpack.c.b16 %v2028, %v2024
        %v2125 = vpack.c.b16 %v2033, %v2029
        %v2126 = vpack.c.b16 %v2034, %v2030
        %v2127 = vpack.c.b16 %v2035, %v2031
        %v2128 = vpack.c.b16 %v2036, %v2032
        %v2129 = vpack.c.b16 %v2041, %v2037
        %v2130 = vpack.c.b16 %v2042, %v2038
        %v2131 = vpack.c.b16 %v2043, %v2039
        %v2132 = vpack.c.b16 %v2044, %v2040
        %v2133 = vpack.c.b16 %v2049, %v2045
        %v2134 = vpack.c.b16 %v2050, %v2046
        %v2135 = vpack.c.b16 %v2051, %v2047
        %v2136 = vpack.c.b16 %v2052, %v2048
        %v2137 = vpack.c.b16 %v2057, %v2053
        %v2138 = vpack.c.b16 %v2058, %v2054
        %v2139 = vpack.c.b16 %v2059, %v2055
        %v2140 = vpack.c.b16 %v2060, %v2056
        %v2141 = vpack.c.b16 %v2065, %v2061
        %v2142 = vpack.c.b16 %v2066, %v2062
        %v2143 = vpack.c.b16 %v2067, %v2063
        %v2144 = vpack.c.b16 %v2068, %v2064
        %v2145 = vpack.c.b16 %v2073, %v2069
        %v2146 = vpack.c.b16 %v2074, %v2070
        %v2147 = vpack.c.b16 %v2075, %v2071
        %v2148 = vpack.c.b16 %v2076, %v2072
        %v2149 = vpack.c.b16 %v2081, %v2077
        %v2150 = vpack.c.b16 %v2082, %v2078
        %v2151 = vpack.c.b16 %v2083, %v2079
        %v2152 = vpack.c.b16 %v2084, %v2080
        %v2153 = vpack.c.b16 %v2089, %v2085
        %v2154 = vpack.c.b16 %v2090, %v2086
        %v2155 = vpack.c.b16 %v2091, %v2087
        %v2156 = vpack.c.b16 %v2092, %v2088
        %v2285 = vunpack.c.l.b16 %v1805
        %v2286 = vunpack.c.l.b16 %v1806
        %v2287 = vunpack.c.l.b16 %v1807
        %v2288 = vunpack.c.l.b16 %v1808
        %v2289 = vunpack.c.l.b16 %v1809
        %v2290 = vunpack.c.l.b16 %v1810
        %v2291 = vunpack.c.l.b16 %v1811
        %v2292 = vunpack.c.l.b16 %v1812
        %v2293 = vunpack.c.l.b16 %v1813
        %v2294 = vunpack.c.l.b16 %v1814
        %v2295 = vunpack.c.l.b16 %v1815
        %v2296 = vunpack.c.l.b16 %v1816
        %v2297 = vunpack.c.l.b16 %v1817
        %v2298 = vunpack.c.l.b16 %v1818
        %v2299 = vunpack.c.l.b16 %v1819
        %v2300 = vunpack.c.l.b16 %v1820
        %v2301 = vunpack.c.l.b16 %v1821
        %v2302 = vunpack.c.l.b16 %v1822
        %v2303 = vunpack.c.l.b16 %v1823
        %v2304 = vunpack.c.l.b16 %v1824
        %v2305 = vunpack.c.l.b16 %v1825
        %v2306 = vunpack.c.l.b16 %v1826
        %v2307 = vunpack.c.l.b16 %v1827
        %v2308 = vunpack.c.l.b16 %v1828
        %v2309 = vunpack.c.l.b16 %v1829
        %v2310 = vunpack.c.l.b16 %v1830
        %v2311 = vunpack.c.l.b16 %v1831
        %v2312 = vunpack.c.l.b16 %v1832
        %v2313 = vunpack.c.l.b16 %v1833
        %v2314 = vunpack.c.l.b16 %v1834
        %v2315 = vunpack.c.l.b16 %v1835
        %v2316 = vunpack.c.l.b16 %v1836
        %v2317 = vunpack.c.l.b16 %v1837
        %v2318 = vunpack.c.l.b16 %v1838
        %v2319 = vunpack.c.l.b16 %v1839
        %v2320 = vunpack.c.l.b16 %v1840
        %v2321 = vunpack.c.l.b16 %v1841
        %v2322 = vunpack.c.l.b16 %v1842
        %v2323 = vunpack.c.l.b16 %v1843
        %v2324 = vunpack.c.l.b16 %v1844
        %v2325 = vunpack.c.l.b16 %v1845
        %v2326 = vunpack.c.l.b16 %v1846
        %v2327 = vunpack.c.l.b16 %v1847
        %v2328 = vunpack.c.l.b16 %v1848
        %v2329 = vunpack.c.l.b16 %v1849
        %v2330 = vunpack.c.l.b16 %v1850
        %v2331 = vunpack.c.l.b16 %v1851
        %v2332 = vunpack.c.l.b16 %v1852
        %v2333 = vunpack.c.l.b16 %v1853
        %v2334 = vunpack.c.l.b16 %v1854
        %v2335 = vunpack.c.l.b16 %v1855
        %v2336 = vunpack.c.l.b16 %v1856
        %v2337 = vunpack.c.l.b16 %v1857
        %v2338 = vunpack.c.l.b16 %v1858
        %v2339 = vunpack.c.l.b16 %v1859
        %v2340 = vunpack.c.l.b16 %v1860
        %v2341 = vunpack.c.l.b16 %v1861
        %v2342 = vunpack.c.l.b16 %v1862
        %v2343 = vunpack.c.l.b16 %v1863
        %v2344 = vunpack.c.l.b16 %v1864
        %v2345 = vunpack.c.l.b16 %v1865
        %v2346 = vunpack.c.l.b16 %v1866
        %v2347 = vunpack.c.l.b16 %v1867
        %v2348 = vunpack.c.l.b16 %v1868
        %v2349 = vpack.c.b16 %v2286, %v2285
        %v2350 = vpack.c.b16 %v2288, %v2287
        %v2351 = vpack.c.b16 %v2290, %v2289
        %v2352 = vpack.c.b16 %v2292, %v2291
        %v2353 = vpack.c.b16 %v2294, %v2293
        %v2354 = vpack.c.b16 %v2296, %v2295
        %v2355 = vpack.c.b16 %v2298, %v2297
        %v2356 = vpack.c.b16 %v2300, %v2299
        %v2357 = vpack.c.b16 %v2302, %v2301
        %v2358 = vpack.c.b16 %v2304, %v2303
        %v2359 = vpack.c.b16 %v2306, %v2305
        %v2360 = vpack.c.b16 %v2308, %v2307
        %v2361 = vpack.c.b16 %v2310, %v2309
        %v2362 = vpack.c.b16 %v2312, %v2311
        %v2363 = vpack.c.b16 %v2314, %v2313
        %v2364 = vpack.c.b16 %v2316, %v2315
        %v2365 = vpack.c.b16 %v2318, %v2317
        %v2366 = vpack.c.b16 %v2320, %v2319
        %v2367 = vpack.c.b16 %v2322, %v2321
        %v2368 = vpack.c.b16 %v2324, %v2323
        %v2369 = vpack.c.b16 %v2326, %v2325
        %v2370 = vpack.c.b16 %v2328, %v2327
        %v2371 = vpack.c.b16 %v2330, %v2329
        %v2372 = vpack.c.b16 %v2332, %v2331
        %v2373 = vpack.c.b16 %v2334, %v2333
        %v2374 = vpack.c.b16 %v2336, %v2335
        %v2375 = vpack.c.b16 %v2338, %v2337
        %v2376 = vpack.c.b16 %v2340, %v2339
        %v2377 = vpack.c.b16 %v2342, %v2341
        %v2378 = vpack.c.b16 %v2344, %v2343
        %v2379 = vpack.c.b16 %v2346, %v2345
        %v2380 = vpack.c.b16 %v2348, %v2347
        %2413 = vmatprep.subr.bf16.mxu0 0
        %2414 = vmatpush1.bf16.msra.mxu0 %v2356
        %2415 = vmatprep.subr.bf16.mxu0 0
        %2416 = vmatpush1.bf16.msra.mxu0 %v2355
        %2417 = vmatprep.subr.bf16.mxu0 0
        %2418 = vmatpush1.bf16.msra.mxu0 %v2354
        %2419 = vmatprep.subr.bf16.mxu0 0
        %2420 = vmatpush1.bf16.msra.mxu0 %v2353
        %2421 = vmatprep.subr.bf16.mxu0 0
        %2422 = vmatpush1.bf16.msra.mxu0 %v2352
        %2423 = vmatprep.subr.bf16.mxu0 0
        %2424 = vmatpush1.bf16.msra.mxu0 %v2351
        %2425 = vmatprep.subr.bf16.mxu0 0
        %2426 = vmatpush1.bf16.msra.mxu0 %v2350
        %2427 = vmatprep.subr.bf16.mxu0 0
        %2428 = vmatpush1.bf16.msra.mxu0 %v2349
        %2429 = vmatprep.subr.bf16.mxu0 0
        %2430 = vmatpush2.bf16.msra.mxu0 %v2364
        %2431 = vmatprep.subr.bf16.mxu0 0
        %2432 = vmatpush2.bf16.msra.mxu0 %v2363
        %2433 = vmatprep.subr.bf16.mxu0 0
        %2434 = vmatpush2.bf16.msra.mxu0 %v2362
        %2435 = vmatprep.subr.bf16.mxu0 0
        %2436 = vmatpush2.bf16.msra.mxu0 %v2361
        %2437 = vmatprep.subr.bf16.mxu0 0
        %2438 = vmatpush2.bf16.msra.mxu0 %v2360
        %2439 = vmatprep.subr.bf16.mxu0 0
        %2440 = vmatpush2.bf16.msra.mxu0 %v2359
        %2441 = vmatprep.subr.bf16.mxu0 0
        %2442 = vmatpush2.bf16.msra.mxu0 %v2358
        %2443 = vmatprep.subr.bf16.mxu0 0
        %2444 = vmatpush2.bf16.msra.mxu0 %v2357
        %2445 = vmatprep.mubr.bf16.mxu0 %v2094
        %2446 = vmatmul.mubr.bf16.gmra.mxu0 %v2093
        %v2447 = vpop.f32.mrf.mxu0
        %v2448 = vadd.f32 0.0, %v2447
        %v2449 = vpop.f32.mrf.mxu0
        %v2450 = vpop.f32.mrf.mxu0
        %v2451 = vadd.f32 0.0, %v2450
        %v2452 = vpop.f32.mrf.mxu0
        %2453 = vmatprep.mubr.bf16.mxu0 %v2098
        %2454 = vmatmul.mubr.bf16.gmra.mxu0 %v2097
        %v2455 = vpop.f32.mrf.mxu0
        %v2456 = vadd.f32 0.0, %v2455
        %v2457 = vpop.f32.mrf.mxu0
        %v2458 = vpop.f32.mrf.mxu0
        %v2459 = vadd.f32 0.0, %v2458
        %v2460 = vpop.f32.mrf.mxu0
        %2461 = vmatprep.mubr.bf16.mxu0 %v2102
        %2462 = vmatmul.mubr.bf16.gmra.mxu0 %v2101
        %v2463 = vpop.f32.mrf.mxu0
        %v2464 = vadd.f32 0.0, %v2463
        %v2465 = vpop.f32.mrf.mxu0
        %v2466 = vpop.f32.mrf.mxu0
        %v2467 = vadd.f32 0.0, %v2466
        %v2468 = vpop.f32.mrf.mxu0
        %2469 = vmatprep.mubr.bf16.mxu0 %v2106
        %2470 = vmatmul.mubr.bf16.gmra.mxu0 %v2105
        %v2471 = vpop.f32.mrf.mxu0
        %v2472 = vadd.f32 0.0, %v2471
        %v2473 = vpop.f32.mrf.mxu0
        %v2474 = vpop.f32.mrf.mxu0
        %v2475 = vadd.f32 0.0, %v2474
        %v2476 = vpop.f32.mrf.mxu0
        %2477 = vmatprep.mubr.bf16.mxu0 %v2110
        %2478 = vmatmul.mubr.bf16.gmra.mxu0 %v2109
        %v2479 = vpop.f32.mrf.mxu0
        %v2480 = vadd.f32 0.0, %v2479
        %v2481 = vpop.f32.mrf.mxu0
        %v2482 = vpop.f32.mrf.mxu0
        %v2483 = vadd.f32 0.0, %v2482
        %v2484 = vpop.f32.mrf.mxu0
        %2485 = vmatprep.mubr.bf16.mxu0 %v2114
        %2486 = vmatmul.mubr.bf16.gmra.mxu0 %v2113
        %v2487 = vpop.f32.mrf.mxu0
        %v2488 = vadd.f32 0.0, %v2487
        %v2489 = vpop.f32.mrf.mxu0
        %v2490 = vpop.f32.mrf.mxu0
        %v2491 = vadd.f32 0.0, %v2490
        %v2492 = vpop.f32.mrf.mxu0
        %2493 = vmatprep.mubr.bf16.mxu0 %v2118
        %2494 = vmatmul.mubr.bf16.gmra.mxu0 %v2117
        %v2495 = vpop.f32.mrf.mxu0
        %v2496 = vadd.f32 0.0, %v2495
        %v2497 = vpop.f32.mrf.mxu0
        %v2498 = vpop.f32.mrf.mxu0
        %v2499 = vadd.f32 0.0, %v2498
        %v2500 = vpop.f32.mrf.mxu0
        %2501 = vmatprep.mubr.bf16.mxu0 %v2122
        %2502 = vmatmul.mubr.bf16.gmra.mxu0 %v2121
        %v2503 = vpop.f32.mrf.mxu0
        %v2504 = vadd.f32 0.0, %v2503
        %v2505 = vpop.f32.mrf.mxu0
        %v2506 = vpop.f32.mrf.mxu0
        %v2507 = vadd.f32 0.0, %v2506
        %v2508 = vpop.f32.mrf.mxu0
        %2509 = vmatprep.mubr.bf16.mxu0 %v2126
        %2510 = vmatmul.mubr.bf16.gmra.mxu0 %v2125
        %v2511 = vpop.f32.mrf.mxu0
        %v2512 = vadd.f32 0.0, %v2511
        %v2513 = vpop.f32.mrf.mxu0
        %v2514 = vpop.f32.mrf.mxu0
        %v2515 = vadd.f32 0.0, %v2514
        %v2516 = vpop.f32.mrf.mxu0
        %2517 = vmatprep.mubr.bf16.mxu0 %v2130
        %2518 = vmatmul.mubr.bf16.gmra.mxu0 %v2129
        %v2519 = vpop.f32.mrf.mxu0
        %v2520 = vadd.f32 0.0, %v2519
        %v2521 = vpop.f32.mrf.mxu0
        %v2522 = vpop.f32.mrf.mxu0
        %v2523 = vadd.f32 0.0, %v2522
        %v2524 = vpop.f32.mrf.mxu0
        %2525 = vmatprep.mubr.bf16.mxu0 %v2134
        %2526 = vmatmul.mubr.bf16.gmra.mxu0 %v2133
        %v2527 = vpop.f32.mrf.mxu0
        %v2528 = vadd.f32 0.0, %v2527
        %v2529 = vpop.f32.mrf.mxu0
        %v2530 = vpop.f32.mrf.mxu0
        %v2531 = vadd.f32 0.0, %v2530
        %v2532 = vpop.f32.mrf.mxu0
        %2533 = vmatprep.mubr.bf16.mxu0 %v2138
        %2534 = vmatmul.mubr.bf16.gmra.mxu0 %v2137
        %v2535 = vpop.f32.mrf.mxu0
        %v2536 = vadd.f32 0.0, %v2535
        %v2537 = vpop.f32.mrf.mxu0
        %v2538 = vpop.f32.mrf.mxu0
        %v2539 = vadd.f32 0.0, %v2538
        %v2540 = vpop.f32.mrf.mxu0
        %2541 = vmatprep.mubr.bf16.mxu0 %v2142
        %2542 = vmatmul.mubr.bf16.gmra.mxu0 %v2141
        %v2543 = vpop.f32.mrf.mxu0
        %v2544 = vadd.f32 0.0, %v2543
        %v2545 = vpop.f32.mrf.mxu0
        %v2546 = vpop.f32.mrf.mxu0
        %v2547 = vadd.f32 0.0, %v2546
        %v2548 = vpop.f32.mrf.mxu0
        %2549 = vmatprep.mubr.bf16.mxu0 %v2146
        %2550 = vmatmul.mubr.bf16.gmra.mxu0 %v2145
        %v2551 = vpop.f32.mrf.mxu0
        %v2552 = vadd.f32 0.0, %v2551
        %v2553 = vpop.f32.mrf.mxu0
        %v2554 = vpop.f32.mrf.mxu0
        %v2555 = vadd.f32 0.0, %v2554
        %v2556 = vpop.f32.mrf.mxu0
        %2557 = vmatprep.mubr.bf16.mxu0 %v2150
        %2558 = vmatmul.mubr.bf16.gmra.mxu0 %v2149
        %v2559 = vpop.f32.mrf.mxu0
        %v2560 = vadd.f32 0.0, %v2559
        %v2561 = vpop.f32.mrf.mxu0
        %v2562 = vpop.f32.mrf.mxu0
        %v2563 = vadd.f32 0.0, %v2562
        %v2564 = vpop.f32.mrf.mxu0
        %2565 = vmatprep.mubr.bf16.mxu0 %v2154
        %2566 = vmatmul.mubr.bf16.gmra.mxu0 %v2153
        %v2567 = vpop.f32.mrf.mxu0
        %v2568 = vadd.f32 0.0, %v2567
        %v2569 = vpop.f32.mrf.mxu0
        %v2570 = vpop.f32.mrf.mxu0
        %v2571 = vadd.f32 0.0, %v2570
        %v2572 = vpop.f32.mrf.mxu0
        %2573 = vdwg.mxu0
        %2574 = vmatprep.subr.bf16.mxu0 0
        %2575 = vmatpush1.bf16.msra.mxu0 %v2372
        %2576 = vmatprep.subr.bf16.mxu0 0
        %2577 = vmatpush1.bf16.msra.mxu0 %v2371
        %2578 = vmatprep.subr.bf16.mxu0 0
        %2579 = vmatpush1.bf16.msra.mxu0 %v2370
        %2580 = vmatprep.subr.bf16.mxu0 0
        %2581 = vmatpush1.bf16.msra.mxu0 %v2369
        %2582 = vmatprep.subr.bf16.mxu0 0
        %2583 = vmatpush1.bf16.msra.mxu0 %v2368
        %2584 = vmatprep.subr.bf16.mxu0 0
        %2585 = vmatpush1.bf16.msra.mxu0 %v2367
        %2586 = vmatprep.subr.bf16.mxu0 0
        %2587 = vmatpush1.bf16.msra.mxu0 %v2366
        %2588 = vmatprep.subr.bf16.mxu0 0
        %2589 = vmatpush1.bf16.msra.mxu0 %v2365
        %2590 = vmatprep.subr.bf16.mxu0 0
        %2591 = vmatpush2.bf16.msra.mxu0 %v2380
        %2592 = vmatprep.subr.bf16.mxu0 0
        %2593 = vmatpush2.bf16.msra.mxu0 %v2379
        %2594 = vmatprep.subr.bf16.mxu0 0
        %2595 = vmatpush2.bf16.msra.mxu0 %v2378
        %2596 = vmatprep.subr.bf16.mxu0 0
        %2597 = vmatpush2.bf16.msra.mxu0 %v2377
        %2598 = vmatprep.subr.bf16.mxu0 0
        %2599 = vmatpush2.bf16.msra.mxu0 %v2376
        %2600 = vmatprep.subr.bf16.mxu0 0
        %2601 = vmatpush2.bf16.msra.mxu0 %v2375
        %2602 = vmatprep.subr.bf16.mxu0 0
        %2603 = vmatpush2.bf16.msra.mxu0 %v2374
        %2604 = vmatprep.subr.bf16.mxu0 0
        %2605 = vmatpush2.bf16.msra.mxu0 %v2373
        %2606 = vmatprep.mubr.bf16.mxu0 %v2096
        %2607 = vmatmul.mubr.bf16.gmra.mxu0 %v2095
        %v2608 = vpop.f32.mrf.mxu0
        %v2609 = vadd.f32 %v2448, %v2608
        %v2610 = vpop.f32.mrf.mxu0
        %v2611 = vpop.f32.mrf.mxu0
        %v2612 = vadd.f32 %v2451, %v2611
        %v2613 = vpop.f32.mrf.mxu0
        %2614 = vmatprep.mubr.bf16.mxu0 %v2100
        %2615 = vmatmul.mubr.bf16.gmra.mxu0 %v2099
        %v2616 = vpop.f32.mrf.mxu0
        %v2617 = vadd.f32 %v2456, %v2616
        %v2618 = vpop.f32.mrf.mxu0
        %v2619 = vpop.f32.mrf.mxu0
        %v2620 = vadd.f32 %v2459, %v2619
        %v2621 = vpop.f32.mrf.mxu0
        %2622 = vmatprep.mubr.bf16.mxu0 %v2104
        %2623 = vmatmul.mubr.bf16.gmra.mxu0 %v2103
        %v2624 = vpop.f32.mrf.mxu0
        %v2625 = vadd.f32 %v2464, %v2624
        %v2626 = vpop.f32.mrf.mxu0
        %v2627 = vpop.f32.mrf.mxu0
        %v2628 = vadd.f32 %v2467, %v2627
        %v2629 = vpop.f32.mrf.mxu0
        %2630 = vmatprep.mubr.bf16.mxu0 %v2108
        %2631 = vmatmul.mubr.bf16.gmra.mxu0 %v2107
        %v2632 = vpop.f32.mrf.mxu0
        %v2633 = vadd.f32 %v2472, %v2632
        %v2634 = vpop.f32.mrf.mxu0
        %v2635 = vpop.f32.mrf.mxu0
        %v2636 = vadd.f32 %v2475, %v2635
        %v2637 = vpop.f32.mrf.mxu0
        %2638 = vmatprep.mubr.bf16.mxu0 %v2112
        %2639 = vmatmul.mubr.bf16.gmra.mxu0 %v2111
        %v2640 = vpop.f32.mrf.mxu0
        %v2641 = vadd.f32 %v2480, %v2640
        %v2642 = vpop.f32.mrf.mxu0
        %v2643 = vpop.f32.mrf.mxu0
        %v2644 = vadd.f32 %v2483, %v2643
        %v2645 = vpop.f32.mrf.mxu0
        %2646 = vmatprep.mubr.bf16.mxu0 %v2116
        %2647 = vmatmul.mubr.bf16.gmra.mxu0 %v2115
        %v2648 = vpop.f32.mrf.mxu0
        %v2649 = vadd.f32 %v2488, %v2648
        %v2650 = vpop.f32.mrf.mxu0
        %v2651 = vpop.f32.mrf.mxu0
        %v2652 = vadd.f32 %v2491, %v2651
        %v2653 = vpop.f32.mrf.mxu0
        %2654 = vmatprep.mubr.bf16.mxu0 %v2120
        %2655 = vmatmul.mubr.bf16.gmra.mxu0 %v2119
        %v2656 = vpop.f32.mrf.mxu0
        %v2657 = vadd.f32 %v2496, %v2656
        %v2658 = vpop.f32.mrf.mxu0
        %v2659 = vpop.f32.mrf.mxu0
        %v2660 = vadd.f32 %v2499, %v2659
        %v2661 = vpop.f32.mrf.mxu0
        %2662 = vmatprep.mubr.bf16.mxu0 %v2124
        %2663 = vmatmul.mubr.bf16.gmra.mxu0 %v2123
        %v2664 = vpop.f32.mrf.mxu0
        %v2665 = vadd.f32 %v2504, %v2664
        %v2666 = vpop.f32.mrf.mxu0
        %v2667 = vpop.f32.mrf.mxu0
        %v2668 = vadd.f32 %v2507, %v2667
        %v2669 = vpop.f32.mrf.mxu0
        %2670 = vmatprep.mubr.bf16.mxu0 %v2128
        %2671 = vmatmul.mubr.bf16.gmra.mxu0 %v2127
        %v2672 = vpop.f32.mrf.mxu0
        %v2673 = vadd.f32 %v2512, %v2672
        %v2674 = vpop.f32.mrf.mxu0
        %v2675 = vpop.f32.mrf.mxu0
        %v2676 = vadd.f32 %v2515, %v2675
        %v2677 = vpop.f32.mrf.mxu0
        %2678 = vmatprep.mubr.bf16.mxu0 %v2132
        %2679 = vmatmul.mubr.bf16.gmra.mxu0 %v2131
        %v2680 = vpop.f32.mrf.mxu0
        %v2681 = vadd.f32 %v2520, %v2680
        %v2682 = vpop.f32.mrf.mxu0
        %v2683 = vpop.f32.mrf.mxu0
        %v2684 = vadd.f32 %v2523, %v2683
        %v2685 = vpop.f32.mrf.mxu0
        %2686 = vmatprep.mubr.bf16.mxu0 %v2136
        %2687 = vmatmul.mubr.bf16.gmra.mxu0 %v2135
        %v2688 = vpop.f32.mrf.mxu0
        %v2689 = vadd.f32 %v2528, %v2688
        %v2690 = vpop.f32.mrf.mxu0
        %v2691 = vpop.f32.mrf.mxu0
        %v2692 = vadd.f32 %v2531, %v2691
        %v2693 = vpop.f32.mrf.mxu0
        %2694 = vmatprep.mubr.bf16.mxu0 %v2140
        %2695 = vmatmul.mubr.bf16.gmra.mxu0 %v2139
        %v2696 = vpop.f32.mrf.mxu0
        %v2697 = vadd.f32 %v2536, %v2696
        %v2698 = vpop.f32.mrf.mxu0
        %v2699 = vpop.f32.mrf.mxu0
        %v2700 = vadd.f32 %v2539, %v2699
        %v2701 = vpop.f32.mrf.mxu0
        %2702 = vmatprep.mubr.bf16.mxu0 %v2144
        %2703 = vmatmul.mubr.bf16.gmra.mxu0 %v2143
        %v2704 = vpop.f32.mrf.mxu0
        %v2705 = vadd.f32 %v2544, %v2704
        %v2706 = vpop.f32.mrf.mxu0
        %v2707 = vpop.f32.mrf.mxu0
        %v2708 = vadd.f32 %v2547, %v2707
        %v2709 = vpop.f32.mrf.mxu0
        %2710 = vmatprep.mubr.bf16.mxu0 %v2148
        %2711 = vmatmul.mubr.bf16.gmra.mxu0 %v2147
        %v2712 = vpop.f32.mrf.mxu0
        %v2713 = vadd.f32 %v2552, %v2712
        %v2714 = vpop.f32.mrf.mxu0
        %v2715 = vpop.f32.mrf.mxu0
        %v2716 = vadd.f32 %v2555, %v2715
        %v2717 = vpop.f32.mrf.mxu0
        %2718 = vmatprep.mubr.bf16.mxu0 %v2152
        %2719 = vmatmul.mubr.bf16.gmra.mxu0 %v2151
        %v2720 = vpop.f32.mrf.mxu0
        %v2721 = vadd.f32 %v2560, %v2720
        %v2722 = vpop.f32.mrf.mxu0
        %v2723 = vpop.f32.mrf.mxu0
        %v2724 = vadd.f32 %v2563, %v2723
        %v2725 = vpop.f32.mrf.mxu0
        %2726 = vmatprep.mubr.bf16.mxu0 %v2156
        %2727 = vmatmul.mubr.bf16.gmra.mxu0 %v2155
        %v2728 = vpop.f32.mrf.mxu0
        %v2729 = vadd.f32 %v2568, %v2728
        %v2730 = vpop.f32.mrf.mxu0
        %v2731 = vpop.f32.mrf.mxu0
        %v2732 = vadd.f32 %v2571, %v2731
        %v2733 = vpop.f32.mrf.mxu0
        %2734 = vdwg.mxu0
        %v2735 = vadd.f32 %v1869, %v2609
        %v2736 = vadd.f32 %v1870, %v2612
        %v2737 = vadd.f32 %v1871, %v2617
        %v2738 = vadd.f32 %v1872, %v2620
        %v2739 = vadd.f32 %v1873, %v2625
        %v2740 = vadd.f32 %v1874, %v2628
        %v2741 = vadd.f32 %v1875, %v2633
        %v2742 = vadd.f32 %v1876, %v2636
        %v2743 = vadd.f32 %v1877, %v2641
        %v2744 = vadd.f32 %v1878, %v2644
        %v2745 = vadd.f32 %v1879, %v2649
        %v2746 = vadd.f32 %v1880, %v2652
        %v2747 = vadd.f32 %v1881, %v2657
        %v2748 = vadd.f32 %v1882, %v2660
        %v2749 = vadd.f32 %v1883, %v2665
        %v2750 = vadd.f32 %v1884, %v2668
        %v2751 = vadd.f32 %v1885, %v2673
        %v2752 = vadd.f32 %v1886, %v2676
        %v2753 = vadd.f32 %v1887, %v2681
        %v2754 = vadd.f32 %v1888, %v2684
        %v2755 = vadd.f32 %v1889, %v2689
        %v2756 = vadd.f32 %v1890, %v2692
        %v2757 = vadd.f32 %v1891, %v2697
        %v2758 = vadd.f32 %v1892, %v2700
        %v2759 = vadd.f32 %v1893, %v2705
        %v2760 = vadd.f32 %v1894, %v2708
        %v2761 = vadd.f32 %v1895, %v2713
        %v2762 = vadd.f32 %v1896, %v2716
        %v2763 = vadd.f32 %v1897, %v2721
        %v2764 = vadd.f32 %v1898, %v2724
        %v2765 = vadd.f32 %v1899, %v2729
        %v2766 = vadd.f32 %v1900, %v2732
        %2767 = vst [vmem:[#allocation4] sm:$0xff] %v2735
        %2768 = vst [vmem:[#allocation4 + $0x8] sm:$0xff] %v2736
        %2769 = vst [vmem:[#allocation4 + $0x10] sm:$0xff] %v2737
        %2770 = vst [vmem:[#allocation4 + $0x18] sm:$0xff] %v2738
        %2771 = vst [vmem:[#allocation4 + $0x20] sm:$0xff] %v2739
        %2772 = vst [vmem:[#allocation4 + $0x28] sm:$0xff] %v2740
        %2773 = vst [vmem:[#allocation4 + $0x30] sm:$0xff] %v2741
        %2774 = vst [vmem:[#allocation4 + $0x38] sm:$0xff] %v2742
        %2775 = vst [vmem:[#allocation4 + $0x40] sm:$0xff] %v2743
        %2776 = vst [vmem:[#allocation4 + $0x48] sm:$0xff] %v2744
        %2777 = vst [vmem:[#allocation4 + $0x50] sm:$0xff] %v2745
        %2778 = vst [vmem:[#allocation4 + $0x58] sm:$0xff] %v2746
        %2779 = vst [vmem:[#allocation4 + $0x60] sm:$0xff] %v2747
        %2780 = vst [vmem:[#allocation4 + $0x68] sm:$0xff] %v2748
        %2781 = vst [vmem:[#allocation4 + $0x70] sm:$0xff] %v2749
        %2782 = vst [vmem:[#allocation4 + $0x78] sm:$0xff] %v2750
        %2783 = vst [vmem:[#allocation4 + $0x80] sm:$0xff] %v2751
        %2784 = vst [vmem:[#allocation4 + $0x88] sm:$0xff] %v2752
        %2785 = vst [vmem:[#allocation4 + $0x90] sm:$0xff] %v2753
        %2786 = vst [vmem:[#allocation4 + $0x98] sm:$0xff] %v2754
        %2787 = vst [vmem:[#allocation4 + $0xa0] sm:$0xff] %v2755
        %2788 = vst [vmem:[#allocation4 + $0xa8] sm:$0xff] %v2756
        %2789 = vst [vmem:[#allocation4 + $0xb0] sm:$0xff] %v2757
        %2790 = vst [vmem:[#allocation4 + $0xb8] sm:$0xff] %v2758
        %2791 = vst [vmem:[#allocation4 + $0xc0] sm:$0xff] %v2759
        %2792 = vst [vmem:[#allocation4 + $0xc8] sm:$0xff] %v2760
        %2793 = vst [vmem:[#allocation4 + $0xd0] sm:$0xff] %v2761
        %2794 = vst [vmem:[#allocation4 + $0xd8] sm:$0xff] %v2762
        %2795 = vst [vmem:[#allocation4 + $0xe0] sm:$0xff] %v2763
        %2796 = vst [vmem:[#allocation4 + $0xe8] sm:$0xff] %v2764
        %2797 = vst [vmem:[#allocation4 + $0xf0] sm:$0xff] %v2765
        %2798 = vst [vmem:[#allocation4 + $0xf8] sm:$0xff] %v2766
        %p2799 = scmp.eq.s32.totalorder %s32, 1
        %s2800 = smul.u32 %s31, 256
        // Predicated region
        $region81: #{tpu_custom_call.1} parent=47 // pred_check
          %p2801 = pneg %p2799
        $region82: #{tpu_custom_call.1} parent=47 // pred_check_branch
          %2803 = sbr.rel (%p2801) target = $region84
        $region83: #{tpu_custom_call.1} parent=47 // pred_region
          %s2804 = scalar_lea.vmem [#allocation3], %s2800
          %v2805 = vld [vmem:[%s2804] sm:$0xff]
          %v2806 = vld [vmem:[%s2804 + $0x8] sm:$0xff]
          %v2807 = vld [vmem:[%s2804 + $0x10] sm:$0xff]
          %v2808 = vld [vmem:[%s2804 + $0x18] sm:$0xff]
          %v2809 = vld [vmem:[%s2804 + $0x20] sm:$0xff]
          %v2810 = vld [vmem:[%s2804 + $0x28] sm:$0xff]
          %v2811 = vld [vmem:[%s2804 + $0x30] sm:$0xff]
          %v2812 = vld [vmem:[%s2804 + $0x38] sm:$0xff]
          %v2813 = vld [vmem:[%s2804 + $0x40] sm:$0xff]
          %v2814 = vld [vmem:[%s2804 + $0x48] sm:$0xff]
          %v2815 = vld [vmem:[%s2804 + $0x50] sm:$0xff]
          %v2816 = vld [vmem:[%s2804 + $0x58] sm:$0xff]
          %v2817 = vld [vmem:[%s2804 + $0x60] sm:$0xff]
          %v2818 = vld [vmem:[%s2804 + $0x68] sm:$0xff]
          %v2819 = vld [vmem:[%s2804 + $0x70] sm:$0xff]
          %v2820 = vld [vmem:[%s2804 + $0x78] sm:$0xff]
          %v2821 = vld [vmem:[%s2804 + $0x80] sm:$0xff]
          %v2822 = vld [vmem:[%s2804 + $0x88] sm:$0xff]
          %v2823 = vld [vmem:[%s2804 + $0x90] sm:$0xff]
          %v2824 = vld [vmem:[%s2804 + $0x98] sm:$0xff]
          %v2825 = vld [vmem:[%s2804 + $0xa0] sm:$0xff]
          %v2826 = vld [vmem:[%s2804 + $0xa8] sm:$0xff]
          %v2827 = vld [vmem:[%s2804 + $0xb0] sm:$0xff]
          %v2828 = vld [vmem:[%s2804 + $0xb8] sm:$0xff]
          %v2829 = vld [vmem:[%s2804 + $0xc0] sm:$0xff]
          %v2830 = vld [vmem:[%s2804 + $0xc8] sm:$0xff]
          %v2831 = vld [vmem:[%s2804 + $0xd0] sm:$0xff]
          %v2832 = vld [vmem:[%s2804 + $0xd8] sm:$0xff]
          %v2833 = vld [vmem:[%s2804 + $0xe0] sm:$0xff]
          %v2834 = vld [vmem:[%s2804 + $0xe8] sm:$0xff]
          %v2835 = vld [vmem:[%s2804 + $0xf0] sm:$0xff]
          %v2836 = vld [vmem:[%s2804 + $0xf8] sm:$0xff]
          %s2837 = sadd.s32 %s30, 1
          %s2838 = sld [smem:[#allocation15 + %s2837]]
          %v2839 = vld [vmem:[#allocation4] sm:$0xff]
          %v2840 = vld [vmem:[#allocation4 + $0x8] sm:$0xff]
          %v2841 = vld [vmem:[#allocation4 + $0x10] sm:$0xff]
          %v2842 = vld [vmem:[#allocation4 + $0x18] sm:$0xff]
          %v2843 = vld [vmem:[#allocation4 + $0x20] sm:$0xff]
          %v2844 = vld [vmem:[#allocation4 + $0x28] sm:$0xff]
          %v2845 = vld [vmem:[#allocation4 + $0x30] sm:$0xff]
          %v2846 = vld [vmem:[#allocation4 + $0x38] sm:$0xff]
          %v2847 = vld [vmem:[#allocation4 + $0x40] sm:$0xff]
          %v2848 = vld [vmem:[#allocation4 + $0x48] sm:$0xff]
          %v2849 = vld [vmem:[#allocation4 + $0x50] sm:$0xff]
          %v2850 = vld [vmem:[#allocation4 + $0x58] sm:$0xff]
          %v2851 = vld [vmem:[#allocation4 + $0x60] sm:$0xff]
          %v2852 = vld [vmem:[#allocation4 + $0x68] sm:$0xff]
          %v2853 = vld [vmem:[#allocation4 + $0x70] sm:$0xff]
          %v2854 = vld [vmem:[#allocation4 + $0x78] sm:$0xff]
          %v2855 = vld [vmem:[#allocation4 + $0x80] sm:$0xff]
          %v2856 = vld [vmem:[#allocation4 + $0x88] sm:$0xff]
          %v2857 = vld [vmem:[#allocation4 + $0x90] sm:$0xff]
          %v2858 = vld [vmem:[#allocation4 + $0x98] sm:$0xff]
          %v2859 = vld [vmem:[#allocation4 + $0xa0] sm:$0xff]
          %v2860 = vld [vmem:[#allocation4 + $0xa8] sm:$0xff]
          %v2861 = vld [vmem:[#allocation4 + $0xb0] sm:$0xff]
          %v2862 = vld [vmem:[#allocation4 + $0xb8] sm:$0xff]
          %v2863 = vld [vmem:[#allocation4 + $0xc0] sm:$0xff]
          %v2864 = vld [vmem:[#allocation4 + $0xc8] sm:$0xff]
          %v2865 = vld [vmem:[#allocation4 + $0xd0] sm:$0xff]
          %v2866 = vld [vmem:[#allocation4 + $0xd8] sm:$0xff]
          %v2867 = vld [vmem:[#allocation4 + $0xe0] sm:$0xff]
          %v2868 = vld [vmem:[#allocation4 + $0xe8] sm:$0xff]
          %v2869 = vld [vmem:[#allocation4 + $0xf0] sm:$0xff]
          %v2870 = vld [vmem:[#allocation4 + $0xf8] sm:$0xff]
          %v2871 = vstv %s2838
          %v2872 = vmul.f32 %v2871, %v2839
          %v2873 = vmul.f32 %v2871, %v2840
          %v2874 = vmul.f32 %v2871, %v2841
          %v2875 = vmul.f32 %v2871, %v2842
          %v2876 = vmul.f32 %v2871, %v2843
          %v2877 = vmul.f32 %v2871, %v2844
          %v2878 = vmul.f32 %v2871, %v2845
          %v2879 = vmul.f32 %v2871, %v2846
          %v2880 = vmul.f32 %v2871, %v2847
          %v2881 = vmul.f32 %v2871, %v2848
          %v2882 = vmul.f32 %v2871, %v2849
          %v2883 = vmul.f32 %v2871, %v2850
          %v2884 = vmul.f32 %v2871, %v2851
          %v2885 = vmul.f32 %v2871, %v2852
          %v2886 = vmul.f32 %v2871, %v2853
          %v2887 = vmul.f32 %v2871, %v2854
          %v2888 = vmul.f32 %v2871, %v2855
          %v2889 = vmul.f32 %v2871, %v2856
          %v2890 = vmul.f32 %v2871, %v2857
          %v2891 = vmul.f32 %v2871, %v2858
          %v2892 = vmul.f32 %v2871, %v2859
          %v2893 = vmul.f32 %v2871, %v2860
          %v2894 = vmul.f32 %v2871, %v2861
          %v2895 = vmul.f32 %v2871, %v2862
          %v2896 = vmul.f32 %v2871, %v2863
          %v2897 = vmul.f32 %v2871, %v2864
          %v2898 = vmul.f32 %v2871, %v2865
          %v2899 = vmul.f32 %v2871, %v2866
          %v2900 = vmul.f32 %v2871, %v2867
          %v2901 = vmul.f32 %v2871, %v2868
          %v2902 = vmul.f32 %v2871, %v2869
          %v2903 = vmul.f32 %v2871, %v2870
          %v2904 = vadd.f32 %v2805, %v2872
          %v2905 = vadd.f32 %v2806, %v2873
          %v2906 = vadd.f32 %v2807, %v2874
          %v2907 = vadd.f32 %v2808, %v2875
          %v2908 = vadd.f32 %v2809, %v2876
          %v2909 = vadd.f32 %v2810, %v2877
          %v2910 = vadd.f32 %v2811, %v2878
          %v2911 = vadd.f32 %v2812, %v2879
          %v2912 = vadd.f32 %v2813, %v2880
          %v2913 = vadd.f32 %v2814, %v2881
          %v2914 = vadd.f32 %v2815, %v2882
          %v2915 = vadd.f32 %v2816, %v2883
          %v2916 = vadd.f32 %v2817, %v2884
          %v2917 = vadd.f32 %v2818, %v2885
          %v2918 = vadd.f32 %v2819, %v2886
          %v2919 = vadd.f32 %v2820, %v2887
          %v2920 = vadd.f32 %v2821, %v2888
          %v2921 = vadd.f32 %v2822, %v2889
          %v2922 = vadd.f32 %v2823, %v2890
          %v2923 = vadd.f32 %v2824, %v2891
          %v2924 = vadd.f32 %v2825, %v2892
          %v2925 = vadd.f32 %v2826, %v2893
          %v2926 = vadd.f32 %v2827, %v2894
          %v2927 = vadd.f32 %v2828, %v2895
          %v2928 = vadd.f32 %v2829, %v2896
          %v2929 = vadd.f32 %v2830, %v2897
          %v2930 = vadd.f32 %v2831, %v2898
          %v2931 = vadd.f32 %v2832, %v2899
          %v2932 = vadd.f32 %v2833, %v2900
          %v2933 = vadd.f32 %v2834, %v2901
          %v2934 = vadd.f32 %v2835, %v2902
          %v2935 = vadd.f32 %v2836, %v2903
          %2936 = vst [vmem:[%s2804] sm:$0xff] %v2904
          %2937 = vst [vmem:[%s2804 + $0x8] sm:$0xff] %v2905
          %2938 = vst [vmem:[%s2804 + $0x10] sm:$0xff] %v2906
          %2939 = vst [vmem:[%s2804 + $0x18] sm:$0xff] %v2907
          %2940 = vst [vmem:[%s2804 + $0x20] sm:$0xff] %v2908
          %2941 = vst [vmem:[%s2804 + $0x28] sm:$0xff] %v2909
          %2942 = vst [vmem:[%s2804 + $0x30] sm:$0xff] %v2910
          %2943 = vst [vmem:[%s2804 + $0x38] sm:$0xff] %v2911
          %2944 = vst [vmem:[%s2804 + $0x40] sm:$0xff] %v2912
          %2945 = vst [vmem:[%s2804 + $0x48] sm:$0xff] %v2913
          %2946 = vst [vmem:[%s2804 + $0x50] sm:$0xff] %v2914
          %2947 = vst [vmem:[%s2804 + $0x58] sm:$0xff] %v2915
          %2948 = vst [vmem:[%s2804 + $0x60] sm:$0xff] %v2916
          %2949 = vst [vmem:[%s2804 + $0x68] sm:$0xff] %v2917
          %2950 = vst [vmem:[%s2804 + $0x70] sm:$0xff] %v2918
          %2951 = vst [vmem:[%s2804 + $0x78] sm:$0xff] %v2919
          %2952 = vst [vmem:[%s2804 + $0x80] sm:$0xff] %v2920
          %2953 = vst [vmem:[%s2804 + $0x88] sm:$0xff] %v2921
          %2954 = vst [vmem:[%s2804 + $0x90] sm:$0xff] %v2922
          %2955 = vst [vmem:[%s2804 + $0x98] sm:$0xff] %v2923
          %2956 = vst [vmem:[%s2804 + $0xa0] sm:$0xff] %v2924
          %2957 = vst [vmem:[%s2804 + $0xa8] sm:$0xff] %v2925
          %2958 = vst [vmem:[%s2804 + $0xb0] sm:$0xff] %v2926
          %2959 = vst [vmem:[%s2804 + $0xb8] sm:$0xff] %v2927
          %2960 = vst [vmem:[%s2804 + $0xc0] sm:$0xff] %v2928
          %2961 = vst [vmem:[%s2804 + $0xc8] sm:$0xff] %v2929
          %2962 = vst [vmem:[%s2804 + $0xd0] sm:$0xff] %v2930
          %2963 = vst [vmem:[%s2804 + $0xd8] sm:$0xff] %v2931
          %2964 = vst [vmem:[%s2804 + $0xe0] sm:$0xff] %v2932
          %2965 = vst [vmem:[%s2804 + $0xe8] sm:$0xff] %v2933
          %2966 = vst [vmem:[%s2804 + $0xf0] sm:$0xff] %v2934
          %2967 = vst [vmem:[%s2804 + $0xf8] sm:$0xff] %v2935
        $region84: #{tpu_custom_call.1} parent=47 // pred_fallthru
          _
        %p2968 = scmp.lt.s32.totalorder %s30, 3
        %p2969 = pnand %p2799, %p2968
        %p2970 = pneg %p2969
        // Predicated region
        $region85: #{tpu_custom_call.1} parent=47 // pred_check
          _
        $region86: #{tpu_custom_call.1} parent=47 // pred_check_branch
          %2972 = sbr.rel (%p2969) target = $region88
        $region87: #{tpu_custom_call.1} parent=47 // pred_region
          %s2973 = sadd.s32 %s30, 1
          %p2974 = scmp.lt.s32.totalorder %s2973, 0
          %s2975 = ssub.s32 0, %s2973
          %s2976 = scalar_select %p2974, %s2975, %s2973
          %s2977 = sand.u32 %s2976, 1
          %s2978 = ssub.s32 0, %s2977
          %s2979 = scalar_select %p2974, %s2978, %s2977
          %p2980 = scmp.ne.s32.totalorder %s2979, 0
          %p2981 = scmp.lt.s32.totalorder %s2979, 0
          %p2982 = pnand %p2981, %p2980
          %p2983 = pneg %p2982
          %s2984 = sadd.s32 %s2979, 2
          %s2985 = scalar_select %p2983, %s2984, %s2979
          %s2986 = smul.u32 %s2985, 1024
          %s2987 = sadd.s32 %s2986, %s2800
          %v2988 = vld [vmem:[#allocation4] sm:$0xff]
          %v2989 = vld [vmem:[#allocation4 + $0x8] sm:$0xff]
          %v2990 = vld [vmem:[#allocation4 + $0x10] sm:$0xff]
          %v2991 = vld [vmem:[#allocation4 + $0x18] sm:$0xff]
          %v2992 = vld [vmem:[#allocation4 + $0x20] sm:$0xff]
          %v2993 = vld [vmem:[#allocation4 + $0x28] sm:$0xff]
          %v2994 = vld [vmem:[#allocation4 + $0x30] sm:$0xff]
          %v2995 = vld [vmem:[#allocation4 + $0x38] sm:$0xff]
          %v2996 = vld [vmem:[#allocation4 + $0x40] sm:$0xff]
          %v2997 = vld [vmem:[#allocation4 + $0x48] sm:$0xff]
          %v2998 = vld [vmem:[#allocation4 + $0x50] sm:$0xff]
          %v2999 = vld [vmem:[#allocation4 + $0x58] sm:$0xff]
          %v3000 = vld [vmem:[#allocation4 + $0x60] sm:$0xff]
          %v3001 = vld [vmem:[#allocation4 + $0x68] sm:$0xff]
          %v3002 = vld [vmem:[#allocation4 + $0x70] sm:$0xff]
          %v3003 = vld [vmem:[#allocation4 + $0x78] sm:$0xff]
          %v3004 = vld [vmem:[#allocation4 + $0x80] sm:$0xff]
          %v3005 = vld [vmem:[#allocation4 + $0x88] sm:$0xff]
          %v3006 = vld [vmem:[#allocation4 + $0x90] sm:$0xff]
          %v3007 = vld [vmem:[#allocation4 + $0x98] sm:$0xff]
          %v3008 = vld [vmem:[#allocation4 + $0xa0] sm:$0xff]
          %v3009 = vld [vmem:[#allocation4 + $0xa8] sm:$0xff]
          %v3010 = vld [vmem:[#allocation4 + $0xb0] sm:$0xff]
          %v3011 = vld [vmem:[#allocation4 + $0xb8] sm:$0xff]
          %v3012 = vld [vmem:[#allocation4 + $0xc0] sm:$0xff]
          %v3013 = vld [vmem:[#allocation4 + $0xc8] sm:$0xff]
          %v3014 = vld [vmem:[#allocation4 + $0xd0] sm:$0xff]
          %v3015 = vld [vmem:[#allocation4 + $0xd8] sm:$0xff]
          %v3016 = vld [vmem:[#allocation4 + $0xe0] sm:$0xff]
          %v3017 = vld [vmem:[#allocation4 + $0xe8] sm:$0xff]
          %v3018 = vld [vmem:[#allocation4 + $0xf0] sm:$0xff]
          %v3019 = vld [vmem:[#allocation4 + $0xf8] sm:$0xff]
          %v3020 = vpack.c.bf16 %v2989, %v2988
          %v3021 = vpack.c.bf16 %v2991, %v2990
          %v3022 = vpack.c.bf16 %v2993, %v2992
          %v3023 = vpack.c.bf16 %v2995, %v2994
          %v3024 = vpack.c.bf16 %v2997, %v2996
          %v3025 = vpack.c.bf16 %v2999, %v2998
          %v3026 = vpack.c.bf16 %v3001, %v3000
          %v3027 = vpack.c.bf16 %v3003, %v3002
          %v3028 = vpack.c.bf16 %v3005, %v3004
          %v3029 = vpack.c.bf16 %v3007, %v3006
          %v3030 = vpack.c.bf16 %v3009, %v3008
          %v3031 = vpack.c.bf16 %v3011, %v3010
          %v3032 = vpack.c.bf16 %v3013, %v3012
          %v3033 = vpack.c.bf16 %v3015, %v3014
          %v3034 = vpack.c.bf16 %v3017, %v3016
          %v3035 = vpack.c.bf16 %v3019, %v3018
          %v3052 = vunpack.c.l.b16 %v3020
          %v3053 = vunpack.c.h.b16 %v3020
          %v3054 = vunpack.c.l.b16 %v3021
          %v3055 = vunpack.c.h.b16 %v3021
          %v3056 = vunpack.c.l.b16 %v3022
          %v3057 = vunpack.c.h.b16 %v3022
          %v3058 = vunpack.c.l.b16 %v3023
          %v3059 = vunpack.c.h.b16 %v3023
          %v3060 = vunpack.c.l.b16 %v3024
          %v3061 = vunpack.c.h.b16 %v3024
          %v3062 = vunpack.c.l.b16 %v3025
          %v3063 = vunpack.c.h.b16 %v3025
          %v3064 = vunpack.c.l.b16 %v3026
          %v3065 = vunpack.c.h.b16 %v3026
          %v3066 = vunpack.c.l.b16 %v3027
          %v3067 = vunpack.c.h.b16 %v3027
          %v3068 = vunpack.c.l.b16 %v3028
          %v3069 = vunpack.c.h.b16 %v3028
          %v3070 = vunpack.c.l.b16 %v3029
          %v3071 = vunpack.c.h.b16 %v3029
          %v3072 = vunpack.c.l.b16 %v3030
          %v3073 = vunpack.c.h.b16 %v3030
          %v3074 = vunpack.c.l.b16 %v3031
          %v3075 = vunpack.c.h.b16 %v3031
          %v3076 = vunpack.c.l.b16 %v3032
          %v3077 = vunpack.c.h.b16 %v3032
          %v3078 = vunpack.c.l.b16 %v3033
          %v3079 = vunpack.c.h.b16 %v3033
          %v3080 = vunpack.c.l.b16 %v3034
          %v3081 = vunpack.c.h.b16 %v3034
          %v3082 = vunpack.c.l.b16 %v3035
          %v3083 = vunpack.c.h.b16 %v3035
          %v3084 = vpack.c.b16 %v3052, %v3052
          %v3085 = vpack.c.b16 %v3053, %v3053
          %v3086 = vpack.c.b16 %v3054, %v3054
          %v3087 = vpack.c.b16 %v3055, %v3055
          %v3088 = vpack.c.b16 %v3056, %v3056
          %v3089 = vpack.c.b16 %v3057, %v3057
          %v3090 = vpack.c.b16 %v3058, %v3058
          %v3091 = vpack.c.b16 %v3059, %v3059
          %v3092 = vpack.c.b16 %v3060, %v3060
          %v3093 = vpack.c.b16 %v3061, %v3061
          %v3094 = vpack.c.b16 %v3062, %v3062
          %v3095 = vpack.c.b16 %v3063, %v3063
          %v3096 = vpack.c.b16 %v3064, %v3064
          %v3097 = vpack.c.b16 %v3065, %v3065
          %v3098 = vpack.c.b16 %v3066, %v3066
          %v3099 = vpack.c.b16 %v3067, %v3067
          %v3100 = vpack.c.b16 %v3068, %v3068
          %v3101 = vpack.c.b16 %v3069, %v3069
          %v3102 = vpack.c.b16 %v3070, %v3070
          %v3103 = vpack.c.b16 %v3071, %v3071
          %v3104 = vpack.c.b16 %v3072, %v3072
          %v3105 = vpack.c.b16 %v3073, %v3073
          %v3106 = vpack.c.b16 %v3074, %v3074
          %v3107 = vpack.c.b16 %v3075, %v3075
          %v3108 = vpack.c.b16 %v3076, %v3076
          %v3109 = vpack.c.b16 %v3077, %v3077
          %v3110 = vpack.c.b16 %v3078, %v3078
          %v3111 = vpack.c.b16 %v3079, %v3079
          %v3112 = vpack.c.b16 %v3080, %v3080
          %v3113 = vpack.c.b16 %v3081, %v3081
          %v3114 = vpack.c.b16 %v3082, %v3082
          %v3115 = vpack.c.b16 %v3083, %v3083
          %s3148 = sshra.s32 %s2987, 3
          %s3149 = sand.u32 %s2987, 7
          %s3150 = smul.addr %s3148, 4
          %s3151 = scalar_lea.vmem [#allocation2], %s3150
          %3152 = vst [vmem:[%s3151] sm:$0xf] %v3084
          %3153 = vst [vmem:[%s3151 + $0x4] sm:$0xf] %v3085
          %3154 = vst [vmem:[%s3151 + $0x8] sm:$0xf] %v3086
          %3155 = vst [vmem:[%s3151 + $0xc] sm:$0xf] %v3087
          %3156 = vst [vmem:[%s3151 + $0x10] sm:$0xf] %v3088
          %3157 = vst [vmem:[%s3151 + $0x14] sm:$0xf] %v3089
          %3158 = vst [vmem:[%s3151 + $0x18] sm:$0xf] %v3090
          %3159 = vst [vmem:[%s3151 + $0x1c] sm:$0xf] %v3091
          %3160 = vst [vmem:[%s3151 + $0x20] sm:$0xf] %v3092
          %3161 = vst [vmem:[%s3151 + $0x24] sm:$0xf] %v3093
          %3162 = vst [vmem:[%s3151 + $0x28] sm:$0xf] %v3094
          %3163 = vst [vmem:[%s3151 + $0x2c] sm:$0xf] %v3095
          %3164 = vst [vmem:[%s3151 + $0x30] sm:$0xf] %v3096
          %3165 = vst [vmem:[%s3151 + $0x34] sm:$0xf] %v3097
          %3166 = vst [vmem:[%s3151 + $0x38] sm:$0xf] %v3098
          %3167 = vst [vmem:[%s3151 + $0x3c] sm:$0xf] %v3099
          %3168 = vst [vmem:[%s3151 + $0x40] sm:$0xf] %v3100
          %3169 = vst [vmem:[%s3151 + $0x44] sm:$0xf] %v3101
          %3170 = vst [vmem:[%s3151 + $0x48] sm:$0xf] %v3102
          %3171 = vst [vmem:[%s3151 + $0x4c] sm:$0xf] %v3103
          %3172 = vst [vmem:[%s3151 + $0x50] sm:$0xf] %v3104
          %3173 = vst [vmem:[%s3151 + $0x54] sm:$0xf] %v3105
          %3174 = vst [vmem:[%s3151 + $0x58] sm:$0xf] %v3106
          %3175 = vst [vmem:[%s3151 + $0x5c] sm:$0xf] %v3107
          %3176 = vst [vmem:[%s3151 + $0x60] sm:$0xf] %v3108
          %3177 = vst [vmem:[%s3151 + $0x64] sm:$0xf] %v3109
          %3178 = vst [vmem:[%s3151 + $0x68] sm:$0xf] %v3110
          %3179 = vst [vmem:[%s3151 + $0x6c] sm:$0xf] %v3111
          %3180 = vst [vmem:[%s3151 + $0x70] sm:$0xf] %v3112
          %3181 = vst [vmem:[%s3151 + $0x74] sm:$0xf] %v3113
          %3182 = vst [vmem:[%s3151 + $0x78] sm:$0xf] %v3114
          %3183 = vst [vmem:[%s3151 + $0x7c] sm:$0xf] %v3115
        $region88: #{tpu_custom_call.1} parent=47 // pred_fallthru
          _
        %p3184 = scmp.eq.s32.totalorder %s30, 3
        %p3185 = pnand %p2799, %p3184
        %p3186 = pneg %p3185
        // Predicated region
        $region89: #{tpu_custom_call.1} parent=47 // pred_check
          _
        $region90: #{tpu_custom_call.1} parent=47 // pred_check_branch
          %3188 = sbr.rel (%p3185) target = $region92
        $region91: #{tpu_custom_call.1} parent=47 // pred_region
          %s3189 = scalar_lea.vmem [#allocation3], %s2800
          %v3190 = vld [vmem:[%s3189] sm:$0xff]
          %v3191 = vld [vmem:[%s3189 + $0x8] sm:$0xff]
          %v3192 = vld [vmem:[%s3189 + $0x10] sm:$0xff]
          %v3193 = vld [vmem:[%s3189 + $0x18] sm:$0xff]
          %v3194 = vld [vmem:[%s3189 + $0x20] sm:$0xff]
          %v3195 = vld [vmem:[%s3189 + $0x28] sm:$0xff]
          %v3196 = vld [vmem:[%s3189 + $0x30] sm:$0xff]
          %v3197 = vld [vmem:[%s3189 + $0x38] sm:$0xff]
          %v3198 = vld [vmem:[%s3189 + $0x40] sm:$0xff]
          %v3199 = vld [vmem:[%s3189 + $0x48] sm:$0xff]
          %v3200 = vld [vmem:[%s3189 + $0x50] sm:$0xff]
          %v3201 = vld [vmem:[%s3189 + $0x58] sm:$0xff]
          %v3202 = vld [vmem:[%s3189 + $0x60] sm:$0xff]
          %v3203 = vld [vmem:[%s3189 + $0x68] sm:$0xff]
          %v3204 = vld [vmem:[%s3189 + $0x70] sm:$0xff]
          %v3205 = vld [vmem:[%s3189 + $0x78] sm:$0xff]
          %v3206 = vld [vmem:[%s3189 + $0x80] sm:$0xff]
          %v3207 = vld [vmem:[%s3189 + $0x88] sm:$0xff]
          %v3208 = vld [vmem:[%s3189 + $0x90] sm:$0xff]
          %v3209 = vld [vmem:[%s3189 + $0x98] sm:$0xff]
          %v3210 = vld [vmem:[%s3189 + $0xa0] sm:$0xff]
          %v3211 = vld [vmem:[%s3189 + $0xa8] sm:$0xff]
          %v3212 = vld [vmem:[%s3189 + $0xb0] sm:$0xff]
          %v3213 = vld [vmem:[%s3189 + $0xb8] sm:$0xff]
          %v3214 = vld [vmem:[%s3189 + $0xc0] sm:$0xff]
          %v3215 = vld [vmem:[%s3189 + $0xc8] sm:$0xff]
          %v3216 = vld [vmem:[%s3189 + $0xd0] sm:$0xff]
          %v3217 = vld [vmem:[%s3189 + $0xd8] sm:$0xff]
          %v3218 = vld [vmem:[%s3189 + $0xe0] sm:$0xff]
          %v3219 = vld [vmem:[%s3189 + $0xe8] sm:$0xff]
          %v3220 = vld [vmem:[%s3189 + $0xf0] sm:$0xff]
          %v3221 = vld [vmem:[%s3189 + $0xf8] sm:$0xff]
          %v3222 = vld [vmem:[#allocation12] sm:$0xff]
          %v3223 = vld [vmem:[#allocation12 + $0x8] sm:$0xff]
          %v3224 = vld [vmem:[#allocation12 + $0x10] sm:$0xff]
          %v3225 = vld [vmem:[#allocation12 + $0x18] sm:$0xff]
          %v3226 = vld [vmem:[#allocation12 + $0x20] sm:$0xff]
          %v3227 = vld [vmem:[#allocation12 + $0x28] sm:$0xff]
          %v3228 = vld [vmem:[#allocation12 + $0x30] sm:$0xff]
          %v3229 = vld [vmem:[#allocation12 + $0x38] sm:$0xff]
          %v3230 = vld [vmem:[#allocation12 + $0x40] sm:$0xff]
          %v3231 = vld [vmem:[#allocation12 + $0x48] sm:$0xff]
          %v3232 = vld [vmem:[#allocation12 + $0x50] sm:$0xff]
          %v3233 = vld [vmem:[#allocation12 + $0x58] sm:$0xff]
          %v3234 = vld [vmem:[#allocation12 + $0x60] sm:$0xff]
          %v3235 = vld [vmem:[#allocation12 + $0x68] sm:$0xff]
          %v3236 = vld [vmem:[#allocation12 + $0x70] sm:$0xff]
          %v3237 = vld [vmem:[#allocation12 + $0x78] sm:$0xff]
          %v3238 = vld [vmem:[#allocation14] sm:$0x1]
          %v3240 = vlaneseq
          %v3241 = vshrl.u32 %v3240, 7
          %v3242 = vsub.s32 0, %v3241
          %v3243 = vrot.slane %v3238, %v3242
          %3245 = vmatprep.subr.mxu0 0.0
          %3246 = vmatpush1.msra.mxu0 %v3237
          %3247 = vmatprep.subr.mxu0 0.0
          %3248 = vmatpush1.msra.mxu0 %v3236
          %3249 = vmatprep.subr.mxu0 0.0
          %3250 = vmatpush1.msra.mxu0 %v3235
          %3251 = vmatprep.subr.mxu0 0.0
          %3252 = vmatpush1.msra.mxu0 %v3234
          %3253 = vmatprep.subr.mxu0 0.0
          %3254 = vmatpush1.msra.mxu0 %v3233
          %3255 = vmatprep.subr.mxu0 0.0
          %3256 = vmatpush1.msra.mxu0 %v3232
          %3257 = vmatprep.subr.mxu0 0.0
          %3258 = vmatpush1.msra.mxu0 %v3231
          %3259 = vmatprep.subr.mxu0 0.0
          %3260 = vmatpush1.msra.mxu0 %v3230
          %3261 = vmatprep.subr.mxu0 0.0
          %3262 = vmatpush1.msra.mxu0 %v3229
          %3263 = vmatprep.subr.mxu0 0.0
          %3264 = vmatpush1.msra.mxu0 %v3228
          %3265 = vmatprep.subr.mxu0 0.0
          %3266 = vmatpush1.msra.mxu0 %v3227
          %3267 = vmatprep.subr.mxu0 0.0
          %3268 = vmatpush1.msra.mxu0 %v3226
          %3269 = vmatprep.subr.mxu0 0.0
          %3270 = vmatpush1.msra.mxu0 %v3225
          %3271 = vmatprep.subr.mxu0 0.0
          %3272 = vmatpush1.msra.mxu0 %v3224
          %3273 = vmatprep.subr.mxu0 0.0
          %3274 = vmatpush1.msra.mxu0 %v3223
          %3275 = vmatprep.subr.mxu0 0.0
          %3276 = vmatpush1.msra.mxu0 %v3222
          %3277 = vmatprep.subr.mxu0 0.0
          %3278 = vmatpush2.msra.mxu0 0.0
          %3279 = vmatprep.subr.mxu0 0.0
          %3280 = vmatpush2.msra.mxu0 0.0
          %3281 = vmatprep.subr.mxu0 0.0
          %3282 = vmatpush2.msra.mxu0 0.0
          %3283 = vmatprep.subr.mxu0 0.0
          %3284 = vmatpush2.msra.mxu0 0.0
          %3285 = vmatprep.subr.mxu0 0.0
          %3286 = vmatpush2.msra.mxu0 0.0
          %3287 = vmatprep.subr.mxu0 0.0
          %3288 = vmatpush2.msra.mxu0 0.0
          %3289 = vmatprep.subr.mxu0 0.0
          %3290 = vmatpush2.msra.mxu0 0.0
          %3291 = vmatprep.subr.mxu0 0.0
          %3292 = vmatpush2.msra.mxu0 0.0
          %3293 = vmatprep.subr.mxu0 0.0
          %3294 = vmatpush2.msra.mxu0 0.0
          %3295 = vmatprep.subr.mxu0 0.0
          %3296 = vmatpush2.msra.mxu0 0.0
          %3297 = vmatprep.subr.mxu0 0.0
          %3298 = vmatpush2.msra.mxu0 0.0
          %3299 = vmatprep.subr.mxu0 0.0
          %3300 = vmatpush2.msra.mxu0 0.0
          %3301 = vmatprep.subr.mxu0 0.0
          %3302 = vmatpush2.msra.mxu0 0.0
          %3303 = vmatprep.subr.mxu0 0.0
          %3304 = vmatpush2.msra.mxu0 0.0
          %3305 = vmatprep.subr.mxu0 0.0
          %3306 = vmatpush2.msra.mxu0 0.0
          %3307 = vmatprep.subr.mxu0 0.0
          %3308 = vmatpush2.msra.mxu0 0.0
          %3309 = vmatprep.mubr.f32.mxu0 0.0
          %3310 = vmatmul.mubr.f32.gmra.mxu0 %v3190
          %v3311 = vpop.f32.mrf.mxu0
          %v3312 = vadd.f32 %v3243, %v3311
          %v3313 = vpop.f32.mrf.mxu0
          %3314 = vmatprep.mubr.f32.mxu0 0.0
          %3315 = vmatmul.mubr.f32.gmra.mxu0 %v3191
          %v3316 = vpop.f32.mrf.mxu0
          %v3317 = vadd.f32 %v3243, %v3316
          %v3318 = vpop.f32.mrf.mxu0
          %3319 = vmatprep.mubr.f32.mxu0 0.0
          %3320 = vmatmul.mubr.f32.gmra.mxu0 %v3192
          %v3321 = vpop.f32.mrf.mxu0
          %v3322 = vadd.f32 %v3243, %v3321
          %v3323 = vpop.f32.mrf.mxu0
          %3324 = vmatprep.mubr.f32.mxu0 0.0
          %3325 = vmatmul.mubr.f32.gmra.mxu0 %v3193
          %v3326 = vpop.f32.mrf.mxu0
          %v3327 = vadd.f32 %v3243, %v3326
          %v3328 = vpop.f32.mrf.mxu0
          %3329 = vmatprep.mubr.f32.mxu0 0.0
          %3330 = vmatmul.mubr.f32.gmra.mxu0 %v3194
          %v3331 = vpop.f32.mrf.mxu0
          %v3332 = vadd.f32 %v3243, %v3331
          %v3333 = vpop.f32.mrf.mxu0
          %3334 = vmatprep.mubr.f32.mxu0 0.0
          %3335 = vmatmul.mubr.f32.gmra.mxu0 %v3195
          %v3336 = vpop.f32.mrf.mxu0
          %v3337 = vadd.f32 %v3243, %v3336
          %v3338 = vpop.f32.mrf.mxu0
          %3339 = vmatprep.mubr.f32.mxu0 0.0
          %3340 = vmatmul.mubr.f32.gmra.mxu0 %v3196
          %v3341 = vpop.f32.mrf.mxu0
          %v3342 = vadd.f32 %v3243, %v3341
          %v3343 = vpop.f32.mrf.mxu0
          %3344 = vmatprep.mubr.f32.mxu0 0.0
          %3345 = vmatmul.mubr.f32.gmra.mxu0 %v3197
          %v3346 = vpop.f32.mrf.mxu0
          %v3347 = vadd.f32 %v3243, %v3346
          %v3348 = vpop.f32.mrf.mxu0
          %3349 = vmatprep.mubr.f32.mxu0 0.0
          %3350 = vmatmul.mubr.f32.gmra.mxu0 %v3198
          %v3351 = vpop.f32.mrf.mxu0
          %v3352 = vadd.f32 %v3243, %v3351
          %v3353 = vpop.f32.mrf.mxu0
          %3354 = vmatprep.mubr.f32.mxu0 0.0
          %3355 = vmatmul.mubr.f32.gmra.mxu0 %v3199
          %v3356 = vpop.f32.mrf.mxu0
          %v3357 = vadd.f32 %v3243, %v3356
          %v3358 = vpop.f32.mrf.mxu0
          %3359 = vmatprep.mubr.f32.mxu0 0.0
          %3360 = vmatmul.mubr.f32.gmra.mxu0 %v3200
          %v3361 = vpop.f32.mrf.mxu0
          %v3362 = vadd.f32 %v3243, %v3361
          %v3363 = vpop.f32.mrf.mxu0
          %3364 = vmatprep.mubr.f32.mxu0 0.0
          %3365 = vmatmul.mubr.f32.gmra.mxu0 %v3201
          %v3366 = vpop.f32.mrf.mxu0
          %v3367 = vadd.f32 %v3243, %v3366
          %v3368 = vpop.f32.mrf.mxu0
          %3369 = vmatprep.mubr.f32.mxu0 0.0
          %3370 = vmatmul.mubr.f32.gmra.mxu0 %v3202
          %v3371 = vpop.f32.mrf.mxu0
          %v3372 = vadd.f32 %v3243, %v3371
          %v3373 = vpop.f32.mrf.mxu0
          %3374 = vmatprep.mubr.f32.mxu0 0.0
          %3375 = vmatmul.mubr.f32.gmra.mxu0 %v3203
          %v3376 = vpop.f32.mrf.mxu0
          %v3377 = vadd.f32 %v3243, %v3376
          %v3378 = vpop.f32.mrf.mxu0
          %3379 = vmatprep.mubr.f32.mxu0 0.0
          %3380 = vmatmul.mubr.f32.gmra.mxu0 %v3204
          %v3381 = vpop.f32.mrf.mxu0
          %v3382 = vadd.f32 %v3243, %v3381
          %v3383 = vpop.f32.mrf.mxu0
          %3384 = vmatprep.mubr.f32.mxu0 0.0
          %3385 = vmatmul.mubr.f32.gmra.mxu0 %v3205
          %v3386 = vpop.f32.mrf.mxu0
          %v3387 = vadd.f32 %v3243, %v3386
          %v3388 = vpop.f32.mrf.mxu0
          %3389 = vmatprep.mubr.f32.mxu0 0.0
          %3390 = vmatmul.mubr.f32.gmra.mxu0 %v3206
          %v3391 = vpop.f32.mrf.mxu0
          %v3392 = vadd.f32 %v3243, %v3391
          %v3393 = vpop.f32.mrf.mxu0
          %3394 = vmatprep.mubr.f32.mxu0 0.0
          %3395 = vmatmul.mubr.f32.gmra.mxu0 %v3207
          %v3396 = vpop.f32.mrf.mxu0
          %v3397 = vadd.f32 %v3243, %v3396
          %v3398 = vpop.f32.mrf.mxu0
          %3399 = vmatprep.mubr.f32.mxu0 0.0
          %3400 = vmatmul.mubr.f32.gmra.mxu0 %v3208
          %v3401 = vpop.f32.mrf.mxu0
          %v3402 = vadd.f32 %v3243, %v3401
          %v3403 = vpop.f32.mrf.mxu0
          %3404 = vmatprep.mubr.f32.mxu0 0.0
          %3405 = vmatmul.mubr.f32.gmra.mxu0 %v3209
          %v3406 = vpop.f32.mrf.mxu0
          %v3407 = vadd.f32 %v3243, %v3406
          %v3408 = vpop.f32.mrf.mxu0
          %3409 = vmatprep.mubr.f32.mxu0 0.0
          %3410 = vmatmul.mubr.f32.gmra.mxu0 %v3210
          %v3411 = vpop.f32.mrf.mxu0
          %v3412 = vadd.f32 %v3243, %v3411
          %v3413 = vpop.f32.mrf.mxu0
          %3414 = vmatprep.mubr.f32.mxu0 0.0
          %3415 = vmatmul.mubr.f32.gmra.mxu0 %v3211
          %v3416 = vpop.f32.mrf.mxu0
          %v3417 = vadd.f32 %v3243, %v3416
          %v3418 = vpop.f32.mrf.mxu0
          %3419 = vmatprep.mubr.f32.mxu0 0.0
          %3420 = vmatmul.mubr.f32.gmra.mxu0 %v3212
          %v3421 = vpop.f32.mrf.mxu0
          %v3422 = vadd.f32 %v3243, %v3421
          %v3423 = vpop.f32.mrf.mxu0
          %3424 = vmatprep.mubr.f32.mxu0 0.0
          %3425 = vmatmul.mubr.f32.gmra.mxu0 %v3213
          %v3426 = vpop.f32.mrf.mxu0
          %v3427 = vadd.f32 %v3243, %v3426
          %v3428 = vpop.f32.mrf.mxu0
          %3429 = vmatprep.mubr.f32.mxu0 0.0
          %3430 = vmatmul.mubr.f32.gmra.mxu0 %v3214
          %v3431 = vpop.f32.mrf.mxu0
          %v3432 = vadd.f32 %v3243, %v3431
          %v3433 = vpop.f32.mrf.mxu0
          %3434 = vmatprep.mubr.f32.mxu0 0.0
          %3435 = vmatmul.mubr.f32.gmra.mxu0 %v3215
          %v3436 = vpop.f32.mrf.mxu0
          %v3437 = vadd.f32 %v3243, %v3436
          %v3438 = vpop.f32.mrf.mxu0
          %3439 = vmatprep.mubr.f32.mxu0 0.0
          %3440 = vmatmul.mubr.f32.gmra.mxu0 %v3216
          %v3441 = vpop.f32.mrf.mxu0
          %v3442 = vadd.f32 %v3243, %v3441
          %v3443 = vpop.f32.mrf.mxu0
          %3444 = vmatprep.mubr.f32.mxu0 0.0
          %3445 = vmatmul.mubr.f32.gmra.mxu0 %v3217
          %v3446 = vpop.f32.mrf.mxu0
          %v3447 = vadd.f32 %v3243, %v3446
          %v3448 = vpop.f32.mrf.mxu0
          %3449 = vmatprep.mubr.f32.mxu0 0.0
          %3450 = vmatmul.mubr.f32.gmra.mxu0 %v3218
          %v3451 = vpop.f32.mrf.mxu0
          %v3452 = vadd.f32 %v3243, %v3451
          %v3453 = vpop.f32.mrf.mxu0
          %3454 = vmatprep.mubr.f32.mxu0 0.0
          %3455 = vmatmul.mubr.f32.gmra.mxu0 %v3219
          %v3456 = vpop.f32.mrf.mxu0
          %v3457 = vadd.f32 %v3243, %v3456
          %v3458 = vpop.f32.mrf.mxu0
          %3459 = vmatprep.mubr.f32.mxu0 0.0
          %3460 = vmatmul.mubr.f32.gmra.mxu0 %v3220
          %v3461 = vpop.f32.mrf.mxu0
          %v3462 = vadd.f32 %v3243, %v3461
          %v3463 = vpop.f32.mrf.mxu0
          %3464 = vmatprep.mubr.f32.mxu0 0.0
          %3465 = vmatmul.mubr.f32.gmra.mxu0 %v3221
          %v3466 = vpop.f32.mrf.mxu0
          %v3467 = vadd.f32 %v3243, %v3466
          %v3468 = vpop.f32.mrf.mxu0
          %3469 = vdwg.mxu0
          %v3470 = vlaneseq
          %v3471 = vand.u32 %v3470, 127
          %vm3472 = vcmp.lt.s32.totalorder %v3471, 8
          %v3473 = vsel %vm3472, %v3312, -1e+30
          %v3474 = vsel %vm3472, %v3317, -1e+30
          %v3475 = vsel %vm3472, %v3322, -1e+30
          %v3476 = vsel %vm3472, %v3327, -1e+30
          %v3477 = vsel %vm3472, %v3332, -1e+30
          %v3478 = vsel %vm3472, %v3337, -1e+30
          %v3479 = vsel %vm3472, %v3342, -1e+30
          %v3480 = vsel %vm3472, %v3347, -1e+30
          %v3481 = vsel %vm3472, %v3352, -1e+30
          %v3482 = vsel %vm3472, %v3357, -1e+30
          %v3483 = vsel %vm3472, %v3362, -1e+30
          %v3484 = vsel %vm3472, %v3367, -1e+30
          %v3485 = vsel %vm3472, %v3372, -1e+30
          %v3486 = vsel %vm3472, %v3377, -1e+30
          %v3487 = vsel %vm3472, %v3382, -1e+30
          %v3488 = vsel %vm3472, %v3387, -1e+30
          %v3489 = vsel %vm3472, %v3392, -1e+30
          %v3490 = vsel %vm3472, %v3397, -1e+30
          %v3491 = vsel %vm3472, %v3402, -1e+30
          %v3492 = vsel %vm3472, %v3407, -1e+30
          %v3493 = vsel %vm3472, %v3412, -1e+30
          %v3494 = vsel %vm3472, %v3417, -1e+30
          %v3495 = vsel %vm3472, %v3422, -1e+30
          %v3496 = vsel %vm3472, %v3427, -1e+30
          %v3497 = vsel %vm3472, %v3432, -1e+30
          %v3498 = vsel %vm3472, %v3437, -1e+30
          %v3499 = vsel %vm3472, %v3442, -1e+30
          %v3500 = vsel %vm3472, %v3447, -1e+30
          %v3501 = vsel %vm3472, %v3452, -1e+30
          %v3502 = vsel %vm3472, %v3457, -1e+30
          %v3503 = vsel %vm3472, %v3462, -1e+30
          %v3504 = vsel %vm3472, %v3467, -1e+30
          %3505 = vmax.xlane.f32.xlu0 %v3473
          %v3506 = vpop.xlane.xlu0 %3505
          %3507 = vmax.xlane.f32.xlu0 %v3474
          %v3508 = vpop.xlane.xlu0 %3507
          %3509 = vmax.xlane.f32.xlu0 %v3475
          %v3510 = vpop.xlane.xlu0 %3509
          %3511 = vmax.xlane.f32.xlu0 %v3476
          %v3512 = vpop.xlane.xlu0 %3511
          %3513 = vmax.xlane.f32.xlu0 %v3477
          %v3514 = vpop.xlane.xlu0 %3513
          %3515 = vmax.xlane.f32.xlu0 %v3478
          %v3516 = vpop.xlane.xlu0 %3515
          %3517 = vmax.xlane.f32.xlu0 %v3479
          %v3518 = vpop.xlane.xlu0 %3517
          %3519 = vmax.xlane.f32.xlu0 %v3480
          %v3520 = vpop.xlane.xlu0 %3519
          %3521 = vmax.xlane.f32.xlu0 %v3481
          %v3522 = vpop.xlane.xlu0 %3521
          %3523 = vmax.xlane.f32.xlu0 %v3482
          %v3524 = vpop.xlane.xlu0 %3523
          %3525 = vmax.xlane.f32.xlu0 %v3483
          %v3526 = vpop.xlane.xlu0 %3525
          %3527 = vmax.xlane.f32.xlu0 %v3484
          %v3528 = vpop.xlane.xlu0 %3527
          %3529 = vmax.xlane.f32.xlu0 %v3485
          %v3530 = vpop.xlane.xlu0 %3529
          %3531 = vmax.xlane.f32.xlu0 %v3486
          %v3532 = vpop.xlane.xlu0 %3531
          %3533 = vmax.xlane.f32.xlu0 %v3487
          %v3534 = vpop.xlane.xlu0 %3533
          %3535 = vmax.xlane.f32.xlu0 %v3488
          %v3536 = vpop.xlane.xlu0 %3535
          %3537 = vmax.xlane.f32.xlu0 %v3489
          %v3538 = vpop.xlane.xlu0 %3537
          %3539 = vmax.xlane.f32.xlu0 %v3490
          %v3540 = vpop.xlane.xlu0 %3539
          %3541 = vmax.xlane.f32.xlu0 %v3491
          %v3542 = vpop.xlane.xlu0 %3541
          %3543 = vmax.xlane.f32.xlu0 %v3492
          %v3544 = vpop.xlane.xlu0 %3543
          %3545 = vmax.xlane.f32.xlu0 %v3493
          %v3546 = vpop.xlane.xlu0 %3545
          %3547 = vmax.xlane.f32.xlu0 %v3494
          %v3548 = vpop.xlane.xlu0 %3547
          %3549 = vmax.xlane.f32.xlu0 %v3495
          %v3550 = vpop.xlane.xlu0 %3549
          %3551 = vmax.xlane.f32.xlu0 %v3496
          %v3552 = vpop.xlane.xlu0 %3551
          %3553 = vmax.xlane.f32.xlu0 %v3497
          %v3554 = vpop.xlane.xlu0 %3553
          %3555 = vmax.xlane.f32.xlu0 %v3498
          %v3556 = vpop.xlane.xlu0 %3555
          %3557 = vmax.xlane.f32.xlu0 %v3499
          %v3558 = vpop.xlane.xlu0 %3557
          %3559 = vmax.xlane.f32.xlu0 %v3500
          %v3560 = vpop.xlane.xlu0 %3559
          %3561 = vmax.xlane.f32.xlu0 %v3501
          %v3562 = vpop.xlane.xlu0 %3561
          %3563 = vmax.xlane.f32.xlu0 %v3502
          %v3564 = vpop.xlane.xlu0 %3563
          %3565 = vmax.xlane.f32.xlu0 %v3503
          %v3566 = vpop.xlane.xlu0 %3565
          %3567 = vmax.xlane.f32.xlu0 %v3504
          %v3568 = vpop.xlane.xlu0 %3567
          %v3569 = vsub.f32 %v3473, %v3506
          %v3570 = vsub.f32 %v3474, %v3508
          %v3571 = vsub.f32 %v3475, %v3510
          %v3572 = vsub.f32 %v3476, %v3512
          %v3573 = vsub.f32 %v3477, %v3514
          %v3574 = vsub.f32 %v3478, %v3516
          %v3575 = vsub.f32 %v3479, %v3518
          %v3576 = vsub.f32 %v3480, %v3520
          %v3577 = vsub.f32 %v3481, %v3522
          %v3578 = vsub.f32 %v3482, %v3524
          %v3579 = vsub.f32 %v3483, %v3526
          %v3580 = vsub.f32 %v3484, %v3528
          %v3581 = vsub.f32 %v3485, %v3530
          %v3582 = vsub.f32 %v3486, %v3532
          %v3583 = vsub.f32 %v3487, %v3534
          %v3584 = vsub.f32 %v3488, %v3536
          %v3585 = vsub.f32 %v3489, %v3538
          %v3586 = vsub.f32 %v3490, %v3540
          %v3587 = vsub.f32 %v3491, %v3542
          %v3588 = vsub.f32 %v3492, %v3544
          %v3589 = vsub.f32 %v3493, %v3546
          %v3590 = vsub.f32 %v3494, %v3548
          %v3591 = vsub.f32 %v3495, %v3550
          %v3592 = vsub.f32 %v3496, %v3552
          %v3593 = vsub.f32 %v3497, %v3554
          %v3594 = vsub.f32 %v3498, %v3556
          %v3595 = vsub.f32 %v3499, %v3558
          %v3596 = vsub.f32 %v3500, %v3560
          %v3597 = vsub.f32 %v3501, %v3562
          %v3598 = vsub.f32 %v3502, %v3564
          %v3599 = vsub.f32 %v3503, %v3566
          %v3600 = vsub.f32 %v3504, %v3568
          %v3601 = vmul.f32 %v3569, 1.442695
          %v3602 = vpow.pop %v3601
          %v3603 = vmul.f32 %v3570, 1.442695
          %v3604 = vpow.pop %v3603
          %v3605 = vmul.f32 %v3571, 1.442695
          %v3606 = vpow.pop %v3605
          %v3607 = vmul.f32 %v3572, 1.442695
          %v3608 = vpow.pop %v3607
          %v3609 = vmul.f32 %v3573, 1.442695
          %v3610 = vpow.pop %v3609
          %v3611 = vmul.f32 %v3574, 1.442695
          %v3612 = vpow.pop %v3611
          %v3613 = vmul.f32 %v3575, 1.442695
          %v3614 = vpow.pop %v3613
          %v3615 = vmul.f32 %v3576, 1.442695
          %v3616 = vpow.pop %v3615
          %v3617 = vmul.f32 %v3577, 1.442695
          %v3618 = vpow.pop %v3617
          %v3619 = vmul.f32 %v3578, 1.442695
          %v3620 = vpow.pop %v3619
          %v3621 = vmul.f32 %v3579, 1.442695
          %v3622 = vpow.pop %v3621
          %v3623 = vmul.f32 %v3580, 1.442695
          %v3624 = vpow.pop %v3623
          %v3625 = vmul.f32 %v3581, 1.442695
          %v3626 = vpow.pop %v3625
          %v3627 = vmul.f32 %v3582, 1.442695
          %v3628 = vpow.pop %v3627
          %v3629 = vmul.f32 %v3583, 1.442695
          %v3630 = vpow.pop %v3629
          %v3631 = vmul.f32 %v3584, 1.442695
          %v3632 = vpow.pop %v3631
          %v3633 = vmul.f32 %v3585, 1.442695
          %v3634 = vpow.pop %v3633
          %v3635 = vmul.f32 %v3586, 1.442695
          %v3636 = vpow.pop %v3635
          %v3637 = vmul.f32 %v3587, 1.442695
          %v3638 = vpow.pop %v3637
          %v3639 = vmul.f32 %v3588, 1.442695
          %v3640 = vpow.pop %v3639
          %v3641 = vmul.f32 %v3589, 1.442695
          %v3642 = vpow.pop %v3641
          %v3643 = vmul.f32 %v3590, 1.442695
          %v3644 = vpow.pop %v3643
          %v3645 = vmul.f32 %v3591, 1.442695
          %v3646 = vpow.pop %v3645
          %v3647 = vmul.f32 %v3592, 1.442695
          %v3648 = vpow.pop %v3647
          %v3649 = vmul.f32 %v3593, 1.442695
          %v3650 = vpow.pop %v3649
          %v3651 = vmul.f32 %v3594, 1.442695
          %v3652 = vpow.pop %v3651
          %v3653 = vmul.f32 %v3595, 1.442695
          %v3654 = vpow.pop %v3653
          %v3655 = vmul.f32 %v3596, 1.442695
          %v3656 = vpow.pop %v3655
          %v3657 = vmul.f32 %v3597, 1.442695
          %v3658 = vpow.pop %v3657
          %v3659 = vmul.f32 %v3598, 1.442695
          %v3660 = vpow.pop %v3659
          %v3661 = vmul.f32 %v3599, 1.442695
          %v3662 = vpow.pop %v3661
          %v3663 = vmul.f32 %v3600, 1.442695
          %v3664 = vpow.pop %v3663
          %3665 = vadd.xlane.f32.xlu0 %v3602
          %v3666 = vpop.xlane.xlu0 %3665
          %3667 = vadd.xlane.f32.xlu0 %v3604
          %v3668 = vpop.xlane.xlu0 %3667
          %3669 = vadd.xlane.f32.xlu0 %v3606
          %v3670 = vpop.xlane.xlu0 %3669
          %3671 = vadd.xlane.f32.xlu0 %v3608
          %v3672 = vpop.xlane.xlu0 %3671
          %3673 = vadd.xlane.f32.xlu0 %v3610
          %v3674 = vpop.xlane.xlu0 %3673
          %3675 = vadd.xlane.f32.xlu0 %v3612
          %v3676 = vpop.xlane.xlu0 %3675
          %3677 = vadd.xlane.f32.xlu0 %v3614
          %v3678 = vpop.xlane.xlu0 %3677
          %3679 = vadd.xlane.f32.xlu0 %v3616
          %v3680 = vpop.xlane.xlu0 %3679
          %3681 = vadd.xlane.f32.xlu0 %v3618
          %v3682 = vpop.xlane.xlu0 %3681
          %3683 = vadd.xlane.f32.xlu0 %v3620
          %v3684 = vpop.xlane.xlu0 %3683
          %3685 = vadd.xlane.f32.xlu0 %v3622
          %v3686 = vpop.xlane.xlu0 %3685
          %3687 = vadd.xlane.f32.xlu0 %v3624
          %v3688 = vpop.xlane.xlu0 %3687
          %3689 = vadd.xlane.f32.xlu0 %v3626
          %v3690 = vpop.xlane.xlu0 %3689
          %3691 = vadd.xlane.f32.xlu0 %v3628
          %v3692 = vpop.xlane.xlu0 %3691
          %3693 = vadd.xlane.f32.xlu0 %v3630
          %v3694 = vpop.xlane.xlu0 %3693
          %3695 = vadd.xlane.f32.xlu0 %v3632
          %v3696 = vpop.xlane.xlu0 %3695
          %3697 = vadd.xlane.f32.xlu0 %v3634
          %v3698 = vpop.xlane.xlu0 %3697
          %3699 = vadd.xlane.f32.xlu0 %v3636
          %v3700 = vpop.xlane.xlu0 %3699
          %3701 = vadd.xlane.f32.xlu0 %v3638
          %v3702 = vpop.xlane.xlu0 %3701
          %3703 = vadd.xlane.f32.xlu0 %v3640
          %v3704 = vpop.xlane.xlu0 %3703
          %3705 = vadd.xlane.f32.xlu0 %v3642
          %v3706 = vpop.xlane.xlu0 %3705
          %3707 = vadd.xlane.f32.xlu0 %v3644
          %v3708 = vpop.xlane.xlu0 %3707
          %3709 = vadd.xlane.f32.xlu0 %v3646
          %v3710 = vpop.xlane.xlu0 %3709
          %3711 = vadd.xlane.f32.xlu0 %v3648
          %v3712 = vpop.xlane.xlu0 %3711
          %3713 = vadd.xlane.f32.xlu0 %v3650
          %v3714 = vpop.xlane.xlu0 %3713
          %3715 = vadd.xlane.f32.xlu0 %v3652
          %v3716 = vpop.xlane.xlu0 %3715
          %3717 = vadd.xlane.f32.xlu0 %v3654
          %v3718 = vpop.xlane.xlu0 %3717
          %3719 = vadd.xlane.f32.xlu0 %v3656
          %v3720 = vpop.xlane.xlu0 %3719
          %3721 = vadd.xlane.f32.xlu0 %v3658
          %v3722 = vpop.xlane.xlu0 %3721
          %3723 = vadd.xlane.f32.xlu0 %v3660
          %v3724 = vpop.xlane.xlu0 %3723
          %3725 = vadd.xlane.f32.xlu0 %v3662
          %v3726 = vpop.xlane.xlu0 %3725
          %3727 = vadd.xlane.f32.xlu0 %v3664
          %v3728 = vpop.xlane.xlu0 %3727
          %v3729 = vlog2.pop %v3666
          %v3730 = vmul.f32 %v3729, 0.6931472
          %v3731 = vlog2.pop %v3668
          %v3732 = vmul.f32 %v3731, 0.6931472
          %v3733 = vlog2.pop %v3670
          %v3734 = vmul.f32 %v3733, 0.6931472
          %v3735 = vlog2.pop %v3672
          %v3736 = vmul.f32 %v3735, 0.6931472
          %v3737 = vlog2.pop %v3674
          %v3738 = vmul.f32 %v3737, 0.6931472
          %v3739 = vlog2.pop %v3676
          %v3740 = vmul.f32 %v3739, 0.6931472
          %v3741 = vlog2.pop %v3678
          %v3742 = vmul.f32 %v3741, 0.6931472
          %v3743 = vlog2.pop %v3680
          %v3744 = vmul.f32 %v3743, 0.6931472
          %v3745 = vlog2.pop %v3682
          %v3746 = vmul.f32 %v3745, 0.6931472
          %v3747 = vlog2.pop %v3684
          %v3748 = vmul.f32 %v3747, 0.6931472
          %v3749 = vlog2.pop %v3686
          %v3750 = vmul.f32 %v3749, 0.6931472
          %v3751 = vlog2.pop %v3688
          %v3752 = vmul.f32 %v3751, 0.6931472
          %v3753 = vlog2.pop %v3690
          %v3754 = vmul.f32 %v3753, 0.6931472
          %v3755 = vlog2.pop %v3692
          %v3756 = vmul.f32 %v3755, 0.6931472
          %v3757 = vlog2.pop %v3694
          %v3758 = vmul.f32 %v3757, 0.6931472
          %v3759 = vlog2.pop %v3696
          %v3760 = vmul.f32 %v3759, 0.6931472
          %v3761 = vlog2.pop %v3698
          %v3762 = vmul.f32 %v3761, 0.6931472
          %v3763 = vlog2.pop %v3700
          %v3764 = vmul.f32 %v3763, 0.6931472
          %v3765 = vlog2.pop %v3702
          %v3766 = vmul.f32 %v3765, 0.6931472
          %v3767 = vlog2.pop %v3704
          %v3768 = vmul.f32 %v3767, 0.6931472
          %v3769 = vlog2.pop %v3706
          %v3770 = vmul.f32 %v3769, 0.6931472
          %v3771 = vlog2.pop %v3708
          %v3772 = vmul.f32 %v3771, 0.6931472
          %v3773 = vlog2.pop %v3710
          %v3774 = vmul.f32 %v3773, 0.6931472
          %v3775 = vlog2.pop %v3712
          %v3776 = vmul.f32 %v3775, 0.6931472
          %v3777 = vlog2.pop %v3714
          %v3778 = vmul.f32 %v3777, 0.6931472
          %v3779 = vlog2.pop %v3716
          %v3780 = vmul.f32 %v3779, 0.6931472
          %v3781 = vlog2.pop %v3718
          %v3782 = vmul.f32 %v3781, 0.6931472
          %v3783 = vlog2.pop %v3720
          %v3784 = vmul.f32 %v3783, 0.6931472
          %v3785 = vlog2.pop %v3722
          %v3786 = vmul.f32 %v3785, 0.6931472
          %v3787 = vlog2.pop %v3724
          %v3788 = vmul.f32 %v3787, 0.6931472
          %v3789 = vlog2.pop %v3726
          %v3790 = vmul.f32 %v3789, 0.6931472
          %v3791 = vlog2.pop %v3728
          %v3792 = vmul.f32 %v3791, 0.6931472
          %v3793 = vsub.f32 %v3569, %v3730
          %v3794 = vsub.f32 %v3570, %v3732
          %v3795 = vsub.f32 %v3571, %v3734
          %v3796 = vsub.f32 %v3572, %v3736
          %v3797 = vsub.f32 %v3573, %v3738
          %v3798 = vsub.f32 %v3574, %v3740
          %v3799 = vsub.f32 %v3575, %v3742
          %v3800 = vsub.f32 %v3576, %v3744
          %v3801 = vsub.f32 %v3577, %v3746
          %v3802 = vsub.f32 %v3578, %v3748
          %v3803 = vsub.f32 %v3579, %v3750
          %v3804 = vsub.f32 %v3580, %v3752
          %v3805 = vsub.f32 %v3581, %v3754
          %v3806 = vsub.f32 %v3582, %v3756
          %v3807 = vsub.f32 %v3583, %v3758
          %v3808 = vsub.f32 %v3584, %v3760
          %v3809 = vsub.f32 %v3585, %v3762
          %v3810 = vsub.f32 %v3586, %v3764
          %v3811 = vsub.f32 %v3587, %v3766
          %v3812 = vsub.f32 %v3588, %v3768
          %v3813 = vsub.f32 %v3589, %v3770
          %v3814 = vsub.f32 %v3590, %v3772
          %v3815 = vsub.f32 %v3591, %v3774
          %v3816 = vsub.f32 %v3592, %v3776
          %v3817 = vsub.f32 %v3593, %v3778
          %v3818 = vsub.f32 %v3594, %v3780
          %v3819 = vsub.f32 %v3595, %v3782
          %v3820 = vsub.f32 %v3596, %v3784
          %v3821 = vsub.f32 %v3597, %v3786
          %v3822 = vsub.f32 %v3598, %v3788
          %v3823 = vsub.f32 %v3599, %v3790
          %v3824 = vsub.f32 %v3600, %v3792
          %3825 = vst [vmem:[%s401] sm:$0xff] %v3793
          %3826 = vst [vmem:[%s401 + $0x8] sm:$0xff] %v3794
          %3827 = vst [vmem:[%s401 + $0x10] sm:$0xff] %v3795
          %3828 = vst [vmem:[%s401 + $0x18] sm:$0xff] %v3796
          %3829 = vst [vmem:[%s401 + $0x20] sm:$0xff] %v3797
          %3830 = vst [vmem:[%s401 + $0x28] sm:$0xff] %v3798
          %3831 = vst [vmem:[%s401 + $0x30] sm:$0xff] %v3799
          %3832 = vst [vmem:[%s401 + $0x38] sm:$0xff] %v3800
          %3833 = vst [vmem:[%s401 + $0x40] sm:$0xff] %v3801
          %3834 = vst [vmem:[%s401 + $0x48] sm:$0xff] %v3802
          %3835 = vst [vmem:[%s401 + $0x50] sm:$0xff] %v3803
          %3836 = vst [vmem:[%s401 + $0x58] sm:$0xff] %v3804
          %3837 = vst [vmem:[%s401 + $0x60] sm:$0xff] %v3805
          %3838 = vst [vmem:[%s401 + $0x68] sm:$0xff] %v3806
          %3839 = vst [vmem:[%s401 + $0x70] sm:$0xff] %v3807
          %3840 = vst [vmem:[%s401 + $0x78] sm:$0xff] %v3808
          %3841 = vst [vmem:[%s401 + $0x80] sm:$0xff] %v3809
          %3842 = vst [vmem:[%s401 + $0x88] sm:$0xff] %v3810
          %3843 = vst [vmem:[%s401 + $0x90] sm:$0xff] %v3811
          %3844 = vst [vmem:[%s401 + $0x98] sm:$0xff] %v3812
          %3845 = vst [vmem:[%s401 + $0xa0] sm:$0xff] %v3813
          %3846 = vst [vmem:[%s401 + $0xa8] sm:$0xff] %v3814
          %3847 = vst [vmem:[%s401 + $0xb0] sm:$0xff] %v3815
          %3848 = vst [vmem:[%s401 + $0xb8] sm:$0xff] %v3816
          %3849 = vst [vmem:[%s401 + $0xc0] sm:$0xff] %v3817
          %3850 = vst [vmem:[%s401 + $0xc8] sm:$0xff] %v3818
          %3851 = vst [vmem:[%s401 + $0xd0] sm:$0xff] %v3819
          %3852 = vst [vmem:[%s401 + $0xd8] sm:$0xff] %v3820
          %3853 = vst [vmem:[%s401 + $0xe0] sm:$0xff] %v3821
          %3854 = vst [vmem:[%s401 + $0xe8] sm:$0xff] %v3822
          %3855 = vst [vmem:[%s401 + $0xf0] sm:$0xff] %v3823
          %3856 = vst [vmem:[%s401 + $0xf8] sm:$0xff] %v3824
        $region92: #{tpu_custom_call.1} parent=47 // pred_fallthru
          _
        %s3857 = sand.u32 %s218, 1
        %s3858 = scalar_lea.sflag [#allocation7], %s3857
        %s3859 = sand.u32 %s218, 1
        %s3860 = smul.addr %s3859, 256
        %s3861 = scalar_lea.vmem [#allocation16], %s3860
        // Predicated region
        $region93: #{tpu_custom_call.1} parent=47 // pred_check
          %p3862 = pneg %p228
        $region94: #{tpu_custom_call.1} parent=47 // pred_check_branch
          %3864 = sbr.rel (%p3862) target = $region96
        $region95: #{tpu_custom_call.1} parent=47 // pred_region
          %p3865 = scmp.eq.s32.totalorder %s30, 3
          %s3866 = scalar_select %p3865, %s31, 0
          %s3867 = smul.u32 32, %s3866
          %s3869 = ssub.s32 4096, 4096
          %3870 = vsyncadd %s3858, %s3869
          %s3871 = smul.addr %s3867, 128
          %s3872 = scalar_lea.hbm %s7, %s3871
          %s3873 = sshll.u32 %s3861, 4
          %s3874 = int_to_ptr.vmem [resolvable:$true] %s3873
          %3879 = dma.vmem_to_hbm [thread:$0]  %s3874, 4096, %s3872, %s3858, 128, 128, 8
        $region96: #{tpu_custom_call.1} parent=47 // pred_fallthru
          _
      $region48: #{tpu_custom_call.1} parent=5 // pred_fallthru
        _
      %p3880 = scmp.le.s32.totalorder 2, %s20
      // Predicated region
      $region97: #{tpu_custom_call.1} parent=5 // pred_check
        %p3881 = pneg %p3880
      $region98: #{tpu_custom_call.1} parent=5 // pred_check_branch
        %3883 = sbr.rel (%p3881) target = $region100
      $region99: #{tpu_custom_call.1} parent=5 // pred_region
        %s3884 = ssub.s32 %s20, 2
        // Predicated region
        $region101: #{tpu_custom_call.1} parent=99 // pred_check
          %p3885 = pneg %p234
        $region102: #{tpu_custom_call.1} parent=99 // pred_check_branch
          %3887 = sbr.rel (%p3885) target = $region104
        $region103: #{tpu_custom_call.1} parent=99 // pred_region
          %s3888 = sand.u32 %s219, 1
          %s3889 = scalar_lea.sflag [#allocation7], %s3888
          %s3890 = sand.u32 %s219, 1
          %s3891 = smul.addr %s3890, 256
          %s3892 = scalar_lea.vmem [#allocation16], %s3891
          %3893 = dma.done %s3889, 4096
        $region104: #{tpu_custom_call.1} parent=99 // pred_fallthru
          _
      $region100: #{tpu_custom_call.1} parent=5 // pred_fallthru
        _
    $region6: #{tpu_custom_call.1} parent=1 // loop_footer
      %s24 = sadd.s32 1, %s20
    $region7: #{tpu_custom_call.1} parent=1 // loop_footer_branch
      %19 = sbr.rel target = $region3
    $region8: #{tpu_custom_call.1} parent=1 // loop_exit
      _
    %3894 = vsyncpa [#allocation6], 1
    %s3895 = scalar_lea.sflag [#allocation6], 1
    %3896 = vsyncpa %s3895, 1
    %3897 = vsyncpa [#allocation10], 1
    %3898 = vsyncpa [#allocation13], 1
    %3899 = vsyncpa [#allocation7], 1
    %s3900 = scalar_lea.sflag [#allocation7], 1
    %3901 = vsyncpa %s3900, 1
    %3902 = vsyncpa [#allocation8], 1
    %s3903 = scalar_lea.sflag [#allocation8], 1
    %3904 = vsyncpa %s3903, 1

</llo_original>
